<compile_context>
chip_gen: v7x
topology: tpu7x:2x2x1
jax: 0.10.0
libtpu: 0.0.40
codegen_flags: <defaults>
</compile_context>

<pallas_src>
import jax
import jax.numpy as jnp
from jax.experimental import pallas as pl
from jax.experimental.pallas import tpu as pltpu


def se_gate_kernel(w_ref, xse_ref, b_ref, x_ref, o_ref):
    # 1x1 conv on a 1x1 spatial input == [Cout, Cin] @ [Cin, 1] matmul.
    gate = jnp.dot(w_ref[...], xse_ref[...], preferred_element_type=jnp.float32)
    gate = gate + b_ref[...]                       # [Cout, 1]
    gate = jax.nn.sigmoid(gate)                    # EUP (exp + recip)
    # broadcast gate [Cout, 1] across the HW lane axis of x [Cout, HW]
    o_ref[...] = (x_ref[...] * gate).astype(o_ref.dtype)


def conv_sigmoid_mul(x394, x391, weight, bias):
    """x394: [N, Cin, 1, 1], x391: [N, Cout, H, W], weight: [Cout, Cin, 1, 1], bias: [Cout]."""
    N, Cin, _, _ = x394.shape
    _, Cout, H, W = x391.shape
    assert N == 1, "kernel written for batch 1 (as in the reference module)"
    HW = H * W

    # All reshapes below are contiguity-preserving (no HBM transposes).
    xse = x394.reshape(Cin, 1)              # [Cin, 1]
    x = x391.reshape(Cout, HW)              # [Cout, HW]
    w = weight.reshape(Cout, Cin)           # [Cout, Cin]
    b = bias.reshape(Cout, 1)               # [Cout, 1]

    itemsize = jnp.dtype(x391.dtype).itemsize
    bytes_accessed = (
        2 * Cout * HW * itemsize            # x391 read + x397 write
        + Cout * Cin * itemsize             # weight
        + Cin * itemsize + Cout * itemsize  # xse + bias
    )
    cost = pl.CostEstimate(
        flops=2 * Cout * Cin + 2 * Cout * HW,
        transcendentals=Cout,
        bytes_accessed=bytes_accessed,
    )

    vmem_spec = pl.BlockSpec(memory_space=pltpu.MemorySpace.VMEM)

    out = pl.pallas_call(
        se_gate_kernel,
        out_shape=jax.ShapeDtypeStruct((Cout, HW), x391.dtype),
        # no grid: total footprint ~2 MB, whole arrays as single VMEM blocks
        in_specs=[vmem_spec, vmem_spec, vmem_spec, vmem_spec],
        out_specs=vmem_spec,
        cost_estimate=cost,
    )(w, xse, b, x)

    return out.reshape(N, Cout, H, W)       # free reshape back to NCHW


if __name__ == "__main__":
    key = jax.random.PRNGKey(0)
    k1, k2, k3, k4 = jax.random.split(key, 4)

    N, Cin, Cout, H, W = 1, 68, 1632, 7, 7
    x394 = jax.random.normal(k1, (N, Cin, 1, 1), jnp.float32)
    x391 = jax.random.normal(k2, (N, Cout, H, W), jnp.float32)
    # deterministic synthetic parameters (Conv2d(68, 1632, kernel_size=1) shapes)
    weight = jax.random.normal(k3, (Cout, Cin, 1, 1), jnp.float32) * 0.1
    bias = jax.random.normal(k4, (Cout,), jnp.float32) * 0.1

    out = conv_sigmoid_mul(x394, x391, weight, bias)
    jax.block_until_ready(out)

    # pure-JAX reference check
    gate = jax.nn.sigmoid(
        jnp.einsum("oi,ni->no", weight.reshape(Cout, Cin), x394.reshape(N, Cin)) + bias
    )
    ref = x391 * gate.reshape(N, Cout, 1, 1)
    assert out.shape == ref.shape == (N, Cout, H, W)
    assert jnp.allclose(out, ref, atol=1e-5, rtol=1e-5)

    print("KERNEL_OK")
</pallas_src>

<mosaic_0001>
module attributes {stable_mosaic.version = 11 : i64} {
  func.func @se_gate_kernel(%arg0: memref<1632x68xf32, #tpu.memory_space<vmem>>, %arg1: memref<68x1xf32, #tpu.memory_space<vmem>>, %arg2: memref<1632x1xf32, #tpu.memory_space<vmem>>, %arg3: memref<1632x49xf32, #tpu.memory_space<vmem>>, %arg4: memref<1632x49xf32, #tpu.memory_space<vmem>>) attributes {dimension_semantics = [], scalar_prefetch = 0 : i64, scratch_operands = 0 : i64, tpu.core_type = #tpu.core_type<tc>} {
    %c0 = arith.constant 0 : index
    %c0_0 = arith.constant 0 : index
    %0 = vector.load %arg0[%c0, %c0_0] : memref<1632x68xf32, #tpu.memory_space<vmem>>, vector<1632x68xf32>
    %c0_1 = arith.constant 0 : index
    %c0_2 = arith.constant 0 : index
    %1 = vector.load %arg1[%c0_1, %c0_2] : memref<68x1xf32, #tpu.memory_space<vmem>>, vector<68x1xf32>
    %cst = arith.constant dense<0.000000e+00> : vector<1632x1xf32>
    %2 = tpu.matmul %0, %1, %cst {dimension_numbers = #tpu.dot_dimension_numbers<[1], [0], [0], [1], [0, 0, 1, 1], [], []>} : vector<1632x68xf32>, vector<68x1xf32>, vector<1632x1xf32> -> vector<1632x1xf32>
    %c0_3 = arith.constant 0 : index
    %c0_4 = arith.constant 0 : index
    %3 = vector.load %arg2[%c0_3, %c0_4] : memref<1632x1xf32, #tpu.memory_space<vmem>>, vector<1632x1xf32>
    %4 = arith.addf %2, %3 : vector<1632x1xf32>
    %5 = arith.negf %4 : vector<1632x1xf32>
    %6 = math.exp %5 : vector<1632x1xf32>
    %cst_5 = arith.constant 1.000000e+00 : f32
    %7 = vector.broadcast %cst_5 : f32 to vector<1632x1xf32>
    %8 = arith.addf %7, %6 : vector<1632x1xf32>
    %9 = arith.divf %7, %8 : vector<1632x1xf32>
    %c0_6 = arith.constant 0 : index
    %c0_7 = arith.constant 0 : index
    %10 = vector.load %arg3[%c0_6, %c0_7] : memref<1632x49xf32, #tpu.memory_space<vmem>>, vector<1632x49xf32>
    %11 = vector.broadcast %9 : vector<1632x1xf32> to vector<1632x49xf32>
    %12 = arith.mulf %10, %11 : vector<1632x49xf32>
    %c0_8 = arith.constant 0 : index
    %c0_9 = arith.constant 0 : index
    %13 = vector.load %arg4[%c0_8, %c0_9] : memref<1632x49xf32, #tpu.memory_space<vmem>>, vector<1632x49xf32>
    tpu.vector_store %arg4[%c0_8, %c0_9], %12 {strides = array<i32>} : memref<1632x49xf32, #tpu.memory_space<vmem>>, vector<1632x49xf32>,
    return
  }
}

</mosaic_0001>

<llo_original>
// kernel: tpu_custom_call.1
$region0: #{tpu_custom_call.1}
  #allocation0 [shape = 'u32[]', space=smem, size = 0x4, offset = 0x4, fixed_abs, tag = 'smem constant byte address 0x4 - core index']
  #allocation1 [shape = 'u32[144,128]{1,0:T(1,128)}', space=vmem, size = 0x12000, scoped, tag = 'internal scratch']
  %s0 = inlined_call_operand.vmem [shape: f32[1632,68], index: 0, kind: input, shape index: {}]
  %s1 = inlined_call_operand.vmem [shape: f32[68,1], index: 1, kind: input, shape index: {}]
  %s2 = inlined_call_operand.vmem [shape: f32[1632,1], index: 2, kind: input, shape index: {}]
  %s3 = inlined_call_operand.vmem [shape: f32[1632,49], index: 3, kind: input, shape index: {}]
  %s4 = inlined_call_operand.vmem [shape: f32[1632,49], index: 4, kind: output, shape index: {}]
  %s5 = sld [smem:[#allocation0]]
  $region26: #{tpu_custom_call.1} parent=0
    _
  %s7 = ssub.s32 1, %s5
  %s8 = scalar_select 0, %s7, %s5
  // Predicated region
  $region2: #{tpu_custom_call.1} parent=0 // pred_check
    _
  $region3: #{tpu_custom_call.1} parent=0 // pred_check_branch
    %10 = sbr.rel (0) target = $region5
  $region4: #{tpu_custom_call.1} parent=0 // pred_region
    _
  $region5: #{tpu_custom_call.1} parent=0 // pred_fallthru
    _
  // Predicated region
  $region6: #{tpu_custom_call.1} parent=0 // pred_check
    _
  $region7: #{tpu_custom_call.1} parent=0 // pred_check_branch
    %12 = sbr.rel (0) target = $region9
  $region8: #{tpu_custom_call.1} parent=0 // pred_region
    _
  $region9: #{tpu_custom_call.1} parent=0 // pred_fallthru
    _
  // Predicated region
  $region10: #{tpu_custom_call.1} parent=0 // pred_check
    _
  $region11: #{tpu_custom_call.1} parent=0 // pred_check_branch
    %14 = sbr.rel (0) target = $region13
  $region12: #{tpu_custom_call.1} parent=0 // pred_region
    _
  $region13: #{tpu_custom_call.1} parent=0 // pred_fallthru
    _
  // Predicated region
  $region14: #{tpu_custom_call.1} parent=0 // pred_check
    _
  $region15: #{tpu_custom_call.1} parent=0 // pred_check_branch
    %16 = sbr.rel (0) target = $region17
  $region16: #{tpu_custom_call.1} parent=0 // pred_region
    _
  $region17: #{tpu_custom_call.1} parent=0 // pred_fallthru
    _
  %v17 = vld [vmem:[%s0] sm:$0xff]
  %v18 = vld [vmem:[%s0 + $0x8] sm:$0xff]
  %v19 = vld [vmem:[%s0 + $0x10] sm:$0xff]
  %v20 = vld [vmem:[%s0 + $0x18] sm:$0xff]
  %v21 = vld [vmem:[%s0 + $0x20] sm:$0xff]
  %v22 = vld [vmem:[%s0 + $0x28] sm:$0xff]
  %v23 = vld [vmem:[%s0 + $0x30] sm:$0xff]
  %v24 = vld [vmem:[%s0 + $0x38] sm:$0xff]
  %v25 = vld [vmem:[%s0 + $0x40] sm:$0xff]
  %v26 = vld [vmem:[%s0 + $0x48] sm:$0xff]
  %v27 = vld [vmem:[%s0 + $0x50] sm:$0xff]
  %v28 = vld [vmem:[%s0 + $0x58] sm:$0xff]
  %v29 = vld [vmem:[%s0 + $0x60] sm:$0xff]
  %v30 = vld [vmem:[%s0 + $0x68] sm:$0xff]
  %v31 = vld [vmem:[%s0 + $0x70] sm:$0xff]
  %v32 = vld [vmem:[%s0 + $0x78] sm:$0xff]
  %v33 = vld [vmem:[%s0 + $0x80] sm:$0xff]
  %v34 = vld [vmem:[%s0 + $0x88] sm:$0xff]
  %v35 = vld [vmem:[%s0 + $0x90] sm:$0xff]
  %v36 = vld [vmem:[%s0 + $0x98] sm:$0xff]
  %v37 = vld [vmem:[%s0 + $0xa0] sm:$0xff]
  %v38 = vld [vmem:[%s0 + $0xa8] sm:$0xff]
  %v39 = vld [vmem:[%s0 + $0xb0] sm:$0xff]
  %v40 = vld [vmem:[%s0 + $0xb8] sm:$0xff]
  %v41 = vld [vmem:[%s0 + $0xc0] sm:$0xff]
  %v42 = vld [vmem:[%s0 + $0xc8] sm:$0xff]
  %v43 = vld [vmem:[%s0 + $0xd0] sm:$0xff]
  %v44 = vld [vmem:[%s0 + $0xd8] sm:$0xff]
  %v45 = vld [vmem:[%s0 + $0xe0] sm:$0xff]
  %v46 = vld [vmem:[%s0 + $0xe8] sm:$0xff]
  %v47 = vld [vmem:[%s0 + $0xf0] sm:$0xff]
  %v48 = vld [vmem:[%s0 + $0xf8] sm:$0xff]
  %v49 = vld [vmem:[%s0 + $0x100] sm:$0xff]
  %v50 = vld [vmem:[%s0 + $0x108] sm:$0xff]
  %v51 = vld [vmem:[%s0 + $0x110] sm:$0xff]
  %v52 = vld [vmem:[%s0 + $0x118] sm:$0xff]
  %v53 = vld [vmem:[%s0 + $0x120] sm:$0xff]
  %v54 = vld [vmem:[%s0 + $0x128] sm:$0xff]
  %v55 = vld [vmem:[%s0 + $0x130] sm:$0xff]
  %v56 = vld [vmem:[%s0 + $0x138] sm:$0xff]
  %v57 = vld [vmem:[%s0 + $0x140] sm:$0xff]
  %v58 = vld [vmem:[%s0 + $0x148] sm:$0xff]
  %v59 = vld [vmem:[%s0 + $0x150] sm:$0xff]
  %v60 = vld [vmem:[%s0 + $0x158] sm:$0xff]
  %v61 = vld [vmem:[%s0 + $0x160] sm:$0xff]
  %v62 = vld [vmem:[%s0 + $0x168] sm:$0xff]
  %v63 = vld [vmem:[%s0 + $0x170] sm:$0xff]
  %v64 = vld [vmem:[%s0 + $0x178] sm:$0xff]
  %v65 = vld [vmem:[%s0 + $0x180] sm:$0xff]
  %v66 = vld [vmem:[%s0 + $0x188] sm:$0xff]
  %v67 = vld [vmem:[%s0 + $0x190] sm:$0xff]
  %v68 = vld [vmem:[%s0 + $0x198] sm:$0xff]
  %v69 = vld [vmem:[%s0 + $0x1a0] sm:$0xff]
  %v70 = vld [vmem:[%s0 + $0x1a8] sm:$0xff]
  %v71 = vld [vmem:[%s0 + $0x1b0] sm:$0xff]
  %v72 = vld [vmem:[%s0 + $0x1b8] sm:$0xff]
  %v73 = vld [vmem:[%s0 + $0x1c0] sm:$0xff]
  %v74 = vld [vmem:[%s0 + $0x1c8] sm:$0xff]
  %v75 = vld [vmem:[%s0 + $0x1d0] sm:$0xff]
  %v76 = vld [vmem:[%s0 + $0x1d8] sm:$0xff]
  %v77 = vld [vmem:[%s0 + $0x1e0] sm:$0xff]
  %v78 = vld [vmem:[%s0 + $0x1e8] sm:$0xff]
  %v79 = vld [vmem:[%s0 + $0x1f0] sm:$0xff]
  %v80 = vld [vmem:[%s0 + $0x1f8] sm:$0xff]
  %v81 = vld [vmem:[%s0 + $0x200] sm:$0xff]
  %v82 = vld [vmem:[%s0 + $0x208] sm:$0xff]
  %v83 = vld [vmem:[%s0 + $0x210] sm:$0xff]
  %v84 = vld [vmem:[%s0 + $0x218] sm:$0xff]
  %v85 = vld [vmem:[%s0 + $0x220] sm:$0xff]
  %v86 = vld [vmem:[%s0 + $0x228] sm:$0xff]
  %v87 = vld [vmem:[%s0 + $0x230] sm:$0xff]
  %v88 = vld [vmem:[%s0 + $0x238] sm:$0xff]
  %v89 = vld [vmem:[%s0 + $0x240] sm:$0xff]
  %v90 = vld [vmem:[%s0 + $0x248] sm:$0xff]
  %v91 = vld [vmem:[%s0 + $0x250] sm:$0xff]
  %v92 = vld [vmem:[%s0 + $0x258] sm:$0xff]
  %v93 = vld [vmem:[%s0 + $0x260] sm:$0xff]
  %v94 = vld [vmem:[%s0 + $0x268] sm:$0xff]
  %v95 = vld [vmem:[%s0 + $0x270] sm:$0xff]
  %v96 = vld [vmem:[%s0 + $0x278] sm:$0xff]
  %v97 = vld [vmem:[%s0 + $0x280] sm:$0xff]
  %v98 = vld [vmem:[%s0 + $0x288] sm:$0xff]
  %v99 = vld [vmem:[%s0 + $0x290] sm:$0xff]
  %v100 = vld [vmem:[%s0 + $0x298] sm:$0xff]
  %v101 = vld [vmem:[%s0 + $0x2a0] sm:$0xff]
  %v102 = vld [vmem:[%s0 + $0x2a8] sm:$0xff]
  %v103 = vld [vmem:[%s0 + $0x2b0] sm:$0xff]
  %v104 = vld [vmem:[%s0 + $0x2b8] sm:$0xff]
  %v105 = vld [vmem:[%s0 + $0x2c0] sm:$0xff]
  %v106 = vld [vmem:[%s0 + $0x2c8] sm:$0xff]
  %v107 = vld [vmem:[%s0 + $0x2d0] sm:$0xff]
  %v108 = vld [vmem:[%s0 + $0x2d8] sm:$0xff]
  %v109 = vld [vmem:[%s0 + $0x2e0] sm:$0xff]
  %v110 = vld [vmem:[%s0 + $0x2e8] sm:$0xff]
  %v111 = vld [vmem:[%s0 + $0x2f0] sm:$0xff]
  %v112 = vld [vmem:[%s0 + $0x2f8] sm:$0xff]
  %v113 = vld [vmem:[%s0 + $0x300] sm:$0xff]
  %v114 = vld [vmem:[%s0 + $0x308] sm:$0xff]
  %v115 = vld [vmem:[%s0 + $0x310] sm:$0xff]
  %v116 = vld [vmem:[%s0 + $0x318] sm:$0xff]
  %v117 = vld [vmem:[%s0 + $0x320] sm:$0xff]
  %v118 = vld [vmem:[%s0 + $0x328] sm:$0xff]
  %v119 = vld [vmem:[%s0 + $0x330] sm:$0xff]
  %v120 = vld [vmem:[%s0 + $0x338] sm:$0xff]
  %v121 = vld [vmem:[%s0 + $0x340] sm:$0xff]
  %v122 = vld [vmem:[%s0 + $0x348] sm:$0xff]
  %v123 = vld [vmem:[%s0 + $0x350] sm:$0xff]
  %v124 = vld [vmem:[%s0 + $0x358] sm:$0xff]
  %v125 = vld [vmem:[%s0 + $0x360] sm:$0xff]
  %v126 = vld [vmem:[%s0 + $0x368] sm:$0xff]
  %v127 = vld [vmem:[%s0 + $0x370] sm:$0xff]
  %v128 = vld [vmem:[%s0 + $0x378] sm:$0xff]
  %v129 = vld [vmem:[%s0 + $0x380] sm:$0xff]
  %v130 = vld [vmem:[%s0 + $0x388] sm:$0xff]
  %v131 = vld [vmem:[%s0 + $0x390] sm:$0xff]
  %v132 = vld [vmem:[%s0 + $0x398] sm:$0xff]
  %v133 = vld [vmem:[%s0 + $0x3a0] sm:$0xff]
  %v134 = vld [vmem:[%s0 + $0x3a8] sm:$0xff]
  %v135 = vld [vmem:[%s0 + $0x3b0] sm:$0xff]
  %v136 = vld [vmem:[%s0 + $0x3b8] sm:$0xff]
  %v137 = vld [vmem:[%s0 + $0x3c0] sm:$0xff]
  %v138 = vld [vmem:[%s0 + $0x3c8] sm:$0xff]
  %v139 = vld [vmem:[%s0 + $0x3d0] sm:$0xff]
  %v140 = vld [vmem:[%s0 + $0x3d8] sm:$0xff]
  %v141 = vld [vmem:[%s0 + $0x3e0] sm:$0xff]
  %v142 = vld [vmem:[%s0 + $0x3e8] sm:$0xff]
  %v143 = vld [vmem:[%s0 + $0x3f0] sm:$0xff]
  %v144 = vld [vmem:[%s0 + $0x3f8] sm:$0xff]
  %v145 = vld [vmem:[%s0 + $0x400] sm:$0xff]
  %v146 = vld [vmem:[%s0 + $0x408] sm:$0xff]
  %v147 = vld [vmem:[%s0 + $0x410] sm:$0xff]
  %v148 = vld [vmem:[%s0 + $0x418] sm:$0xff]
  %v149 = vld [vmem:[%s0 + $0x420] sm:$0xff]
  %v150 = vld [vmem:[%s0 + $0x428] sm:$0xff]
  %v151 = vld [vmem:[%s0 + $0x430] sm:$0xff]
  %v152 = vld [vmem:[%s0 + $0x438] sm:$0xff]
  %v153 = vld [vmem:[%s0 + $0x440] sm:$0xff]
  %v154 = vld [vmem:[%s0 + $0x448] sm:$0xff]
  %v155 = vld [vmem:[%s0 + $0x450] sm:$0xff]
  %v156 = vld [vmem:[%s0 + $0x458] sm:$0xff]
  %v157 = vld [vmem:[%s0 + $0x460] sm:$0xff]
  %v158 = vld [vmem:[%s0 + $0x468] sm:$0xff]
  %v159 = vld [vmem:[%s0 + $0x470] sm:$0xff]
  %v160 = vld [vmem:[%s0 + $0x478] sm:$0xff]
  %v161 = vld [vmem:[%s0 + $0x480] sm:$0xff]
  %v162 = vld [vmem:[%s0 + $0x488] sm:$0xff]
  %v163 = vld [vmem:[%s0 + $0x490] sm:$0xff]
  %v164 = vld [vmem:[%s0 + $0x498] sm:$0xff]
  %v165 = vld [vmem:[%s0 + $0x4a0] sm:$0xff]
  %v166 = vld [vmem:[%s0 + $0x4a8] sm:$0xff]
  %v167 = vld [vmem:[%s0 + $0x4b0] sm:$0xff]
  %v168 = vld [vmem:[%s0 + $0x4b8] sm:$0xff]
  %v169 = vld [vmem:[%s0 + $0x4c0] sm:$0xff]
  %v170 = vld [vmem:[%s0 + $0x4c8] sm:$0xff]
  %v171 = vld [vmem:[%s0 + $0x4d0] sm:$0xff]
  %v172 = vld [vmem:[%s0 + $0x4d8] sm:$0xff]
  %v173 = vld [vmem:[%s0 + $0x4e0] sm:$0xff]
  %v174 = vld [vmem:[%s0 + $0x4e8] sm:$0xff]
  %v175 = vld [vmem:[%s0 + $0x4f0] sm:$0xff]
  %v176 = vld [vmem:[%s0 + $0x4f8] sm:$0xff]
  %v177 = vld [vmem:[%s0 + $0x500] sm:$0xff]
  %v178 = vld [vmem:[%s0 + $0x508] sm:$0xff]
  %v179 = vld [vmem:[%s0 + $0x510] sm:$0xff]
  %v180 = vld [vmem:[%s0 + $0x518] sm:$0xff]
  %v181 = vld [vmem:[%s0 + $0x520] sm:$0xff]
  %v182 = vld [vmem:[%s0 + $0x528] sm:$0xff]
  %v183 = vld [vmem:[%s0 + $0x530] sm:$0xff]
  %v184 = vld [vmem:[%s0 + $0x538] sm:$0xff]
  %v185 = vld [vmem:[%s0 + $0x540] sm:$0xff]
  %v186 = vld [vmem:[%s0 + $0x548] sm:$0xff]
  %v187 = vld [vmem:[%s0 + $0x550] sm:$0xff]
  %v188 = vld [vmem:[%s0 + $0x558] sm:$0xff]
  %v189 = vld [vmem:[%s0 + $0x560] sm:$0xff]
  %v190 = vld [vmem:[%s0 + $0x568] sm:$0xff]
  %v191 = vld [vmem:[%s0 + $0x570] sm:$0xff]
  %v192 = vld [vmem:[%s0 + $0x578] sm:$0xff]
  %v193 = vld [vmem:[%s0 + $0x580] sm:$0xff]
  %v194 = vld [vmem:[%s0 + $0x588] sm:$0xff]
  %v195 = vld [vmem:[%s0 + $0x590] sm:$0xff]
  %v196 = vld [vmem:[%s0 + $0x598] sm:$0xff]
  %v197 = vld [vmem:[%s0 + $0x5a0] sm:$0xff]
  %v198 = vld [vmem:[%s0 + $0x5a8] sm:$0xff]
  %v199 = vld [vmem:[%s0 + $0x5b0] sm:$0xff]
  %v200 = vld [vmem:[%s0 + $0x5b8] sm:$0xff]
  %v201 = vld [vmem:[%s0 + $0x5c0] sm:$0xff]
  %v202 = vld [vmem:[%s0 + $0x5c8] sm:$0xff]
  %v203 = vld [vmem:[%s0 + $0x5d0] sm:$0xff]
  %v204 = vld [vmem:[%s0 + $0x5d8] sm:$0xff]
  %v205 = vld [vmem:[%s0 + $0x5e0] sm:$0xff]
  %v206 = vld [vmem:[%s0 + $0x5e8] sm:$0xff]
  %v207 = vld [vmem:[%s0 + $0x5f0] sm:$0xff]
  %v208 = vld [vmem:[%s0 + $0x5f8] sm:$0xff]
  %v209 = vld [vmem:[%s0 + $0x600] sm:$0xff]
  %v210 = vld [vmem:[%s0 + $0x608] sm:$0xff]
  %v211 = vld [vmem:[%s0 + $0x610] sm:$0xff]
  %v212 = vld [vmem:[%s0 + $0x618] sm:$0xff]
  %v213 = vld [vmem:[%s0 + $0x620] sm:$0xff]
  %v214 = vld [vmem:[%s0 + $0x628] sm:$0xff]
  %v215 = vld [vmem:[%s0 + $0x630] sm:$0xff]
  %v216 = vld [vmem:[%s0 + $0x638] sm:$0xff]
  %v217 = vld [vmem:[%s0 + $0x640] sm:$0xff]
  %v218 = vld [vmem:[%s0 + $0x648] sm:$0xff]
  %v219 = vld [vmem:[%s0 + $0x650] sm:$0xff]
  %v220 = vld [vmem:[%s0 + $0x658] sm:$0xff]
  %v221 = vld [vmem:[%s1] sm:$0xff]
  %v222 = vld [vmem:[%s1 + $0x8] sm:$0xff]
  %v223 = vld [vmem:[%s1 + $0x10] sm:$0xff]
  %v224 = vld [vmem:[%s1 + $0x18] sm:$0xff]
  %v225 = vld [vmem:[%s1 + $0x20] sm:$0xff]
  %v226 = vld [vmem:[%s1 + $0x28] sm:$0xff]
  %v227 = vld [vmem:[%s1 + $0x30] sm:$0xff]
  %v228 = vld [vmem:[%s1 + $0x38] sm:$0xff]
  %v229 = vld [vmem:[%s1 + $0x40] sm:$0xf]
  %v230 = vld [vmem:[%s2] sm:$0xff]
  %v231 = vld [vmem:[%s2 + $0x8] sm:$0xff]
  %v232 = vld [vmem:[%s2 + $0x10] sm:$0xff]
  %v233 = vld [vmem:[%s2 + $0x18] sm:$0xff]
  %v234 = vld [vmem:[%s2 + $0x20] sm:$0xff]
  %v235 = vld [vmem:[%s2 + $0x28] sm:$0xff]
  %v236 = vld [vmem:[%s2 + $0x30] sm:$0xff]
  %v237 = vld [vmem:[%s2 + $0x38] sm:$0xff]
  %v238 = vld [vmem:[%s2 + $0x40] sm:$0xff]
  %v239 = vld [vmem:[%s2 + $0x48] sm:$0xff]
  %v240 = vld [vmem:[%s2 + $0x50] sm:$0xff]
  %v241 = vld [vmem:[%s2 + $0x58] sm:$0xff]
  %v242 = vld [vmem:[%s2 + $0x60] sm:$0xff]
  %v243 = vld [vmem:[%s2 + $0x68] sm:$0xff]
  %v244 = vld [vmem:[%s2 + $0x70] sm:$0xff]
  %v245 = vld [vmem:[%s2 + $0x78] sm:$0xff]
  %v246 = vld [vmem:[%s2 + $0x80] sm:$0xff]
  %v247 = vld [vmem:[%s2 + $0x88] sm:$0xff]
  %v248 = vld [vmem:[%s2 + $0x90] sm:$0xff]
  %v249 = vld [vmem:[%s2 + $0x98] sm:$0xff]
  %v250 = vld [vmem:[%s2 + $0xa0] sm:$0xff]
  %v251 = vld [vmem:[%s2 + $0xa8] sm:$0xff]
  %v252 = vld [vmem:[%s2 + $0xb0] sm:$0xff]
  %v253 = vld [vmem:[%s2 + $0xb8] sm:$0xff]
  %v254 = vld [vmem:[%s2 + $0xc0] sm:$0xff]
  %v255 = vld [vmem:[%s2 + $0xc8] sm:$0xff]
  %v256 = vld [vmem:[%s2 + $0xd0] sm:$0xff]
  %v257 = vld [vmem:[%s2 + $0xd8] sm:$0xff]
  %v258 = vld [vmem:[%s2 + $0xe0] sm:$0xff]
  %v259 = vld [vmem:[%s2 + $0xe8] sm:$0xff]
  %v260 = vld [vmem:[%s2 + $0xf0] sm:$0xff]
  %v261 = vld [vmem:[%s2 + $0xf8] sm:$0xff]
  %v262 = vld [vmem:[%s2 + $0x100] sm:$0xff]
  %v263 = vld [vmem:[%s2 + $0x108] sm:$0xff]
  %v264 = vld [vmem:[%s2 + $0x110] sm:$0xff]
  %v265 = vld [vmem:[%s2 + $0x118] sm:$0xff]
  %v266 = vld [vmem:[%s2 + $0x120] sm:$0xff]
  %v267 = vld [vmem:[%s2 + $0x128] sm:$0xff]
  %v268 = vld [vmem:[%s2 + $0x130] sm:$0xff]
  %v269 = vld [vmem:[%s2 + $0x138] sm:$0xff]
  %v270 = vld [vmem:[%s2 + $0x140] sm:$0xff]
  %v271 = vld [vmem:[%s2 + $0x148] sm:$0xff]
  %v272 = vld [vmem:[%s2 + $0x150] sm:$0xff]
  %v273 = vld [vmem:[%s2 + $0x158] sm:$0xff]
  %v274 = vld [vmem:[%s2 + $0x160] sm:$0xff]
  %v275 = vld [vmem:[%s2 + $0x168] sm:$0xff]
  %v276 = vld [vmem:[%s2 + $0x170] sm:$0xff]
  %v277 = vld [vmem:[%s2 + $0x178] sm:$0xff]
  %v278 = vld [vmem:[%s2 + $0x180] sm:$0xff]
  %v279 = vld [vmem:[%s2 + $0x188] sm:$0xff]
  %v280 = vld [vmem:[%s2 + $0x190] sm:$0xff]
  %v281 = vld [vmem:[%s2 + $0x198] sm:$0xff]
  %v282 = vld [vmem:[%s2 + $0x1a0] sm:$0xff]
  %v283 = vld [vmem:[%s2 + $0x1a8] sm:$0xff]
  %v284 = vld [vmem:[%s2 + $0x1b0] sm:$0xff]
  %v285 = vld [vmem:[%s2 + $0x1b8] sm:$0xff]
  %v286 = vld [vmem:[%s2 + $0x1c0] sm:$0xff]
  %v287 = vld [vmem:[%s2 + $0x1c8] sm:$0xff]
  %v288 = vld [vmem:[%s2 + $0x1d0] sm:$0xff]
  %v289 = vld [vmem:[%s2 + $0x1d8] sm:$0xff]
  %v290 = vld [vmem:[%s2 + $0x1e0] sm:$0xff]
  %v291 = vld [vmem:[%s2 + $0x1e8] sm:$0xff]
  %v292 = vld [vmem:[%s2 + $0x1f0] sm:$0xff]
  %v293 = vld [vmem:[%s2 + $0x1f8] sm:$0xff]
  %v294 = vld [vmem:[%s2 + $0x200] sm:$0xff]
  %v295 = vld [vmem:[%s2 + $0x208] sm:$0xff]
  %v296 = vld [vmem:[%s2 + $0x210] sm:$0xff]
  %v297 = vld [vmem:[%s2 + $0x218] sm:$0xff]
  %v298 = vld [vmem:[%s2 + $0x220] sm:$0xff]
  %v299 = vld [vmem:[%s2 + $0x228] sm:$0xff]
  %v300 = vld [vmem:[%s2 + $0x230] sm:$0xff]
  %v301 = vld [vmem:[%s2 + $0x238] sm:$0xff]
  %v302 = vld [vmem:[%s2 + $0x240] sm:$0xff]
  %v303 = vld [vmem:[%s2 + $0x248] sm:$0xff]
  %v304 = vld [vmem:[%s2 + $0x250] sm:$0xff]
  %v305 = vld [vmem:[%s2 + $0x258] sm:$0xff]
  %v306 = vld [vmem:[%s2 + $0x260] sm:$0xff]
  %v307 = vld [vmem:[%s2 + $0x268] sm:$0xff]
  %v308 = vld [vmem:[%s2 + $0x270] sm:$0xff]
  %v309 = vld [vmem:[%s2 + $0x278] sm:$0xff]
  %v310 = vld [vmem:[%s2 + $0x280] sm:$0xff]
  %v311 = vld [vmem:[%s2 + $0x288] sm:$0xff]
  %v312 = vld [vmem:[%s2 + $0x290] sm:$0xff]
  %v313 = vld [vmem:[%s2 + $0x298] sm:$0xff]
  %v314 = vld [vmem:[%s2 + $0x2a0] sm:$0xff]
  %v315 = vld [vmem:[%s2 + $0x2a8] sm:$0xff]
  %v316 = vld [vmem:[%s2 + $0x2b0] sm:$0xff]
  %v317 = vld [vmem:[%s2 + $0x2b8] sm:$0xff]
  %v318 = vld [vmem:[%s2 + $0x2c0] sm:$0xff]
  %v319 = vld [vmem:[%s2 + $0x2c8] sm:$0xff]
  %v320 = vld [vmem:[%s2 + $0x2d0] sm:$0xff]
  %v321 = vld [vmem:[%s2 + $0x2d8] sm:$0xff]
  %v322 = vld [vmem:[%s2 + $0x2e0] sm:$0xff]
  %v323 = vld [vmem:[%s2 + $0x2e8] sm:$0xff]
  %v324 = vld [vmem:[%s2 + $0x2f0] sm:$0xff]
  %v325 = vld [vmem:[%s2 + $0x2f8] sm:$0xff]
  %v326 = vld [vmem:[%s2 + $0x300] sm:$0xff]
  %v327 = vld [vmem:[%s2 + $0x308] sm:$0xff]
  %v328 = vld [vmem:[%s2 + $0x310] sm:$0xff]
  %v329 = vld [vmem:[%s2 + $0x318] sm:$0xff]
  %v330 = vld [vmem:[%s2 + $0x320] sm:$0xff]
  %v331 = vld [vmem:[%s2 + $0x328] sm:$0xff]
  %v332 = vld [vmem:[%s2 + $0x330] sm:$0xff]
  %v333 = vld [vmem:[%s2 + $0x338] sm:$0xff]
  %v334 = vld [vmem:[%s2 + $0x340] sm:$0xff]
  %v335 = vld [vmem:[%s2 + $0x348] sm:$0xff]
  %v336 = vld [vmem:[%s2 + $0x350] sm:$0xff]
  %v337 = vld [vmem:[%s2 + $0x358] sm:$0xff]
  %v338 = vld [vmem:[%s2 + $0x360] sm:$0xff]
  %v339 = vld [vmem:[%s2 + $0x368] sm:$0xff]
  %v340 = vld [vmem:[%s2 + $0x370] sm:$0xff]
  %v341 = vld [vmem:[%s2 + $0x378] sm:$0xff]
  %v342 = vld [vmem:[%s2 + $0x380] sm:$0xff]
  %v343 = vld [vmem:[%s2 + $0x388] sm:$0xff]
  %v344 = vld [vmem:[%s2 + $0x390] sm:$0xff]
  %v345 = vld [vmem:[%s2 + $0x398] sm:$0xff]
  %v346 = vld [vmem:[%s2 + $0x3a0] sm:$0xff]
  %v347 = vld [vmem:[%s2 + $0x3a8] sm:$0xff]
  %v348 = vld [vmem:[%s2 + $0x3b0] sm:$0xff]
  %v349 = vld [vmem:[%s2 + $0x3b8] sm:$0xff]
  %v350 = vld [vmem:[%s2 + $0x3c0] sm:$0xff]
  %v351 = vld [vmem:[%s2 + $0x3c8] sm:$0xff]
  %v352 = vld [vmem:[%s2 + $0x3d0] sm:$0xff]
  %v353 = vld [vmem:[%s2 + $0x3d8] sm:$0xff]
  %v354 = vld [vmem:[%s2 + $0x3e0] sm:$0xff]
  %v355 = vld [vmem:[%s2 + $0x3e8] sm:$0xff]
  %v356 = vld [vmem:[%s2 + $0x3f0] sm:$0xff]
  %v357 = vld [vmem:[%s2 + $0x3f8] sm:$0xff]
  %v358 = vld [vmem:[%s2 + $0x400] sm:$0xff]
  %v359 = vld [vmem:[%s2 + $0x408] sm:$0xff]
  %v360 = vld [vmem:[%s2 + $0x410] sm:$0xff]
  %v361 = vld [vmem:[%s2 + $0x418] sm:$0xff]
  %v362 = vld [vmem:[%s2 + $0x420] sm:$0xff]
  %v363 = vld [vmem:[%s2 + $0x428] sm:$0xff]
  %v364 = vld [vmem:[%s2 + $0x430] sm:$0xff]
  %v365 = vld [vmem:[%s2 + $0x438] sm:$0xff]
  %v366 = vld [vmem:[%s2 + $0x440] sm:$0xff]
  %v367 = vld [vmem:[%s2 + $0x448] sm:$0xff]
  %v368 = vld [vmem:[%s2 + $0x450] sm:$0xff]
  %v369 = vld [vmem:[%s2 + $0x458] sm:$0xff]
  %v370 = vld [vmem:[%s2 + $0x460] sm:$0xff]
  %v371 = vld [vmem:[%s2 + $0x468] sm:$0xff]
  %v372 = vld [vmem:[%s2 + $0x470] sm:$0xff]
  %v373 = vld [vmem:[%s2 + $0x478] sm:$0xff]
  %v374 = vld [vmem:[%s2 + $0x480] sm:$0xff]
  %v375 = vld [vmem:[%s2 + $0x488] sm:$0xff]
  %v376 = vld [vmem:[%s2 + $0x490] sm:$0xff]
  %v377 = vld [vmem:[%s2 + $0x498] sm:$0xff]
  %v378 = vld [vmem:[%s2 + $0x4a0] sm:$0xff]
  %v379 = vld [vmem:[%s2 + $0x4a8] sm:$0xff]
  %v380 = vld [vmem:[%s2 + $0x4b0] sm:$0xff]
  %v381 = vld [vmem:[%s2 + $0x4b8] sm:$0xff]
  %v382 = vld [vmem:[%s2 + $0x4c0] sm:$0xff]
  %v383 = vld [vmem:[%s2 + $0x4c8] sm:$0xff]
  %v384 = vld [vmem:[%s2 + $0x4d0] sm:$0xff]
  %v385 = vld [vmem:[%s2 + $0x4d8] sm:$0xff]
  %v386 = vld [vmem:[%s2 + $0x4e0] sm:$0xff]
  %v387 = vld [vmem:[%s2 + $0x4e8] sm:$0xff]
  %v388 = vld [vmem:[%s2 + $0x4f0] sm:$0xff]
  %v389 = vld [vmem:[%s2 + $0x4f8] sm:$0xff]
  %v390 = vld [vmem:[%s2 + $0x500] sm:$0xff]
  %v391 = vld [vmem:[%s2 + $0x508] sm:$0xff]
  %v392 = vld [vmem:[%s2 + $0x510] sm:$0xff]
  %v393 = vld [vmem:[%s2 + $0x518] sm:$0xff]
  %v394 = vld [vmem:[%s2 + $0x520] sm:$0xff]
  %v395 = vld [vmem:[%s2 + $0x528] sm:$0xff]
  %v396 = vld [vmem:[%s2 + $0x530] sm:$0xff]
  %v397 = vld [vmem:[%s2 + $0x538] sm:$0xff]
  %v398 = vld [vmem:[%s2 + $0x540] sm:$0xff]
  %v399 = vld [vmem:[%s2 + $0x548] sm:$0xff]
  %v400 = vld [vmem:[%s2 + $0x550] sm:$0xff]
  %v401 = vld [vmem:[%s2 + $0x558] sm:$0xff]
  %v402 = vld [vmem:[%s2 + $0x560] sm:$0xff]
  %v403 = vld [vmem:[%s2 + $0x568] sm:$0xff]
  %v404 = vld [vmem:[%s2 + $0x570] sm:$0xff]
  %v405 = vld [vmem:[%s2 + $0x578] sm:$0xff]
  %v406 = vld [vmem:[%s2 + $0x580] sm:$0xff]
  %v407 = vld [vmem:[%s2 + $0x588] sm:$0xff]
  %v408 = vld [vmem:[%s2 + $0x590] sm:$0xff]
  %v409 = vld [vmem:[%s2 + $0x598] sm:$0xff]
  %v410 = vld [vmem:[%s2 + $0x5a0] sm:$0xff]
  %v411 = vld [vmem:[%s2 + $0x5a8] sm:$0xff]
  %v412 = vld [vmem:[%s2 + $0x5b0] sm:$0xff]
  %v413 = vld [vmem:[%s2 + $0x5b8] sm:$0xff]
  %v414 = vld [vmem:[%s2 + $0x5c0] sm:$0xff]
  %v415 = vld [vmem:[%s2 + $0x5c8] sm:$0xff]
  %v416 = vld [vmem:[%s2 + $0x5d0] sm:$0xff]
  %v417 = vld [vmem:[%s2 + $0x5d8] sm:$0xff]
  %v418 = vld [vmem:[%s2 + $0x5e0] sm:$0xff]
  %v419 = vld [vmem:[%s2 + $0x5e8] sm:$0xff]
  %v420 = vld [vmem:[%s2 + $0x5f0] sm:$0xff]
  %v421 = vld [vmem:[%s2 + $0x5f8] sm:$0xff]
  %v422 = vld [vmem:[%s2 + $0x600] sm:$0xff]
  %v423 = vld [vmem:[%s2 + $0x608] sm:$0xff]
  %v424 = vld [vmem:[%s2 + $0x610] sm:$0xff]
  %v425 = vld [vmem:[%s2 + $0x618] sm:$0xff]
  %v426 = vld [vmem:[%s2 + $0x620] sm:$0xff]
  %v427 = vld [vmem:[%s2 + $0x628] sm:$0xff]
  %v428 = vld [vmem:[%s2 + $0x630] sm:$0xff]
  %v429 = vld [vmem:[%s2 + $0x638] sm:$0xff]
  %v430 = vld [vmem:[%s2 + $0x640] sm:$0xff]
  %v431 = vld [vmem:[%s2 + $0x648] sm:$0xff]
  %v432 = vld [vmem:[%s2 + $0x650] sm:$0xff]
  %v433 = vld [vmem:[%s2 + $0x658] sm:$0xff]
  %vm434 = vcmask 556032
  %v436 = vsel %vm434, %v17, 0
  %v439 = vsel %vm434, %v18, 0
  %v442 = vsel %vm434, %v19, 0
  %v445 = vsel %vm434, %v20, 0
  %v448 = vsel %vm434, %v21, 0
  %v451 = vsel %vm434, %v22, 0
  %v454 = vsel %vm434, %v23, 0
  %v457 = vsel %vm434, %v24, 0
  %v460 = vsel %vm434, %v25, 0
  %v463 = vsel %vm434, %v26, 0
  %v466 = vsel %vm434, %v27, 0
  %v469 = vsel %vm434, %v28, 0
  %v472 = vsel %vm434, %v29, 0
  %v475 = vsel %vm434, %v30, 0
  %v478 = vsel %vm434, %v31, 0
  %v481 = vsel %vm434, %v32, 0
  %v484 = vsel %vm434, %v33, 0
  %v487 = vsel %vm434, %v34, 0
  %v490 = vsel %vm434, %v35, 0
  %v493 = vsel %vm434, %v36, 0
  %v496 = vsel %vm434, %v37, 0
  %v499 = vsel %vm434, %v38, 0
  %v502 = vsel %vm434, %v39, 0
  %v505 = vsel %vm434, %v40, 0
  %v508 = vsel %vm434, %v41, 0
  %v511 = vsel %vm434, %v42, 0
  %v514 = vsel %vm434, %v43, 0
  %v517 = vsel %vm434, %v44, 0
  %v520 = vsel %vm434, %v45, 0
  %v523 = vsel %vm434, %v46, 0
  %v526 = vsel %vm434, %v47, 0
  %v529 = vsel %vm434, %v48, 0
  %v532 = vsel %vm434, %v49, 0
  %v535 = vsel %vm434, %v50, 0
  %v538 = vsel %vm434, %v51, 0
  %v541 = vsel %vm434, %v52, 0
  %v544 = vsel %vm434, %v53, 0
  %v547 = vsel %vm434, %v54, 0
  %v550 = vsel %vm434, %v55, 0
  %v553 = vsel %vm434, %v56, 0
  %v556 = vsel %vm434, %v57, 0
  %v559 = vsel %vm434, %v58, 0
  %v562 = vsel %vm434, %v59, 0
  %v565 = vsel %vm434, %v60, 0
  %v568 = vsel %vm434, %v61, 0
  %v571 = vsel %vm434, %v62, 0
  %v574 = vsel %vm434, %v63, 0
  %v577 = vsel %vm434, %v64, 0
  %v580 = vsel %vm434, %v65, 0
  %v583 = vsel %vm434, %v66, 0
  %v586 = vsel %vm434, %v67, 0
  %v589 = vsel %vm434, %v68, 0
  %v592 = vsel %vm434, %v69, 0
  %v595 = vsel %vm434, %v70, 0
  %v598 = vsel %vm434, %v71, 0
  %v601 = vsel %vm434, %v72, 0
  %v604 = vsel %vm434, %v73, 0
  %v607 = vsel %vm434, %v74, 0
  %v610 = vsel %vm434, %v75, 0
  %v613 = vsel %vm434, %v76, 0
  %v616 = vsel %vm434, %v77, 0
  %v619 = vsel %vm434, %v78, 0
  %v622 = vsel %vm434, %v79, 0
  %v625 = vsel %vm434, %v80, 0
  %v628 = vsel %vm434, %v81, 0
  %v631 = vsel %vm434, %v82, 0
  %v634 = vsel %vm434, %v83, 0
  %v637 = vsel %vm434, %v84, 0
  %v640 = vsel %vm434, %v85, 0
  %v643 = vsel %vm434, %v86, 0
  %v646 = vsel %vm434, %v87, 0
  %v649 = vsel %vm434, %v88, 0
  %v652 = vsel %vm434, %v89, 0
  %v655 = vsel %vm434, %v90, 0
  %v658 = vsel %vm434, %v91, 0
  %v661 = vsel %vm434, %v92, 0
  %v664 = vsel %vm434, %v93, 0
  %v667 = vsel %vm434, %v94, 0
  %v670 = vsel %vm434, %v95, 0
  %v673 = vsel %vm434, %v96, 0
  %v676 = vsel %vm434, %v97, 0
  %v679 = vsel %vm434, %v98, 0
  %v682 = vsel %vm434, %v99, 0
  %v685 = vsel %vm434, %v100, 0
  %v688 = vsel %vm434, %v101, 0
  %v691 = vsel %vm434, %v102, 0
  %v694 = vsel %vm434, %v103, 0
  %v697 = vsel %vm434, %v104, 0
  %v700 = vsel %vm434, %v105, 0
  %v703 = vsel %vm434, %v106, 0
  %v706 = vsel %vm434, %v107, 0
  %v709 = vsel %vm434, %v108, 0
  %v712 = vsel %vm434, %v109, 0
  %v715 = vsel %vm434, %v110, 0
  %v718 = vsel %vm434, %v111, 0
  %v721 = vsel %vm434, %v112, 0
  %v724 = vsel %vm434, %v113, 0
  %v727 = vsel %vm434, %v114, 0
  %v730 = vsel %vm434, %v115, 0
  %v733 = vsel %vm434, %v116, 0
  %v736 = vsel %vm434, %v117, 0
  %v739 = vsel %vm434, %v118, 0
  %v742 = vsel %vm434, %v119, 0
  %v745 = vsel %vm434, %v120, 0
  %v748 = vsel %vm434, %v121, 0
  %v751 = vsel %vm434, %v122, 0
  %v754 = vsel %vm434, %v123, 0
  %v757 = vsel %vm434, %v124, 0
  %v760 = vsel %vm434, %v125, 0
  %v763 = vsel %vm434, %v126, 0
  %v766 = vsel %vm434, %v127, 0
  %v769 = vsel %vm434, %v128, 0
  %v772 = vsel %vm434, %v129, 0
  %v775 = vsel %vm434, %v130, 0
  %v778 = vsel %vm434, %v131, 0
  %v781 = vsel %vm434, %v132, 0
  %v784 = vsel %vm434, %v133, 0
  %v787 = vsel %vm434, %v134, 0
  %v790 = vsel %vm434, %v135, 0
  %v793 = vsel %vm434, %v136, 0
  %v796 = vsel %vm434, %v137, 0
  %v799 = vsel %vm434, %v138, 0
  %v802 = vsel %vm434, %v139, 0
  %v805 = vsel %vm434, %v140, 0
  %v808 = vsel %vm434, %v141, 0
  %v811 = vsel %vm434, %v142, 0
  %v814 = vsel %vm434, %v143, 0
  %v817 = vsel %vm434, %v144, 0
  %v820 = vsel %vm434, %v145, 0
  %v823 = vsel %vm434, %v146, 0
  %v826 = vsel %vm434, %v147, 0
  %v829 = vsel %vm434, %v148, 0
  %v832 = vsel %vm434, %v149, 0
  %v835 = vsel %vm434, %v150, 0
  %v838 = vsel %vm434, %v151, 0
  %v841 = vsel %vm434, %v152, 0
  %v844 = vsel %vm434, %v153, 0
  %v847 = vsel %vm434, %v154, 0
  %v850 = vsel %vm434, %v155, 0
  %v853 = vsel %vm434, %v156, 0
  %v856 = vsel %vm434, %v157, 0
  %v859 = vsel %vm434, %v158, 0
  %v862 = vsel %vm434, %v159, 0
  %v865 = vsel %vm434, %v160, 0
  %v868 = vsel %vm434, %v161, 0
  %v871 = vsel %vm434, %v162, 0
  %v874 = vsel %vm434, %v163, 0
  %v877 = vsel %vm434, %v164, 0
  %v880 = vsel %vm434, %v165, 0
  %v883 = vsel %vm434, %v166, 0
  %v886 = vsel %vm434, %v167, 0
  %v889 = vsel %vm434, %v168, 0
  %v892 = vsel %vm434, %v169, 0
  %v895 = vsel %vm434, %v170, 0
  %v898 = vsel %vm434, %v171, 0
  %v901 = vsel %vm434, %v172, 0
  %v904 = vsel %vm434, %v173, 0
  %v907 = vsel %vm434, %v174, 0
  %v910 = vsel %vm434, %v175, 0
  %v913 = vsel %vm434, %v176, 0
  %v916 = vsel %vm434, %v177, 0
  %v919 = vsel %vm434, %v178, 0
  %v922 = vsel %vm434, %v179, 0
  %v925 = vsel %vm434, %v180, 0
  %v928 = vsel %vm434, %v181, 0
  %v931 = vsel %vm434, %v182, 0
  %v934 = vsel %vm434, %v183, 0
  %v937 = vsel %vm434, %v184, 0
  %v940 = vsel %vm434, %v185, 0
  %v943 = vsel %vm434, %v186, 0
  %v946 = vsel %vm434, %v187, 0
  %v949 = vsel %vm434, %v188, 0
  %v952 = vsel %vm434, %v189, 0
  %v955 = vsel %vm434, %v190, 0
  %v958 = vsel %vm434, %v191, 0
  %v961 = vsel %vm434, %v192, 0
  %v964 = vsel %vm434, %v193, 0
  %v967 = vsel %vm434, %v194, 0
  %v970 = vsel %vm434, %v195, 0
  %v973 = vsel %vm434, %v196, 0
  %v976 = vsel %vm434, %v197, 0
  %v979 = vsel %vm434, %v198, 0
  %v982 = vsel %vm434, %v199, 0
  %v985 = vsel %vm434, %v200, 0
  %v988 = vsel %vm434, %v201, 0
  %v991 = vsel %vm434, %v202, 0
  %v994 = vsel %vm434, %v203, 0
  %v997 = vsel %vm434, %v204, 0
  %v1000 = vsel %vm434, %v205, 0
  %v1003 = vsel %vm434, %v206, 0
  %v1006 = vsel %vm434, %v207, 0
  %v1009 = vsel %vm434, %v208, 0
  %v1012 = vsel %vm434, %v209, 0
  %v1015 = vsel %vm434, %v210, 0
  %v1018 = vsel %vm434, %v211, 0
  %v1021 = vsel %vm434, %v212, 0
  %v1024 = vsel %vm434, %v213, 0
  %v1027 = vsel %vm434, %v214, 0
  %v1030 = vsel %vm434, %v215, 0
  %v1033 = vsel %vm434, %v216, 0
  %v1036 = vsel %vm434, %v217, 0
  %v1039 = vsel %vm434, %v218, 0
  %v1042 = vsel %vm434, %v219, 0
  %v1045 = vsel %vm434, %v220, 0
  %vm1047 = vcmask 1043456
  %v1049 = vsel %vm1047, %v229, 0
  %1051 = vmatprep.subr.mxu0 0.0
  %1052 = vmatpush1.msra.mxu0 %v221
  %1053 = vmatprep.subr.mxu0 0.0
  %1054 = vmatpush1.msra.mxu0 %v222
  %1055 = vmatprep.subr.mxu0 0.0
  %1056 = vmatpush1.msra.mxu0 %v223
  %1057 = vmatprep.subr.mxu0 0.0
  %1058 = vmatpush1.msra.mxu0 %v224
  %1059 = vmatprep.subr.mxu0 0.0
  %1060 = vmatpush1.msra.mxu0 %v225
  %1061 = vmatprep.subr.mxu0 0.0
  %1062 = vmatpush1.msra.mxu0 %v226
  %1063 = vmatprep.subr.mxu0 0.0
  %1064 = vmatpush1.msra.mxu0 %v227
  %1065 = vmatprep.subr.mxu0 0.0
  %1066 = vmatpush1.msra.mxu0 %v228
  %1067 = vmatprep.subr.mxu0 0.0
  %1068 = vmatpush1.msra.mxu0 %v1049
  %1069 = vmatprep.subr.mxu0 0.0
  %1070 = vmatpush1.msra.mxu0 0.0
  %1071 = vmatprep.subr.mxu0 0.0
  %1072 = vmatpush1.msra.mxu0 0.0
  %1073 = vmatprep.subr.mxu0 0.0
  %1074 = vmatpush1.msra.mxu0 0.0
  %1075 = vmatprep.subr.mxu0 0.0
  %1076 = vmatpush1.msra.mxu0 0.0
  %1077 = vmatprep.subr.mxu0 0.0
  %1078 = vmatpush1.msra.mxu0 0.0
  %1079 = vmatprep.subr.mxu0 0.0
  %1080 = vmatpush1.msra.mxu0 0.0
  %1081 = vmatprep.subr.mxu0 0.0
  %1082 = vmatpush1.msra.mxu0 0.0
  %1083 = vmatprep.subr.mxu0 0.0
  %1084 = vmatpush1.msra.mxu0 0.0
  %1085 = vmatprep.subr.mxu0 0.0
  %1086 = vmatpush1.msra.mxu0 0.0
  %1087 = vmatprep.subr.mxu0 0.0
  %1088 = vmatpush1.msra.mxu0 0.0
  %1089 = vmatprep.subr.mxu0 0.0
  %1090 = vmatpush1.msra.mxu0 0.0
  %1091 = vmatprep.subr.mxu0 0.0
  %1092 = vmatpush1.msra.mxu0 0.0
  %1093 = vmatprep.subr.mxu0 0.0
  %1094 = vmatpush1.msra.mxu0 0.0
  %1095 = vmatprep.subr.mxu0 0.0
  %1096 = vmatpush1.msra.mxu0 0.0
  %1097 = vmatprep.subr.mxu0 0.0
  %1098 = vmatpush1.msra.mxu0 0.0
  %1099 = vmatprep.subr.mxu0 0.0
  %1100 = vmatpush1.msra.mxu0 0.0
  %1101 = vmatprep.subr.mxu0 0.0
  %1102 = vmatpush1.msra.mxu0 0.0
  %1103 = vmatprep.subr.mxu0 0.0
  %1104 = vmatpush1.msra.mxu0 0.0
  %1105 = vmatprep.subr.mxu0 0.0
  %1106 = vmatpush1.msra.mxu0 0.0
  %1107 = vmatprep.subr.mxu0 0.0
  %1108 = vmatpush1.msra.mxu0 0.0
  %1109 = vmatprep.subr.mxu0 0.0
  %1110 = vmatpush1.msra.mxu0 0.0
  %1111 = vmatprep.subr.mxu0 0.0
  %1112 = vmatpush1.msra.mxu0 0.0
  %1113 = vmatprep.subr.mxu0 0.0
  %1114 = vmatpush1.msra.mxu0 0.0
  %1115 = vmatprep.mubr.f32.mxu0 0.0
  %1116 = vmatmul.mubr.f32.gmra.mrb[0].mxu0 %v436
  %v1117 = vpop.f32.mrb[0].mxu0
  %v1118 = vadd.f32 %v230, %v1117
  %v1119 = vpop.f32.mrb[0].mxu0
  %1120 = vmatprep.mubr.f32.mxu0 0.0
  %1121 = vmatmul.mubr.f32.gmra.mrb[0].mxu0 %v439
  %v1122 = vpop.f32.mrb[0].mxu0
  %v1123 = vadd.f32 %v231, %v1122
  %v1124 = vpop.f32.mrb[0].mxu0
  %1125 = vmatprep.mubr.f32.mxu0 0.0
  %1126 = vmatmul.mubr.f32.gmra.mrb[0].mxu0 %v442
  %v1127 = vpop.f32.mrb[0].mxu0
  %v1128 = vadd.f32 %v232, %v1127
  %v1129 = vpop.f32.mrb[0].mxu0
  %1130 = vmatprep.mubr.f32.mxu0 0.0
  %1131 = vmatmul.mubr.f32.gmra.mrb[0].mxu0 %v445
  %v1132 = vpop.f32.mrb[0].mxu0
  %v1133 = vadd.f32 %v233, %v1132
  %v1134 = vpop.f32.mrb[0].mxu0
  %1135 = vmatprep.mubr.f32.mxu0 0.0
  %1136 = vmatmul.mubr.f32.gmra.mrb[0].mxu0 %v448
  %v1137 = vpop.f32.mrb[0].mxu0
  %v1138 = vadd.f32 %v234, %v1137
  %v1139 = vpop.f32.mrb[0].mxu0
  %1140 = vmatprep.mubr.f32.mxu0 0.0
  %1141 = vmatmul.mubr.f32.gmra.mrb[0].mxu0 %v451
  %v1142 = vpop.f32.mrb[0].mxu0
  %v1143 = vadd.f32 %v235, %v1142
  %v1144 = vpop.f32.mrb[0].mxu0
  %1145 = vmatprep.mubr.f32.mxu0 0.0
  %1146 = vmatmul.mubr.f32.gmra.mrb[0].mxu0 %v454
  %v1147 = vpop.f32.mrb[0].mxu0
  %v1148 = vadd.f32 %v236, %v1147
  %v1149 = vpop.f32.mrb[0].mxu0
  %1150 = vmatprep.mubr.f32.mxu0 0.0
  %1151 = vmatmul.mubr.f32.gmra.mrb[0].mxu0 %v457
  %v1152 = vpop.f32.mrb[0].mxu0
  %v1153 = vadd.f32 %v237, %v1152
  %v1154 = vpop.f32.mrb[0].mxu0
  %1155 = vmatprep.mubr.f32.mxu0 0.0
  %1156 = vmatmul.mubr.f32.gmra.mrb[0].mxu0 %v460
  %v1157 = vpop.f32.mrb[0].mxu0
  %v1158 = vadd.f32 %v238, %v1157
  %v1159 = vpop.f32.mrb[0].mxu0
  %1160 = vmatprep.mubr.f32.mxu0 0.0
  %1161 = vmatmul.mubr.f32.gmra.mrb[0].mxu0 %v463
  %v1162 = vpop.f32.mrb[0].mxu0
  %v1163 = vadd.f32 %v239, %v1162
  %v1164 = vpop.f32.mrb[0].mxu0
  %1165 = vmatprep.mubr.f32.mxu0 0.0
  %1166 = vmatmul.mubr.f32.gmra.mrb[0].mxu0 %v466
  %v1167 = vpop.f32.mrb[0].mxu0
  %v1168 = vadd.f32 %v240, %v1167
  %v1169 = vpop.f32.mrb[0].mxu0
  %1170 = vmatprep.mubr.f32.mxu0 0.0
  %1171 = vmatmul.mubr.f32.gmra.mrb[0].mxu0 %v469
  %v1172 = vpop.f32.mrb[0].mxu0
  %v1173 = vadd.f32 %v241, %v1172
  %v1174 = vpop.f32.mrb[0].mxu0
  %1175 = vmatprep.mubr.f32.mxu0 0.0
  %1176 = vmatmul.mubr.f32.gmra.mrb[0].mxu0 %v472
  %v1177 = vpop.f32.mrb[0].mxu0
  %v1178 = vadd.f32 %v242, %v1177
  %v1179 = vpop.f32.mrb[0].mxu0
  %1180 = vmatprep.mubr.f32.mxu0 0.0
  %1181 = vmatmul.mubr.f32.gmra.mrb[0].mxu0 %v475
  %v1182 = vpop.f32.mrb[0].mxu0
  %v1183 = vadd.f32 %v243, %v1182
  %v1184 = vpop.f32.mrb[0].mxu0
  %1185 = vmatprep.mubr.f32.mxu0 0.0
  %1186 = vmatmul.mubr.f32.gmra.mrb[0].mxu0 %v478
  %v1187 = vpop.f32.mrb[0].mxu0
  %v1188 = vadd.f32 %v244, %v1187
  %v1189 = vpop.f32.mrb[0].mxu0
  %1190 = vmatprep.mubr.f32.mxu0 0.0
  %1191 = vmatmul.mubr.f32.gmra.mrb[0].mxu0 %v481
  %v1192 = vpop.f32.mrb[0].mxu0
  %v1193 = vadd.f32 %v245, %v1192
  %v1194 = vpop.f32.mrb[0].mxu0
  %1195 = vmatprep.mubr.f32.mxu0 0.0
  %1196 = vmatmul.mubr.f32.gmra.mrb[0].mxu0 %v484
  %v1197 = vpop.f32.mrb[0].mxu0
  %v1198 = vadd.f32 %v246, %v1197
  %v1199 = vpop.f32.mrb[0].mxu0
  %1200 = vmatprep.mubr.f32.mxu0 0.0
  %1201 = vmatmul.mubr.f32.gmra.mrb[0].mxu0 %v487
  %v1202 = vpop.f32.mrb[0].mxu0
  %v1203 = vadd.f32 %v247, %v1202
  %v1204 = vpop.f32.mrb[0].mxu0
  %1205 = vmatprep.mubr.f32.mxu0 0.0
  %1206 = vmatmul.mubr.f32.gmra.mrb[0].mxu0 %v490
  %v1207 = vpop.f32.mrb[0].mxu0
  %v1208 = vadd.f32 %v248, %v1207
  %v1209 = vpop.f32.mrb[0].mxu0
  %1210 = vmatprep.mubr.f32.mxu0 0.0
  %1211 = vmatmul.mubr.f32.gmra.mrb[0].mxu0 %v493
  %v1212 = vpop.f32.mrb[0].mxu0
  %v1213 = vadd.f32 %v249, %v1212
  %v1214 = vpop.f32.mrb[0].mxu0
  %1215 = vmatprep.mubr.f32.mxu0 0.0
  %1216 = vmatmul.mubr.f32.gmra.mrb[0].mxu0 %v496
  %v1217 = vpop.f32.mrb[0].mxu0
  %v1218 = vadd.f32 %v250, %v1217
  %v1219 = vpop.f32.mrb[0].mxu0
  %1220 = vmatprep.mubr.f32.mxu0 0.0
  %1221 = vmatmul.mubr.f32.gmra.mrb[0].mxu0 %v499
  %v1222 = vpop.f32.mrb[0].mxu0
  %v1223 = vadd.f32 %v251, %v1222
  %v1224 = vpop.f32.mrb[0].mxu0
  %1225 = vmatprep.mubr.f32.mxu0 0.0
  %1226 = vmatmul.mubr.f32.gmra.mrb[0].mxu0 %v502
  %v1227 = vpop.f32.mrb[0].mxu0
  %v1228 = vadd.f32 %v252, %v1227
  %v1229 = vpop.f32.mrb[0].mxu0
  %1230 = vmatprep.mubr.f32.mxu0 0.0
  %1231 = vmatmul.mubr.f32.gmra.mrb[0].mxu0 %v505
  %v1232 = vpop.f32.mrb[0].mxu0
  %v1233 = vadd.f32 %v253, %v1232
  %v1234 = vpop.f32.mrb[0].mxu0
  %1235 = vmatprep.mubr.f32.mxu0 0.0
  %1236 = vmatmul.mubr.f32.gmra.mrb[0].mxu0 %v508
  %v1237 = vpop.f32.mrb[0].mxu0
  %v1238 = vadd.f32 %v254, %v1237
  %v1239 = vpop.f32.mrb[0].mxu0
  %1240 = vmatprep.mubr.f32.mxu0 0.0
  %1241 = vmatmul.mubr.f32.gmra.mrb[0].mxu0 %v511
  %v1242 = vpop.f32.mrb[0].mxu0
  %v1243 = vadd.f32 %v255, %v1242
  %v1244 = vpop.f32.mrb[0].mxu0
  %1245 = vmatprep.mubr.f32.mxu0 0.0
  %1246 = vmatmul.mubr.f32.gmra.mrb[0].mxu0 %v514
  %v1247 = vpop.f32.mrb[0].mxu0
  %v1248 = vadd.f32 %v256, %v1247
  %v1249 = vpop.f32.mrb[0].mxu0
  %1250 = vmatprep.mubr.f32.mxu0 0.0
  %1251 = vmatmul.mubr.f32.gmra.mrb[0].mxu0 %v517
  %v1252 = vpop.f32.mrb[0].mxu0
  %v1253 = vadd.f32 %v257, %v1252
  %v1254 = vpop.f32.mrb[0].mxu0
  %1255 = vmatprep.mubr.f32.mxu0 0.0
  %1256 = vmatmul.mubr.f32.gmra.mrb[0].mxu0 %v520
  %v1257 = vpop.f32.mrb[0].mxu0
  %v1258 = vadd.f32 %v258, %v1257
  %v1259 = vpop.f32.mrb[0].mxu0
  %1260 = vmatprep.mubr.f32.mxu0 0.0
  %1261 = vmatmul.mubr.f32.gmra.mrb[0].mxu0 %v523
  %v1262 = vpop.f32.mrb[0].mxu0
  %v1263 = vadd.f32 %v259, %v1262
  %v1264 = vpop.f32.mrb[0].mxu0
  %1265 = vmatprep.mubr.f32.mxu0 0.0
  %1266 = vmatmul.mubr.f32.gmra.mrb[0].mxu0 %v526
  %v1267 = vpop.f32.mrb[0].mxu0
  %v1268 = vadd.f32 %v260, %v1267
  %v1269 = vpop.f32.mrb[0].mxu0
  %1270 = vmatprep.mubr.f32.mxu0 0.0
  %1271 = vmatmul.mubr.f32.gmra.mrb[0].mxu0 %v529
  %v1272 = vpop.f32.mrb[0].mxu0
  %v1273 = vadd.f32 %v261, %v1272
  %v1274 = vpop.f32.mrb[0].mxu0
  %1275 = vmatprep.mubr.f32.mxu0 0.0
  %1276 = vmatmul.mubr.f32.gmra.mrb[0].mxu0 %v532
  %v1277 = vpop.f32.mrb[0].mxu0
  %v1278 = vadd.f32 %v262, %v1277
  %v1279 = vpop.f32.mrb[0].mxu0
  %1280 = vmatprep.mubr.f32.mxu0 0.0
  %1281 = vmatmul.mubr.f32.gmra.mrb[0].mxu0 %v535
  %v1282 = vpop.f32.mrb[0].mxu0
  %v1283 = vadd.f32 %v263, %v1282
  %v1284 = vpop.f32.mrb[0].mxu0
  %1285 = vmatprep.mubr.f32.mxu0 0.0
  %1286 = vmatmul.mubr.f32.gmra.mrb[0].mxu0 %v538
  %v1287 = vpop.f32.mrb[0].mxu0
  %v1288 = vadd.f32 %v264, %v1287
  %v1289 = vpop.f32.mrb[0].mxu0
  %1290 = vmatprep.mubr.f32.mxu0 0.0
  %1291 = vmatmul.mubr.f32.gmra.mrb[0].mxu0 %v541
  %v1292 = vpop.f32.mrb[0].mxu0
  %v1293 = vadd.f32 %v265, %v1292
  %v1294 = vpop.f32.mrb[0].mxu0
  %1295 = vmatprep.mubr.f32.mxu0 0.0
  %1296 = vmatmul.mubr.f32.gmra.mrb[0].mxu0 %v544
  %v1297 = vpop.f32.mrb[0].mxu0
  %v1298 = vadd.f32 %v266, %v1297
  %v1299 = vpop.f32.mrb[0].mxu0
  %1300 = vmatprep.mubr.f32.mxu0 0.0
  %1301 = vmatmul.mubr.f32.gmra.mrb[0].mxu0 %v547
  %v1302 = vpop.f32.mrb[0].mxu0
  %v1303 = vadd.f32 %v267, %v1302
  %v1304 = vpop.f32.mrb[0].mxu0
  %1305 = vmatprep.mubr.f32.mxu0 0.0
  %1306 = vmatmul.mubr.f32.gmra.mrb[0].mxu0 %v550
  %v1307 = vpop.f32.mrb[0].mxu0
  %v1308 = vadd.f32 %v268, %v1307
  %v1309 = vpop.f32.mrb[0].mxu0
  %1310 = vmatprep.mubr.f32.mxu0 0.0
  %1311 = vmatmul.mubr.f32.gmra.mrb[0].mxu0 %v553
  %v1312 = vpop.f32.mrb[0].mxu0
  %v1313 = vadd.f32 %v269, %v1312
  %v1314 = vpop.f32.mrb[0].mxu0
  %1315 = vmatprep.mubr.f32.mxu0 0.0
  %1316 = vmatmul.mubr.f32.gmra.mrb[0].mxu0 %v556
  %v1317 = vpop.f32.mrb[0].mxu0
  %v1318 = vadd.f32 %v270, %v1317
  %v1319 = vpop.f32.mrb[0].mxu0
  %1320 = vmatprep.mubr.f32.mxu0 0.0
  %1321 = vmatmul.mubr.f32.gmra.mrb[0].mxu0 %v559
  %v1322 = vpop.f32.mrb[0].mxu0
  %v1323 = vadd.f32 %v271, %v1322
  %v1324 = vpop.f32.mrb[0].mxu0
  %1325 = vmatprep.mubr.f32.mxu0 0.0
  %1326 = vmatmul.mubr.f32.gmra.mrb[0].mxu0 %v562
  %v1327 = vpop.f32.mrb[0].mxu0
  %v1328 = vadd.f32 %v272, %v1327
  %v1329 = vpop.f32.mrb[0].mxu0
  %1330 = vmatprep.mubr.f32.mxu0 0.0
  %1331 = vmatmul.mubr.f32.gmra.mrb[0].mxu0 %v565
  %v1332 = vpop.f32.mrb[0].mxu0
  %v1333 = vadd.f32 %v273, %v1332
  %v1334 = vpop.f32.mrb[0].mxu0
  %1335 = vmatprep.mubr.f32.mxu0 0.0
  %1336 = vmatmul.mubr.f32.gmra.mrb[0].mxu0 %v568
  %v1337 = vpop.f32.mrb[0].mxu0
  %v1338 = vadd.f32 %v274, %v1337
  %v1339 = vpop.f32.mrb[0].mxu0
  %1340 = vmatprep.mubr.f32.mxu0 0.0
  %1341 = vmatmul.mubr.f32.gmra.mrb[0].mxu0 %v571
  %v1342 = vpop.f32.mrb[0].mxu0
  %v1343 = vadd.f32 %v275, %v1342
  %v1344 = vpop.f32.mrb[0].mxu0
  %1345 = vmatprep.mubr.f32.mxu0 0.0
  %1346 = vmatmul.mubr.f32.gmra.mrb[0].mxu0 %v574
  %v1347 = vpop.f32.mrb[0].mxu0
  %v1348 = vadd.f32 %v276, %v1347
  %v1349 = vpop.f32.mrb[0].mxu0
  %1350 = vmatprep.mubr.f32.mxu0 0.0
  %1351 = vmatmul.mubr.f32.gmra.mrb[0].mxu0 %v577
  %v1352 = vpop.f32.mrb[0].mxu0
  %v1353 = vadd.f32 %v277, %v1352
  %v1354 = vpop.f32.mrb[0].mxu0
  %1355 = vmatprep.mubr.f32.mxu0 0.0
  %1356 = vmatmul.mubr.f32.gmra.mrb[0].mxu0 %v580
  %v1357 = vpop.f32.mrb[0].mxu0
  %v1358 = vadd.f32 %v278, %v1357
  %v1359 = vpop.f32.mrb[0].mxu0
  %1360 = vmatprep.mubr.f32.mxu0 0.0
  %1361 = vmatmul.mubr.f32.gmra.mrb[0].mxu0 %v583
  %v1362 = vpop.f32.mrb[0].mxu0
  %v1363 = vadd.f32 %v279, %v1362
  %v1364 = vpop.f32.mrb[0].mxu0
  %1365 = vmatprep.mubr.f32.mxu0 0.0
  %1366 = vmatmul.mubr.f32.gmra.mrb[0].mxu0 %v586
  %v1367 = vpop.f32.mrb[0].mxu0
  %v1368 = vadd.f32 %v280, %v1367
  %v1369 = vpop.f32.mrb[0].mxu0
  %1370 = vmatprep.mubr.f32.mxu0 0.0
  %1371 = vmatmul.mubr.f32.gmra.mrb[0].mxu0 %v589
  %v1372 = vpop.f32.mrb[0].mxu0
  %v1373 = vadd.f32 %v281, %v1372
  %v1374 = vpop.f32.mrb[0].mxu0
  %1375 = vmatprep.mubr.f32.mxu0 0.0
  %1376 = vmatmul.mubr.f32.gmra.mrb[0].mxu0 %v592
  %v1377 = vpop.f32.mrb[0].mxu0
  %v1378 = vadd.f32 %v282, %v1377
  %v1379 = vpop.f32.mrb[0].mxu0
  %1380 = vmatprep.mubr.f32.mxu0 0.0
  %1381 = vmatmul.mubr.f32.gmra.mrb[0].mxu0 %v595
  %v1382 = vpop.f32.mrb[0].mxu0
  %v1383 = vadd.f32 %v283, %v1382
  %v1384 = vpop.f32.mrb[0].mxu0
  %1385 = vmatprep.mubr.f32.mxu0 0.0
  %1386 = vmatmul.mubr.f32.gmra.mrb[0].mxu0 %v598
  %v1387 = vpop.f32.mrb[0].mxu0
  %v1388 = vadd.f32 %v284, %v1387
  %v1389 = vpop.f32.mrb[0].mxu0
  %1390 = vmatprep.mubr.f32.mxu0 0.0
  %1391 = vmatmul.mubr.f32.gmra.mrb[0].mxu0 %v601
  %v1392 = vpop.f32.mrb[0].mxu0
  %v1393 = vadd.f32 %v285, %v1392
  %v1394 = vpop.f32.mrb[0].mxu0
  %1395 = vmatprep.mubr.f32.mxu0 0.0
  %1396 = vmatmul.mubr.f32.gmra.mrb[0].mxu0 %v604
  %v1397 = vpop.f32.mrb[0].mxu0
  %v1398 = vadd.f32 %v286, %v1397
  %v1399 = vpop.f32.mrb[0].mxu0
  %1400 = vmatprep.mubr.f32.mxu0 0.0
  %1401 = vmatmul.mubr.f32.gmra.mrb[0].mxu0 %v607
  %v1402 = vpop.f32.mrb[0].mxu0
  %v1403 = vadd.f32 %v287, %v1402
  %v1404 = vpop.f32.mrb[0].mxu0
  %1405 = vmatprep.mubr.f32.mxu0 0.0
  %1406 = vmatmul.mubr.f32.gmra.mrb[0].mxu0 %v610
  %v1407 = vpop.f32.mrb[0].mxu0
  %v1408 = vadd.f32 %v288, %v1407
  %v1409 = vpop.f32.mrb[0].mxu0
  %1410 = vmatprep.mubr.f32.mxu0 0.0
  %1411 = vmatmul.mubr.f32.gmra.mrb[0].mxu0 %v613
  %v1412 = vpop.f32.mrb[0].mxu0
  %v1413 = vadd.f32 %v289, %v1412
  %v1414 = vpop.f32.mrb[0].mxu0
  %1415 = vmatprep.mubr.f32.mxu0 0.0
  %1416 = vmatmul.mubr.f32.gmra.mrb[0].mxu0 %v616
  %v1417 = vpop.f32.mrb[0].mxu0
  %v1418 = vadd.f32 %v290, %v1417
  %v1419 = vpop.f32.mrb[0].mxu0
  %1420 = vmatprep.mubr.f32.mxu0 0.0
  %1421 = vmatmul.mubr.f32.gmra.mrb[0].mxu0 %v619
  %v1422 = vpop.f32.mrb[0].mxu0
  %v1423 = vadd.f32 %v291, %v1422
  %v1424 = vpop.f32.mrb[0].mxu0
  %1425 = vmatprep.mubr.f32.mxu0 0.0
  %1426 = vmatmul.mubr.f32.gmra.mrb[0].mxu0 %v622
  %v1427 = vpop.f32.mrb[0].mxu0
  %v1428 = vadd.f32 %v292, %v1427
  %v1429 = vpop.f32.mrb[0].mxu0
  %1430 = vmatprep.mubr.f32.mxu0 0.0
  %1431 = vmatmul.mubr.f32.gmra.mrb[0].mxu0 %v625
  %v1432 = vpop.f32.mrb[0].mxu0
  %v1433 = vadd.f32 %v293, %v1432
  %v1434 = vpop.f32.mrb[0].mxu0
  %1435 = vmatprep.mubr.f32.mxu0 0.0
  %1436 = vmatmul.mubr.f32.gmra.mrb[0].mxu0 %v628
  %v1437 = vpop.f32.mrb[0].mxu0
  %v1438 = vadd.f32 %v294, %v1437
  %v1439 = vpop.f32.mrb[0].mxu0
  %1440 = vmatprep.mubr.f32.mxu0 0.0
  %1441 = vmatmul.mubr.f32.gmra.mrb[0].mxu0 %v631
  %v1442 = vpop.f32.mrb[0].mxu0
  %v1443 = vadd.f32 %v295, %v1442
  %v1444 = vpop.f32.mrb[0].mxu0
  %1445 = vmatprep.mubr.f32.mxu0 0.0
  %1446 = vmatmul.mubr.f32.gmra.mrb[0].mxu0 %v634
  %v1447 = vpop.f32.mrb[0].mxu0
  %v1448 = vadd.f32 %v296, %v1447
  %v1449 = vpop.f32.mrb[0].mxu0
  %1450 = vmatprep.mubr.f32.mxu0 0.0
  %1451 = vmatmul.mubr.f32.gmra.mrb[0].mxu0 %v637
  %v1452 = vpop.f32.mrb[0].mxu0
  %v1453 = vadd.f32 %v297, %v1452
  %v1454 = vpop.f32.mrb[0].mxu0
  %1455 = vmatprep.mubr.f32.mxu0 0.0
  %1456 = vmatmul.mubr.f32.gmra.mrb[0].mxu0 %v640
  %v1457 = vpop.f32.mrb[0].mxu0
  %v1458 = vadd.f32 %v298, %v1457
  %v1459 = vpop.f32.mrb[0].mxu0
  %1460 = vmatprep.mubr.f32.mxu0 0.0
  %1461 = vmatmul.mubr.f32.gmra.mrb[0].mxu0 %v643
  %v1462 = vpop.f32.mrb[0].mxu0
  %v1463 = vadd.f32 %v299, %v1462
  %v1464 = vpop.f32.mrb[0].mxu0
  %1465 = vmatprep.mubr.f32.mxu0 0.0
  %1466 = vmatmul.mubr.f32.gmra.mrb[0].mxu0 %v646
  %v1467 = vpop.f32.mrb[0].mxu0
  %v1468 = vadd.f32 %v300, %v1467
  %v1469 = vpop.f32.mrb[0].mxu0
  %1470 = vmatprep.mubr.f32.mxu0 0.0
  %1471 = vmatmul.mubr.f32.gmra.mrb[0].mxu0 %v649
  %v1472 = vpop.f32.mrb[0].mxu0
  %v1473 = vadd.f32 %v301, %v1472
  %v1474 = vpop.f32.mrb[0].mxu0
  %1475 = vmatprep.mubr.f32.mxu0 0.0
  %1476 = vmatmul.mubr.f32.gmra.mrb[0].mxu0 %v652
  %v1477 = vpop.f32.mrb[0].mxu0
  %v1478 = vadd.f32 %v302, %v1477
  %v1479 = vpop.f32.mrb[0].mxu0
  %1480 = vmatprep.mubr.f32.mxu0 0.0
  %1481 = vmatmul.mubr.f32.gmra.mrb[0].mxu0 %v655
  %v1482 = vpop.f32.mrb[0].mxu0
  %v1483 = vadd.f32 %v303, %v1482
  %v1484 = vpop.f32.mrb[0].mxu0
  %1485 = vmatprep.mubr.f32.mxu0 0.0
  %1486 = vmatmul.mubr.f32.gmra.mrb[0].mxu0 %v658
  %v1487 = vpop.f32.mrb[0].mxu0
  %v1488 = vadd.f32 %v304, %v1487
  %v1489 = vpop.f32.mrb[0].mxu0
  %1490 = vmatprep.mubr.f32.mxu0 0.0
  %1491 = vmatmul.mubr.f32.gmra.mrb[0].mxu0 %v661
  %v1492 = vpop.f32.mrb[0].mxu0
  %v1493 = vadd.f32 %v305, %v1492
  %v1494 = vpop.f32.mrb[0].mxu0
  %1495 = vmatprep.mubr.f32.mxu0 0.0
  %1496 = vmatmul.mubr.f32.gmra.mrb[0].mxu0 %v664
  %v1497 = vpop.f32.mrb[0].mxu0
  %v1498 = vadd.f32 %v306, %v1497
  %v1499 = vpop.f32.mrb[0].mxu0
  %1500 = vmatprep.mubr.f32.mxu0 0.0
  %1501 = vmatmul.mubr.f32.gmra.mrb[0].mxu0 %v667
  %v1502 = vpop.f32.mrb[0].mxu0
  %v1503 = vadd.f32 %v307, %v1502
  %v1504 = vpop.f32.mrb[0].mxu0
  %1505 = vmatprep.mubr.f32.mxu0 0.0
  %1506 = vmatmul.mubr.f32.gmra.mrb[0].mxu0 %v670
  %v1507 = vpop.f32.mrb[0].mxu0
  %v1508 = vadd.f32 %v308, %v1507
  %v1509 = vpop.f32.mrb[0].mxu0
  %1510 = vmatprep.mubr.f32.mxu0 0.0
  %1511 = vmatmul.mubr.f32.gmra.mrb[0].mxu0 %v673
  %v1512 = vpop.f32.mrb[0].mxu0
  %v1513 = vadd.f32 %v309, %v1512
  %v1514 = vpop.f32.mrb[0].mxu0
  %1515 = vmatprep.mubr.f32.mxu0 0.0
  %1516 = vmatmul.mubr.f32.gmra.mrb[0].mxu0 %v676
  %v1517 = vpop.f32.mrb[0].mxu0
  %v1518 = vadd.f32 %v310, %v1517
  %v1519 = vpop.f32.mrb[0].mxu0
  %1520 = vmatprep.mubr.f32.mxu0 0.0
  %1521 = vmatmul.mubr.f32.gmra.mrb[0].mxu0 %v679
  %v1522 = vpop.f32.mrb[0].mxu0
  %v1523 = vadd.f32 %v311, %v1522
  %v1524 = vpop.f32.mrb[0].mxu0
  %1525 = vmatprep.mubr.f32.mxu0 0.0
  %1526 = vmatmul.mubr.f32.gmra.mrb[0].mxu0 %v682
  %v1527 = vpop.f32.mrb[0].mxu0
  %v1528 = vadd.f32 %v312, %v1527
  %v1529 = vpop.f32.mrb[0].mxu0
  %1530 = vmatprep.mubr.f32.mxu0 0.0
  %1531 = vmatmul.mubr.f32.gmra.mrb[0].mxu0 %v685
  %v1532 = vpop.f32.mrb[0].mxu0
  %v1533 = vadd.f32 %v313, %v1532
  %v1534 = vpop.f32.mrb[0].mxu0
  %1535 = vmatprep.mubr.f32.mxu0 0.0
  %1536 = vmatmul.mubr.f32.gmra.mrb[0].mxu0 %v688
  %v1537 = vpop.f32.mrb[0].mxu0
  %v1538 = vadd.f32 %v314, %v1537
  %v1539 = vpop.f32.mrb[0].mxu0
  %1540 = vmatprep.mubr.f32.mxu0 0.0
  %1541 = vmatmul.mubr.f32.gmra.mrb[0].mxu0 %v691
  %v1542 = vpop.f32.mrb[0].mxu0
  %v1543 = vadd.f32 %v315, %v1542
  %v1544 = vpop.f32.mrb[0].mxu0
  %1545 = vmatprep.mubr.f32.mxu0 0.0
  %1546 = vmatmul.mubr.f32.gmra.mrb[0].mxu0 %v694
  %v1547 = vpop.f32.mrb[0].mxu0
  %v1548 = vadd.f32 %v316, %v1547
  %v1549 = vpop.f32.mrb[0].mxu0
  %1550 = vmatprep.mubr.f32.mxu0 0.0
  %1551 = vmatmul.mubr.f32.gmra.mrb[0].mxu0 %v697
  %v1552 = vpop.f32.mrb[0].mxu0
  %v1553 = vadd.f32 %v317, %v1552
  %v1554 = vpop.f32.mrb[0].mxu0
  %1555 = vmatprep.mubr.f32.mxu0 0.0
  %1556 = vmatmul.mubr.f32.gmra.mrb[0].mxu0 %v700
  %v1557 = vpop.f32.mrb[0].mxu0
  %v1558 = vadd.f32 %v318, %v1557
  %v1559 = vpop.f32.mrb[0].mxu0
  %1560 = vmatprep.mubr.f32.mxu0 0.0
  %1561 = vmatmul.mubr.f32.gmra.mrb[0].mxu0 %v703
  %v1562 = vpop.f32.mrb[0].mxu0
  %v1563 = vadd.f32 %v319, %v1562
  %v1564 = vpop.f32.mrb[0].mxu0
  %1565 = vmatprep.mubr.f32.mxu0 0.0
  %1566 = vmatmul.mubr.f32.gmra.mrb[0].mxu0 %v706
  %v1567 = vpop.f32.mrb[0].mxu0
  %v1568 = vadd.f32 %v320, %v1567
  %v1569 = vpop.f32.mrb[0].mxu0
  %1570 = vmatprep.mubr.f32.mxu0 0.0
  %1571 = vmatmul.mubr.f32.gmra.mrb[0].mxu0 %v709
  %v1572 = vpop.f32.mrb[0].mxu0
  %v1573 = vadd.f32 %v321, %v1572
  %v1574 = vpop.f32.mrb[0].mxu0
  %1575 = vmatprep.mubr.f32.mxu0 0.0
  %1576 = vmatmul.mubr.f32.gmra.mrb[0].mxu0 %v712
  %v1577 = vpop.f32.mrb[0].mxu0
  %v1578 = vadd.f32 %v322, %v1577
  %v1579 = vpop.f32.mrb[0].mxu0
  %1580 = vmatprep.mubr.f32.mxu0 0.0
  %1581 = vmatmul.mubr.f32.gmra.mrb[0].mxu0 %v715
  %v1582 = vpop.f32.mrb[0].mxu0
  %v1583 = vadd.f32 %v323, %v1582
  %v1584 = vpop.f32.mrb[0].mxu0
  %1585 = vmatprep.mubr.f32.mxu0 0.0
  %1586 = vmatmul.mubr.f32.gmra.mrb[0].mxu0 %v718
  %v1587 = vpop.f32.mrb[0].mxu0
  %v1588 = vadd.f32 %v324, %v1587
  %v1589 = vpop.f32.mrb[0].mxu0
  %1590 = vmatprep.mubr.f32.mxu0 0.0
  %1591 = vmatmul.mubr.f32.gmra.mrb[0].mxu0 %v721
  %v1592 = vpop.f32.mrb[0].mxu0
  %v1593 = vadd.f32 %v325, %v1592
  %v1594 = vpop.f32.mrb[0].mxu0
  %1595 = vmatprep.mubr.f32.mxu0 0.0
  %1596 = vmatmul.mubr.f32.gmra.mrb[0].mxu0 %v724
  %v1597 = vpop.f32.mrb[0].mxu0
  %v1598 = vadd.f32 %v326, %v1597
  %v1599 = vpop.f32.mrb[0].mxu0
  %1600 = vmatprep.mubr.f32.mxu0 0.0
  %1601 = vmatmul.mubr.f32.gmra.mrb[0].mxu0 %v727
  %v1602 = vpop.f32.mrb[0].mxu0
  %v1603 = vadd.f32 %v327, %v1602
  %v1604 = vpop.f32.mrb[0].mxu0
  %1605 = vmatprep.mubr.f32.mxu0 0.0
  %1606 = vmatmul.mubr.f32.gmra.mrb[0].mxu0 %v730
  %v1607 = vpop.f32.mrb[0].mxu0
  %v1608 = vadd.f32 %v328, %v1607
  %v1609 = vpop.f32.mrb[0].mxu0
  %1610 = vmatprep.mubr.f32.mxu0 0.0
  %1611 = vmatmul.mubr.f32.gmra.mrb[0].mxu0 %v733
  %v1612 = vpop.f32.mrb[0].mxu0
  %v1613 = vadd.f32 %v329, %v1612
  %v1614 = vpop.f32.mrb[0].mxu0
  %1615 = vmatprep.mubr.f32.mxu0 0.0
  %1616 = vmatmul.mubr.f32.gmra.mrb[0].mxu0 %v736
  %v1617 = vpop.f32.mrb[0].mxu0
  %v1618 = vadd.f32 %v330, %v1617
  %v1619 = vpop.f32.mrb[0].mxu0
  %1620 = vmatprep.mubr.f32.mxu0 0.0
  %1621 = vmatmul.mubr.f32.gmra.mrb[0].mxu0 %v739
  %v1622 = vpop.f32.mrb[0].mxu0
  %v1623 = vadd.f32 %v331, %v1622
  %v1624 = vpop.f32.mrb[0].mxu0
  %1625 = vmatprep.mubr.f32.mxu0 0.0
  %1626 = vmatmul.mubr.f32.gmra.mrb[0].mxu0 %v742
  %v1627 = vpop.f32.mrb[0].mxu0
  %v1628 = vadd.f32 %v332, %v1627
  %v1629 = vpop.f32.mrb[0].mxu0
  %1630 = vmatprep.mubr.f32.mxu0 0.0
  %1631 = vmatmul.mubr.f32.gmra.mrb[0].mxu0 %v745
  %v1632 = vpop.f32.mrb[0].mxu0
  %v1633 = vadd.f32 %v333, %v1632
  %v1634 = vpop.f32.mrb[0].mxu0
  %1635 = vmatprep.mubr.f32.mxu0 0.0
  %1636 = vmatmul.mubr.f32.gmra.mrb[0].mxu0 %v748
  %v1637 = vpop.f32.mrb[0].mxu0
  %v1638 = vadd.f32 %v334, %v1637
  %v1639 = vpop.f32.mrb[0].mxu0
  %1640 = vmatprep.mubr.f32.mxu0 0.0
  %1641 = vmatmul.mubr.f32.gmra.mrb[0].mxu0 %v751
  %v1642 = vpop.f32.mrb[0].mxu0
  %v1643 = vadd.f32 %v335, %v1642
  %v1644 = vpop.f32.mrb[0].mxu0
  %1645 = vmatprep.mubr.f32.mxu0 0.0
  %1646 = vmatmul.mubr.f32.gmra.mrb[0].mxu0 %v754
  %v1647 = vpop.f32.mrb[0].mxu0
  %v1648 = vadd.f32 %v336, %v1647
  %v1649 = vpop.f32.mrb[0].mxu0
  %1650 = vmatprep.mubr.f32.mxu0 0.0
  %1651 = vmatmul.mubr.f32.gmra.mrb[0].mxu0 %v757
  %v1652 = vpop.f32.mrb[0].mxu0
  %v1653 = vadd.f32 %v337, %v1652
  %v1654 = vpop.f32.mrb[0].mxu0
  %1655 = vmatprep.mubr.f32.mxu0 0.0
  %1656 = vmatmul.mubr.f32.gmra.mrb[0].mxu0 %v760
  %v1657 = vpop.f32.mrb[0].mxu0
  %v1658 = vadd.f32 %v338, %v1657
  %v1659 = vpop.f32.mrb[0].mxu0
  %1660 = vmatprep.mubr.f32.mxu0 0.0
  %1661 = vmatmul.mubr.f32.gmra.mrb[0].mxu0 %v763
  %v1662 = vpop.f32.mrb[0].mxu0
  %v1663 = vadd.f32 %v339, %v1662
  %v1664 = vpop.f32.mrb[0].mxu0
  %1665 = vmatprep.mubr.f32.mxu0 0.0
  %1666 = vmatmul.mubr.f32.gmra.mrb[0].mxu0 %v766
  %v1667 = vpop.f32.mrb[0].mxu0
  %v1668 = vadd.f32 %v340, %v1667
  %v1669 = vpop.f32.mrb[0].mxu0
  %1670 = vmatprep.mubr.f32.mxu0 0.0
  %1671 = vmatmul.mubr.f32.gmra.mrb[0].mxu0 %v769
  %v1672 = vpop.f32.mrb[0].mxu0
  %v1673 = vadd.f32 %v341, %v1672
  %v1674 = vpop.f32.mrb[0].mxu0
  %1675 = vmatprep.mubr.f32.mxu0 0.0
  %1676 = vmatmul.mubr.f32.gmra.mrb[0].mxu0 %v772
  %v1677 = vpop.f32.mrb[0].mxu0
  %v1678 = vadd.f32 %v342, %v1677
  %v1679 = vpop.f32.mrb[0].mxu0
  %1680 = vmatprep.mubr.f32.mxu0 0.0
  %1681 = vmatmul.mubr.f32.gmra.mrb[0].mxu0 %v775
  %v1682 = vpop.f32.mrb[0].mxu0
  %v1683 = vadd.f32 %v343, %v1682
  %v1684 = vpop.f32.mrb[0].mxu0
  %1685 = vmatprep.mubr.f32.mxu0 0.0
  %1686 = vmatmul.mubr.f32.gmra.mrb[0].mxu0 %v778
  %v1687 = vpop.f32.mrb[0].mxu0
  %v1688 = vadd.f32 %v344, %v1687
  %v1689 = vpop.f32.mrb[0].mxu0
  %1690 = vmatprep.mubr.f32.mxu0 0.0
  %1691 = vmatmul.mubr.f32.gmra.mrb[0].mxu0 %v781
  %v1692 = vpop.f32.mrb[0].mxu0
  %v1693 = vadd.f32 %v345, %v1692
  %v1694 = vpop.f32.mrb[0].mxu0
  %1695 = vmatprep.mubr.f32.mxu0 0.0
  %1696 = vmatmul.mubr.f32.gmra.mrb[0].mxu0 %v784
  %v1697 = vpop.f32.mrb[0].mxu0
  %v1698 = vadd.f32 %v346, %v1697
  %v1699 = vpop.f32.mrb[0].mxu0
  %1700 = vmatprep.mubr.f32.mxu0 0.0
  %1701 = vmatmul.mubr.f32.gmra.mrb[0].mxu0 %v787
  %v1702 = vpop.f32.mrb[0].mxu0
  %v1703 = vadd.f32 %v347, %v1702
  %v1704 = vpop.f32.mrb[0].mxu0
  %1705 = vmatprep.mubr.f32.mxu0 0.0
  %1706 = vmatmul.mubr.f32.gmra.mrb[0].mxu0 %v790
  %v1707 = vpop.f32.mrb[0].mxu0
  %v1708 = vadd.f32 %v348, %v1707
  %v1709 = vpop.f32.mrb[0].mxu0
  %1710 = vmatprep.mubr.f32.mxu0 0.0
  %1711 = vmatmul.mubr.f32.gmra.mrb[0].mxu0 %v793
  %v1712 = vpop.f32.mrb[0].mxu0
  %v1713 = vadd.f32 %v349, %v1712
  %v1714 = vpop.f32.mrb[0].mxu0
  %1715 = vmatprep.mubr.f32.mxu0 0.0
  %1716 = vmatmul.mubr.f32.gmra.mrb[0].mxu0 %v796
  %v1717 = vpop.f32.mrb[0].mxu0
  %v1718 = vadd.f32 %v350, %v1717
  %v1719 = vpop.f32.mrb[0].mxu0
  %1720 = vmatprep.mubr.f32.mxu0 0.0
  %1721 = vmatmul.mubr.f32.gmra.mrb[0].mxu0 %v799
  %v1722 = vpop.f32.mrb[0].mxu0
  %v1723 = vadd.f32 %v351, %v1722
  %v1724 = vpop.f32.mrb[0].mxu0
  %1725 = vmatprep.mubr.f32.mxu0 0.0
  %1726 = vmatmul.mubr.f32.gmra.mrb[0].mxu0 %v802
  %v1727 = vpop.f32.mrb[0].mxu0
  %v1728 = vadd.f32 %v352, %v1727
  %v1729 = vpop.f32.mrb[0].mxu0
  %1730 = vmatprep.mubr.f32.mxu0 0.0
  %1731 = vmatmul.mubr.f32.gmra.mrb[0].mxu0 %v805
  %v1732 = vpop.f32.mrb[0].mxu0
  %v1733 = vadd.f32 %v353, %v1732
  %v1734 = vpop.f32.mrb[0].mxu0
  %1735 = vmatprep.mubr.f32.mxu0 0.0
  %1736 = vmatmul.mubr.f32.gmra.mrb[0].mxu0 %v808
  %v1737 = vpop.f32.mrb[0].mxu0
  %v1738 = vadd.f32 %v354, %v1737
  %v1739 = vpop.f32.mrb[0].mxu0
  %1740 = vmatprep.mubr.f32.mxu0 0.0
  %1741 = vmatmul.mubr.f32.gmra.mrb[0].mxu0 %v811
  %v1742 = vpop.f32.mrb[0].mxu0
  %v1743 = vadd.f32 %v355, %v1742
  %v1744 = vpop.f32.mrb[0].mxu0
  %1745 = vmatprep.mubr.f32.mxu0 0.0
  %1746 = vmatmul.mubr.f32.gmra.mrb[0].mxu0 %v814
  %v1747 = vpop.f32.mrb[0].mxu0
  %v1748 = vadd.f32 %v356, %v1747
  %v1749 = vpop.f32.mrb[0].mxu0
  %1750 = vmatprep.mubr.f32.mxu0 0.0
  %1751 = vmatmul.mubr.f32.gmra.mrb[0].mxu0 %v817
  %v1752 = vpop.f32.mrb[0].mxu0
  %v1753 = vadd.f32 %v357, %v1752
  %v1754 = vpop.f32.mrb[0].mxu0
  %1755 = vmatprep.mubr.f32.mxu0 0.0
  %1756 = vmatmul.mubr.f32.gmra.mrb[0].mxu0 %v820
  %v1757 = vpop.f32.mrb[0].mxu0
  %v1758 = vadd.f32 %v358, %v1757
  %v1759 = vpop.f32.mrb[0].mxu0
  %1760 = vmatprep.mubr.f32.mxu0 0.0
  %1761 = vmatmul.mubr.f32.gmra.mrb[0].mxu0 %v823
  %v1762 = vpop.f32.mrb[0].mxu0
  %v1763 = vadd.f32 %v359, %v1762
  %v1764 = vpop.f32.mrb[0].mxu0
  %1765 = vmatprep.mubr.f32.mxu0 0.0
  %1766 = vmatmul.mubr.f32.gmra.mrb[0].mxu0 %v826
  %v1767 = vpop.f32.mrb[0].mxu0
  %v1768 = vadd.f32 %v360, %v1767
  %v1769 = vpop.f32.mrb[0].mxu0
  %1770 = vmatprep.mubr.f32.mxu0 0.0
  %1771 = vmatmul.mubr.f32.gmra.mrb[0].mxu0 %v829
  %v1772 = vpop.f32.mrb[0].mxu0
  %v1773 = vadd.f32 %v361, %v1772
  %v1774 = vpop.f32.mrb[0].mxu0
  %1775 = vmatprep.mubr.f32.mxu0 0.0
  %1776 = vmatmul.mubr.f32.gmra.mrb[0].mxu0 %v832
  %v1777 = vpop.f32.mrb[0].mxu0
  %v1778 = vadd.f32 %v362, %v1777
  %v1779 = vpop.f32.mrb[0].mxu0
  %1780 = vmatprep.mubr.f32.mxu0 0.0
  %1781 = vmatmul.mubr.f32.gmra.mrb[0].mxu0 %v835
  %v1782 = vpop.f32.mrb[0].mxu0
  %v1783 = vadd.f32 %v363, %v1782
  %v1784 = vpop.f32.mrb[0].mxu0
  %1785 = vmatprep.mubr.f32.mxu0 0.0
  %1786 = vmatmul.mubr.f32.gmra.mrb[0].mxu0 %v838
  %v1787 = vpop.f32.mrb[0].mxu0
  %v1788 = vadd.f32 %v364, %v1787
  %v1789 = vpop.f32.mrb[0].mxu0
  %1790 = vmatprep.mubr.f32.mxu0 0.0
  %1791 = vmatmul.mubr.f32.gmra.mrb[0].mxu0 %v841
  %v1792 = vpop.f32.mrb[0].mxu0
  %v1793 = vadd.f32 %v365, %v1792
  %v1794 = vpop.f32.mrb[0].mxu0
  %1795 = vmatprep.mubr.f32.mxu0 0.0
  %1796 = vmatmul.mubr.f32.gmra.mrb[0].mxu0 %v844
  %v1797 = vpop.f32.mrb[0].mxu0
  %v1798 = vadd.f32 %v366, %v1797
  %v1799 = vpop.f32.mrb[0].mxu0
  %1800 = vmatprep.mubr.f32.mxu0 0.0
  %1801 = vmatmul.mubr.f32.gmra.mrb[0].mxu0 %v847
  %v1802 = vpop.f32.mrb[0].mxu0
  %v1803 = vadd.f32 %v367, %v1802
  %v1804 = vpop.f32.mrb[0].mxu0
  %1805 = vmatprep.mubr.f32.mxu0 0.0
  %1806 = vmatmul.mubr.f32.gmra.mrb[0].mxu0 %v850
  %v1807 = vpop.f32.mrb[0].mxu0
  %v1808 = vadd.f32 %v368, %v1807
  %v1809 = vpop.f32.mrb[0].mxu0
  %1810 = vmatprep.mubr.f32.mxu0 0.0
  %1811 = vmatmul.mubr.f32.gmra.mrb[0].mxu0 %v853
  %v1812 = vpop.f32.mrb[0].mxu0
  %v1813 = vadd.f32 %v369, %v1812
  %v1814 = vpop.f32.mrb[0].mxu0
  %1815 = vmatprep.mubr.f32.mxu0 0.0
  %1816 = vmatmul.mubr.f32.gmra.mrb[0].mxu0 %v856
  %v1817 = vpop.f32.mrb[0].mxu0
  %v1818 = vadd.f32 %v370, %v1817
  %v1819 = vpop.f32.mrb[0].mxu0
  %1820 = vmatprep.mubr.f32.mxu0 0.0
  %1821 = vmatmul.mubr.f32.gmra.mrb[0].mxu0 %v859
  %v1822 = vpop.f32.mrb[0].mxu0
  %v1823 = vadd.f32 %v371, %v1822
  %v1824 = vpop.f32.mrb[0].mxu0
  %1825 = vmatprep.mubr.f32.mxu0 0.0
  %1826 = vmatmul.mubr.f32.gmra.mrb[0].mxu0 %v862
  %v1827 = vpop.f32.mrb[0].mxu0
  %v1828 = vadd.f32 %v372, %v1827
  %v1829 = vpop.f32.mrb[0].mxu0
  %1830 = vmatprep.mubr.f32.mxu0 0.0
  %1831 = vmatmul.mubr.f32.gmra.mrb[0].mxu0 %v865
  %v1832 = vpop.f32.mrb[0].mxu0
  %v1833 = vadd.f32 %v373, %v1832
  %v1834 = vpop.f32.mrb[0].mxu0
  %1835 = vmatprep.mubr.f32.mxu0 0.0
  %1836 = vmatmul.mubr.f32.gmra.mrb[0].mxu0 %v868
  %v1837 = vpop.f32.mrb[0].mxu0
  %v1838 = vadd.f32 %v374, %v1837
  %v1839 = vpop.f32.mrb[0].mxu0
  %1840 = vmatprep.mubr.f32.mxu0 0.0
  %1841 = vmatmul.mubr.f32.gmra.mrb[0].mxu0 %v871
  %v1842 = vpop.f32.mrb[0].mxu0
  %v1843 = vadd.f32 %v375, %v1842
  %v1844 = vpop.f32.mrb[0].mxu0
  %1845 = vmatprep.mubr.f32.mxu0 0.0
  %1846 = vmatmul.mubr.f32.gmra.mrb[0].mxu0 %v874
  %v1847 = vpop.f32.mrb[0].mxu0
  %v1848 = vadd.f32 %v376, %v1847
  %v1849 = vpop.f32.mrb[0].mxu0
  %1850 = vmatprep.mubr.f32.mxu0 0.0
  %1851 = vmatmul.mubr.f32.gmra.mrb[0].mxu0 %v877
  %v1852 = vpop.f32.mrb[0].mxu0
  %v1853 = vadd.f32 %v377, %v1852
  %v1854 = vpop.f32.mrb[0].mxu0
  %1855 = vmatprep.mubr.f32.mxu0 0.0
  %1856 = vmatmul.mubr.f32.gmra.mrb[0].mxu0 %v880
  %v1857 = vpop.f32.mrb[0].mxu0
  %v1858 = vadd.f32 %v378, %v1857
  %v1859 = vpop.f32.mrb[0].mxu0
  %1860 = vmatprep.mubr.f32.mxu0 0.0
  %1861 = vmatmul.mubr.f32.gmra.mrb[0].mxu0 %v883
  %v1862 = vpop.f32.mrb[0].mxu0
  %v1863 = vadd.f32 %v379, %v1862
  %v1864 = vpop.f32.mrb[0].mxu0
  %1865 = vmatprep.mubr.f32.mxu0 0.0
  %1866 = vmatmul.mubr.f32.gmra.mrb[0].mxu0 %v886
  %v1867 = vpop.f32.mrb[0].mxu0
  %v1868 = vadd.f32 %v380, %v1867
  %v1869 = vpop.f32.mrb[0].mxu0
  %1870 = vmatprep.mubr.f32.mxu0 0.0
  %1871 = vmatmul.mubr.f32.gmra.mrb[0].mxu0 %v889
  %v1872 = vpop.f32.mrb[0].mxu0
  %v1873 = vadd.f32 %v381, %v1872
  %v1874 = vpop.f32.mrb[0].mxu0
  %1875 = vmatprep.mubr.f32.mxu0 0.0
  %1876 = vmatmul.mubr.f32.gmra.mrb[0].mxu0 %v892
  %v1877 = vpop.f32.mrb[0].mxu0
  %v1878 = vadd.f32 %v382, %v1877
  %v1879 = vpop.f32.mrb[0].mxu0
  %1880 = vmatprep.mubr.f32.mxu0 0.0
  %1881 = vmatmul.mubr.f32.gmra.mrb[0].mxu0 %v895
  %v1882 = vpop.f32.mrb[0].mxu0
  %v1883 = vadd.f32 %v383, %v1882
  %v1884 = vpop.f32.mrb[0].mxu0
  %1885 = vmatprep.mubr.f32.mxu0 0.0
  %1886 = vmatmul.mubr.f32.gmra.mrb[0].mxu0 %v898
  %v1887 = vpop.f32.mrb[0].mxu0
  %v1888 = vadd.f32 %v384, %v1887
  %v1889 = vpop.f32.mrb[0].mxu0
  %1890 = vmatprep.mubr.f32.mxu0 0.0
  %1891 = vmatmul.mubr.f32.gmra.mrb[0].mxu0 %v901
  %v1892 = vpop.f32.mrb[0].mxu0
  %v1893 = vadd.f32 %v385, %v1892
  %v1894 = vpop.f32.mrb[0].mxu0
  %1895 = vmatprep.mubr.f32.mxu0 0.0
  %1896 = vmatmul.mubr.f32.gmra.mrb[0].mxu0 %v904
  %v1897 = vpop.f32.mrb[0].mxu0
  %v1898 = vadd.f32 %v386, %v1897
  %v1899 = vpop.f32.mrb[0].mxu0
  %1900 = vmatprep.mubr.f32.mxu0 0.0
  %1901 = vmatmul.mubr.f32.gmra.mrb[0].mxu0 %v907
  %v1902 = vpop.f32.mrb[0].mxu0
  %v1903 = vadd.f32 %v387, %v1902
  %v1904 = vpop.f32.mrb[0].mxu0
  %1905 = vmatprep.mubr.f32.mxu0 0.0
  %1906 = vmatmul.mubr.f32.gmra.mrb[0].mxu0 %v910
  %v1907 = vpop.f32.mrb[0].mxu0
  %v1908 = vadd.f32 %v388, %v1907
  %v1909 = vpop.f32.mrb[0].mxu0
  %1910 = vmatprep.mubr.f32.mxu0 0.0
  %1911 = vmatmul.mubr.f32.gmra.mrb[0].mxu0 %v913
  %v1912 = vpop.f32.mrb[0].mxu0
  %v1913 = vadd.f32 %v389, %v1912
  %v1914 = vpop.f32.mrb[0].mxu0
  %1915 = vmatprep.mubr.f32.mxu0 0.0
  %1916 = vmatmul.mubr.f32.gmra.mrb[0].mxu0 %v916
  %v1917 = vpop.f32.mrb[0].mxu0
  %v1918 = vadd.f32 %v390, %v1917
  %v1919 = vpop.f32.mrb[0].mxu0
  %1920 = vmatprep.mubr.f32.mxu0 0.0
  %1921 = vmatmul.mubr.f32.gmra.mrb[0].mxu0 %v919
  %v1922 = vpop.f32.mrb[0].mxu0
  %v1923 = vadd.f32 %v391, %v1922
  %v1924 = vpop.f32.mrb[0].mxu0
  %1925 = vmatprep.mubr.f32.mxu0 0.0
  %1926 = vmatmul.mubr.f32.gmra.mrb[0].mxu0 %v922
  %v1927 = vpop.f32.mrb[0].mxu0
  %v1928 = vadd.f32 %v392, %v1927
  %v1929 = vpop.f32.mrb[0].mxu0
  %1930 = vmatprep.mubr.f32.mxu0 0.0
  %1931 = vmatmul.mubr.f32.gmra.mrb[0].mxu0 %v925
  %v1932 = vpop.f32.mrb[0].mxu0
  %v1933 = vadd.f32 %v393, %v1932
  %v1934 = vpop.f32.mrb[0].mxu0
  %1935 = vmatprep.mubr.f32.mxu0 0.0
  %1936 = vmatmul.mubr.f32.gmra.mrb[0].mxu0 %v928
  %v1937 = vpop.f32.mrb[0].mxu0
  %v1938 = vadd.f32 %v394, %v1937
  %v1939 = vpop.f32.mrb[0].mxu0
  %1940 = vmatprep.mubr.f32.mxu0 0.0
  %1941 = vmatmul.mubr.f32.gmra.mrb[0].mxu0 %v931
  %v1942 = vpop.f32.mrb[0].mxu0
  %v1943 = vadd.f32 %v395, %v1942
  %v1944 = vpop.f32.mrb[0].mxu0
  %1945 = vmatprep.mubr.f32.mxu0 0.0
  %1946 = vmatmul.mubr.f32.gmra.mrb[0].mxu0 %v934
  %v1947 = vpop.f32.mrb[0].mxu0
  %v1948 = vadd.f32 %v396, %v1947
  %v1949 = vpop.f32.mrb[0].mxu0
  %1950 = vmatprep.mubr.f32.mxu0 0.0
  %1951 = vmatmul.mubr.f32.gmra.mrb[0].mxu0 %v937
  %v1952 = vpop.f32.mrb[0].mxu0
  %v1953 = vadd.f32 %v397, %v1952
  %v1954 = vpop.f32.mrb[0].mxu0
  %1955 = vmatprep.mubr.f32.mxu0 0.0
  %1956 = vmatmul.mubr.f32.gmra.mrb[0].mxu0 %v940
  %v1957 = vpop.f32.mrb[0].mxu0
  %v1958 = vadd.f32 %v398, %v1957
  %v1959 = vpop.f32.mrb[0].mxu0
  %1960 = vmatprep.mubr.f32.mxu0 0.0
  %1961 = vmatmul.mubr.f32.gmra.mrb[0].mxu0 %v943
  %v1962 = vpop.f32.mrb[0].mxu0
  %v1963 = vadd.f32 %v399, %v1962
  %v1964 = vpop.f32.mrb[0].mxu0
  %1965 = vmatprep.mubr.f32.mxu0 0.0
  %1966 = vmatmul.mubr.f32.gmra.mrb[0].mxu0 %v946
  %v1967 = vpop.f32.mrb[0].mxu0
  %v1968 = vadd.f32 %v400, %v1967
  %v1969 = vpop.f32.mrb[0].mxu0
  %1970 = vmatprep.mubr.f32.mxu0 0.0
  %1971 = vmatmul.mubr.f32.gmra.mrb[0].mxu0 %v949
  %v1972 = vpop.f32.mrb[0].mxu0
  %v1973 = vadd.f32 %v401, %v1972
  %v1974 = vpop.f32.mrb[0].mxu0
  %1975 = vmatprep.mubr.f32.mxu0 0.0
  %1976 = vmatmul.mubr.f32.gmra.mrb[0].mxu0 %v952
  %v1977 = vpop.f32.mrb[0].mxu0
  %v1978 = vadd.f32 %v402, %v1977
  %v1979 = vpop.f32.mrb[0].mxu0
  %1980 = vmatprep.mubr.f32.mxu0 0.0
  %1981 = vmatmul.mubr.f32.gmra.mrb[0].mxu0 %v955
  %v1982 = vpop.f32.mrb[0].mxu0
  %v1983 = vadd.f32 %v403, %v1982
  %v1984 = vpop.f32.mrb[0].mxu0
  %1985 = vmatprep.mubr.f32.mxu0 0.0
  %1986 = vmatmul.mubr.f32.gmra.mrb[0].mxu0 %v958
  %v1987 = vpop.f32.mrb[0].mxu0
  %v1988 = vadd.f32 %v404, %v1987
  %v1989 = vpop.f32.mrb[0].mxu0
  %1990 = vmatprep.mubr.f32.mxu0 0.0
  %1991 = vmatmul.mubr.f32.gmra.mrb[0].mxu0 %v961
  %v1992 = vpop.f32.mrb[0].mxu0
  %v1993 = vadd.f32 %v405, %v1992
  %v1994 = vpop.f32.mrb[0].mxu0
  %1995 = vmatprep.mubr.f32.mxu0 0.0
  %1996 = vmatmul.mubr.f32.gmra.mrb[0].mxu0 %v964
  %v1997 = vpop.f32.mrb[0].mxu0
  %v1998 = vadd.f32 %v406, %v1997
  %v1999 = vpop.f32.mrb[0].mxu0
  %2000 = vmatprep.mubr.f32.mxu0 0.0
  %2001 = vmatmul.mubr.f32.gmra.mrb[0].mxu0 %v967
  %v2002 = vpop.f32.mrb[0].mxu0
  %v2003 = vadd.f32 %v407, %v2002
  %v2004 = vpop.f32.mrb[0].mxu0
  %2005 = vmatprep.mubr.f32.mxu0 0.0
  %2006 = vmatmul.mubr.f32.gmra.mrb[0].mxu0 %v970
  %v2007 = vpop.f32.mrb[0].mxu0
  %v2008 = vadd.f32 %v408, %v2007
  %v2009 = vpop.f32.mrb[0].mxu0
  %2010 = vmatprep.mubr.f32.mxu0 0.0
  %2011 = vmatmul.mubr.f32.gmra.mrb[0].mxu0 %v973
  %v2012 = vpop.f32.mrb[0].mxu0
  %v2013 = vadd.f32 %v409, %v2012
  %v2014 = vpop.f32.mrb[0].mxu0
  %2015 = vmatprep.mubr.f32.mxu0 0.0
  %2016 = vmatmul.mubr.f32.gmra.mrb[0].mxu0 %v976
  %v2017 = vpop.f32.mrb[0].mxu0
  %v2018 = vadd.f32 %v410, %v2017
  %v2019 = vpop.f32.mrb[0].mxu0
  %2020 = vmatprep.mubr.f32.mxu0 0.0
  %2021 = vmatmul.mubr.f32.gmra.mrb[0].mxu0 %v979
  %v2022 = vpop.f32.mrb[0].mxu0
  %v2023 = vadd.f32 %v411, %v2022
  %v2024 = vpop.f32.mrb[0].mxu0
  %2025 = vmatprep.mubr.f32.mxu0 0.0
  %2026 = vmatmul.mubr.f32.gmra.mrb[0].mxu0 %v982
  %v2027 = vpop.f32.mrb[0].mxu0
  %v2028 = vadd.f32 %v412, %v2027
  %v2029 = vpop.f32.mrb[0].mxu0
  %2030 = vmatprep.mubr.f32.mxu0 0.0
  %2031 = vmatmul.mubr.f32.gmra.mrb[0].mxu0 %v985
  %v2032 = vpop.f32.mrb[0].mxu0
  %v2033 = vadd.f32 %v413, %v2032
  %v2034 = vpop.f32.mrb[0].mxu0
  %2035 = vmatprep.mubr.f32.mxu0 0.0
  %2036 = vmatmul.mubr.f32.gmra.mrb[0].mxu0 %v988
  %v2037 = vpop.f32.mrb[0].mxu0
  %v2038 = vadd.f32 %v414, %v2037
  %v2039 = vpop.f32.mrb[0].mxu0
  %2040 = vmatprep.mubr.f32.mxu0 0.0
  %2041 = vmatmul.mubr.f32.gmra.mrb[0].mxu0 %v991
  %v2042 = vpop.f32.mrb[0].mxu0
  %v2043 = vadd.f32 %v415, %v2042
  %v2044 = vpop.f32.mrb[0].mxu0
  %2045 = vmatprep.mubr.f32.mxu0 0.0
  %2046 = vmatmul.mubr.f32.gmra.mrb[0].mxu0 %v994
  %v2047 = vpop.f32.mrb[0].mxu0
  %v2048 = vadd.f32 %v416, %v2047
  %v2049 = vpop.f32.mrb[0].mxu0
  %2050 = vmatprep.mubr.f32.mxu0 0.0
  %2051 = vmatmul.mubr.f32.gmra.mrb[0].mxu0 %v997
  %v2052 = vpop.f32.mrb[0].mxu0
  %v2053 = vadd.f32 %v417, %v2052
  %v2054 = vpop.f32.mrb[0].mxu0
  %2055 = vmatprep.mubr.f32.mxu0 0.0
  %2056 = vmatmul.mubr.f32.gmra.mrb[0].mxu0 %v1000
  %v2057 = vpop.f32.mrb[0].mxu0
  %v2058 = vadd.f32 %v418, %v2057
  %v2059 = vpop.f32.mrb[0].mxu0
  %2060 = vmatprep.mubr.f32.mxu0 0.0
  %2061 = vmatmul.mubr.f32.gmra.mrb[0].mxu0 %v1003
  %v2062 = vpop.f32.mrb[0].mxu0
  %v2063 = vadd.f32 %v419, %v2062
  %v2064 = vpop.f32.mrb[0].mxu0
  %2065 = vmatprep.mubr.f32.mxu0 0.0
  %2066 = vmatmul.mubr.f32.gmra.mrb[0].mxu0 %v1006
  %v2067 = vpop.f32.mrb[0].mxu0
  %v2068 = vadd.f32 %v420, %v2067
  %v2069 = vpop.f32.mrb[0].mxu0
  %2070 = vmatprep.mubr.f32.mxu0 0.0
  %2071 = vmatmul.mubr.f32.gmra.mrb[0].mxu0 %v1009
  %v2072 = vpop.f32.mrb[0].mxu0
  %v2073 = vadd.f32 %v421, %v2072
  %v2074 = vpop.f32.mrb[0].mxu0
  %2075 = vmatprep.mubr.f32.mxu0 0.0
  %2076 = vmatmul.mubr.f32.gmra.mrb[0].mxu0 %v1012
  %v2077 = vpop.f32.mrb[0].mxu0
  %v2078 = vadd.f32 %v422, %v2077
  %v2079 = vpop.f32.mrb[0].mxu0
  %2080 = vmatprep.mubr.f32.mxu0 0.0
  %2081 = vmatmul.mubr.f32.gmra.mrb[0].mxu0 %v1015
  %v2082 = vpop.f32.mrb[0].mxu0
  %v2083 = vadd.f32 %v423, %v2082
  %v2084 = vpop.f32.mrb[0].mxu0
  %2085 = vmatprep.mubr.f32.mxu0 0.0
  %2086 = vmatmul.mubr.f32.gmra.mrb[0].mxu0 %v1018
  %v2087 = vpop.f32.mrb[0].mxu0
  %v2088 = vadd.f32 %v424, %v2087
  %v2089 = vpop.f32.mrb[0].mxu0
  %2090 = vmatprep.mubr.f32.mxu0 0.0
  %2091 = vmatmul.mubr.f32.gmra.mrb[0].mxu0 %v1021
  %v2092 = vpop.f32.mrb[0].mxu0
  %v2093 = vadd.f32 %v425, %v2092
  %v2094 = vpop.f32.mrb[0].mxu0
  %2095 = vmatprep.mubr.f32.mxu0 0.0
  %2096 = vmatmul.mubr.f32.gmra.mrb[0].mxu0 %v1024
  %v2097 = vpop.f32.mrb[0].mxu0
  %v2098 = vadd.f32 %v426, %v2097
  %v2099 = vpop.f32.mrb[0].mxu0
  %2100 = vmatprep.mubr.f32.mxu0 0.0
  %2101 = vmatmul.mubr.f32.gmra.mrb[0].mxu0 %v1027
  %v2102 = vpop.f32.mrb[0].mxu0
  %v2103 = vadd.f32 %v427, %v2102
  %v2104 = vpop.f32.mrb[0].mxu0
  %2105 = vmatprep.mubr.f32.mxu0 0.0
  %2106 = vmatmul.mubr.f32.gmra.mrb[0].mxu0 %v1030
  %v2107 = vpop.f32.mrb[0].mxu0
  %v2108 = vadd.f32 %v428, %v2107
  %v2109 = vpop.f32.mrb[0].mxu0
  %2110 = vmatprep.mubr.f32.mxu0 0.0
  %2111 = vmatmul.mubr.f32.gmra.mrb[0].mxu0 %v1033
  %v2112 = vpop.f32.mrb[0].mxu0
  %v2113 = vadd.f32 %v429, %v2112
  %v2114 = vpop.f32.mrb[0].mxu0
  %2115 = vmatprep.mubr.f32.mxu0 0.0
  %2116 = vmatmul.mubr.f32.gmra.mrb[0].mxu0 %v1036
  %v2117 = vpop.f32.mrb[0].mxu0
  %v2118 = vadd.f32 %v430, %v2117
  %v2119 = vpop.f32.mrb[0].mxu0
  %2120 = vmatprep.mubr.f32.mxu0 0.0
  %2121 = vmatmul.mubr.f32.gmra.mrb[0].mxu0 %v1039
  %v2122 = vpop.f32.mrb[0].mxu0
  %v2123 = vadd.f32 %v431, %v2122
  %v2124 = vpop.f32.mrb[0].mxu0
  %2125 = vmatprep.mubr.f32.mxu0 0.0
  %2126 = vmatmul.mubr.f32.gmra.mrb[0].mxu0 %v1042
  %v2127 = vpop.f32.mrb[0].mxu0
  %v2128 = vadd.f32 %v432, %v2127
  %v2129 = vpop.f32.mrb[0].mxu0
  %2130 = vmatprep.mubr.f32.mxu0 0.0
  %2131 = vmatmul.mubr.f32.gmra.mrb[0].mxu0 %v1045
  %v2132 = vpop.f32.mrb[0].mxu0
  %v2133 = vadd.f32 %v433, %v2132
  %v2134 = vpop.f32.mrb[0].mxu0
  %2135 = vdwg.mxu0
  %v2136 = vxor.u32 %v1118, 2147483648
  %v2137 = vxor.u32 %v1123, 2147483648
  %v2138 = vxor.u32 %v1128, 2147483648
  %v2139 = vxor.u32 %v1133, 2147483648
  %v2140 = vxor.u32 %v1138, 2147483648
  %v2141 = vxor.u32 %v1143, 2147483648
  %v2142 = vxor.u32 %v1148, 2147483648
  %v2143 = vxor.u32 %v1153, 2147483648
  %v2144 = vxor.u32 %v1158, 2147483648
  %v2145 = vxor.u32 %v1163, 2147483648
  %v2146 = vxor.u32 %v1168, 2147483648
  %v2147 = vxor.u32 %v1173, 2147483648
  %v2148 = vxor.u32 %v1178, 2147483648
  %v2149 = vxor.u32 %v1183, 2147483648
  %v2150 = vxor.u32 %v1188, 2147483648
  %v2151 = vxor.u32 %v1193, 2147483648
  %v2152 = vxor.u32 %v1198, 2147483648
  %v2153 = vxor.u32 %v1203, 2147483648
  %v2154 = vxor.u32 %v1208, 2147483648
  %v2155 = vxor.u32 %v1213, 2147483648
  %v2156 = vxor.u32 %v1218, 2147483648
  %v2157 = vxor.u32 %v1223, 2147483648
  %v2158 = vxor.u32 %v1228, 2147483648
  %v2159 = vxor.u32 %v1233, 2147483648
  %v2160 = vxor.u32 %v1238, 2147483648
  %v2161 = vxor.u32 %v1243, 2147483648
  %v2162 = vxor.u32 %v1248, 2147483648
  %v2163 = vxor.u32 %v1253, 2147483648
  %v2164 = vxor.u32 %v1258, 2147483648
  %v2165 = vxor.u32 %v1263, 2147483648
  %v2166 = vxor.u32 %v1268, 2147483648
  %v2167 = vxor.u32 %v1273, 2147483648
  %v2168 = vxor.u32 %v1278, 2147483648
  %v2169 = vxor.u32 %v1283, 2147483648
  %v2170 = vxor.u32 %v1288, 2147483648
  %v2171 = vxor.u32 %v1293, 2147483648
  %v2172 = vxor.u32 %v1298, 2147483648
  %v2173 = vxor.u32 %v1303, 2147483648
  %v2174 = vxor.u32 %v1308, 2147483648
  %v2175 = vxor.u32 %v1313, 2147483648
  %v2176 = vxor.u32 %v1318, 2147483648
  %v2177 = vxor.u32 %v1323, 2147483648
  %v2178 = vxor.u32 %v1328, 2147483648
  %v2179 = vxor.u32 %v1333, 2147483648
  %v2180 = vxor.u32 %v1338, 2147483648
  %v2181 = vxor.u32 %v1343, 2147483648
  %v2182 = vxor.u32 %v1348, 2147483648
  %v2183 = vxor.u32 %v1353, 2147483648
  %v2184 = vxor.u32 %v1358, 2147483648
  %v2185 = vxor.u32 %v1363, 2147483648
  %v2186 = vxor.u32 %v1368, 2147483648
  %v2187 = vxor.u32 %v1373, 2147483648
  %v2188 = vxor.u32 %v1378, 2147483648
  %v2189 = vxor.u32 %v1383, 2147483648
  %v2190 = vxor.u32 %v1388, 2147483648
  %v2191 = vxor.u32 %v1393, 2147483648
  %v2192 = vxor.u32 %v1398, 2147483648
  %v2193 = vxor.u32 %v1403, 2147483648
  %v2194 = vxor.u32 %v1408, 2147483648
  %v2195 = vxor.u32 %v1413, 2147483648
  %v2196 = vxor.u32 %v1418, 2147483648
  %v2197 = vxor.u32 %v1423, 2147483648
  %v2198 = vxor.u32 %v1428, 2147483648
  %v2199 = vxor.u32 %v1433, 2147483648
  %v2200 = vxor.u32 %v1438, 2147483648
  %v2201 = vxor.u32 %v1443, 2147483648
  %v2202 = vxor.u32 %v1448, 2147483648
  %v2203 = vxor.u32 %v1453, 2147483648
  %v2204 = vxor.u32 %v1458, 2147483648
  %v2205 = vxor.u32 %v1463, 2147483648
  %v2206 = vxor.u32 %v1468, 2147483648
  %v2207 = vxor.u32 %v1473, 2147483648
  %v2208 = vxor.u32 %v1478, 2147483648
  %v2209 = vxor.u32 %v1483, 2147483648
  %v2210 = vxor.u32 %v1488, 2147483648
  %v2211 = vxor.u32 %v1493, 2147483648
  %v2212 = vxor.u32 %v1498, 2147483648
  %v2213 = vxor.u32 %v1503, 2147483648
  %v2214 = vxor.u32 %v1508, 2147483648
  %v2215 = vxor.u32 %v1513, 2147483648
  %v2216 = vxor.u32 %v1518, 2147483648
  %v2217 = vxor.u32 %v1523, 2147483648
  %v2218 = vxor.u32 %v1528, 2147483648
  %v2219 = vxor.u32 %v1533, 2147483648
  %v2220 = vxor.u32 %v1538, 2147483648
  %v2221 = vxor.u32 %v1543, 2147483648
  %v2222 = vxor.u32 %v1548, 2147483648
  %v2223 = vxor.u32 %v1553, 2147483648
  %v2224 = vxor.u32 %v1558, 2147483648
  %v2225 = vxor.u32 %v1563, 2147483648
  %v2226 = vxor.u32 %v1568, 2147483648
  %v2227 = vxor.u32 %v1573, 2147483648
  %v2228 = vxor.u32 %v1578, 2147483648
  %v2229 = vxor.u32 %v1583, 2147483648
  %v2230 = vxor.u32 %v1588, 2147483648
  %v2231 = vxor.u32 %v1593, 2147483648
  %v2232 = vxor.u32 %v1598, 2147483648
  %v2233 = vxor.u32 %v1603, 2147483648
  %v2234 = vxor.u32 %v1608, 2147483648
  %v2235 = vxor.u32 %v1613, 2147483648
  %v2236 = vxor.u32 %v1618, 2147483648
  %v2237 = vxor.u32 %v1623, 2147483648
  %v2238 = vxor.u32 %v1628, 2147483648
  %v2239 = vxor.u32 %v1633, 2147483648
  %v2240 = vxor.u32 %v1638, 2147483648
  %v2241 = vxor.u32 %v1643, 2147483648
  %v2242 = vxor.u32 %v1648, 2147483648
  %v2243 = vxor.u32 %v1653, 2147483648
  %v2244 = vxor.u32 %v1658, 2147483648
  %v2245 = vxor.u32 %v1663, 2147483648
  %v2246 = vxor.u32 %v1668, 2147483648
  %v2247 = vxor.u32 %v1673, 2147483648
  %v2248 = vxor.u32 %v1678, 2147483648
  %v2249 = vxor.u32 %v1683, 2147483648
  %v2250 = vxor.u32 %v1688, 2147483648
  %v2251 = vxor.u32 %v1693, 2147483648
  %v2252 = vxor.u32 %v1698, 2147483648
  %v2253 = vxor.u32 %v1703, 2147483648
  %v2254 = vxor.u32 %v1708, 2147483648
  %v2255 = vxor.u32 %v1713, 2147483648
  %v2256 = vxor.u32 %v1718, 2147483648
  %v2257 = vxor.u32 %v1723, 2147483648
  %v2258 = vxor.u32 %v1728, 2147483648
  %v2259 = vxor.u32 %v1733, 2147483648
  %v2260 = vxor.u32 %v1738, 2147483648
  %v2261 = vxor.u32 %v1743, 2147483648
  %v2262 = vxor.u32 %v1748, 2147483648
  %v2263 = vxor.u32 %v1753, 2147483648
  %v2264 = vxor.u32 %v1758, 2147483648
  %v2265 = vxor.u32 %v1763, 2147483648
  %v2266 = vxor.u32 %v1768, 2147483648
  %v2267 = vxor.u32 %v1773, 2147483648
  %v2268 = vxor.u32 %v1778, 2147483648
  %v2269 = vxor.u32 %v1783, 2147483648
  %v2270 = vxor.u32 %v1788, 2147483648
  %v2271 = vxor.u32 %v1793, 2147483648
  %v2272 = vxor.u32 %v1798, 2147483648
  %v2273 = vxor.u32 %v1803, 2147483648
  %v2274 = vxor.u32 %v1808, 2147483648
  %v2275 = vxor.u32 %v1813, 2147483648
  %v2276 = vxor.u32 %v1818, 2147483648
  %v2277 = vxor.u32 %v1823, 2147483648
  %v2278 = vxor.u32 %v1828, 2147483648
  %v2279 = vxor.u32 %v1833, 2147483648
  %v2280 = vxor.u32 %v1838, 2147483648
  %v2281 = vxor.u32 %v1843, 2147483648
  %v2282 = vxor.u32 %v1848, 2147483648
  %v2283 = vxor.u32 %v1853, 2147483648
  %v2284 = vxor.u32 %v1858, 2147483648
  %v2285 = vxor.u32 %v1863, 2147483648
  %v2286 = vxor.u32 %v1868, 2147483648
  %v2287 = vxor.u32 %v1873, 2147483648
  %v2288 = vxor.u32 %v1878, 2147483648
  %v2289 = vxor.u32 %v1883, 2147483648
  %v2290 = vxor.u32 %v1888, 2147483648
  %v2291 = vxor.u32 %v1893, 2147483648
  %v2292 = vxor.u32 %v1898, 2147483648
  %v2293 = vxor.u32 %v1903, 2147483648
  %v2294 = vxor.u32 %v1908, 2147483648
  %v2295 = vxor.u32 %v1913, 2147483648
  %v2296 = vxor.u32 %v1918, 2147483648
  %v2297 = vxor.u32 %v1923, 2147483648
  %v2298 = vxor.u32 %v1928, 2147483648
  %v2299 = vxor.u32 %v1933, 2147483648
  %v2300 = vxor.u32 %v1938, 2147483648
  %v2301 = vxor.u32 %v1943, 2147483648
  %v2302 = vxor.u32 %v1948, 2147483648
  %v2303 = vxor.u32 %v1953, 2147483648
  %v2304 = vxor.u32 %v1958, 2147483648
  %v2305 = vxor.u32 %v1963, 2147483648
  %v2306 = vxor.u32 %v1968, 2147483648
  %v2307 = vxor.u32 %v1973, 2147483648
  %v2308 = vxor.u32 %v1978, 2147483648
  %v2309 = vxor.u32 %v1983, 2147483648
  %v2310 = vxor.u32 %v1988, 2147483648
  %v2311 = vxor.u32 %v1993, 2147483648
  %v2312 = vxor.u32 %v1998, 2147483648
  %v2313 = vxor.u32 %v2003, 2147483648
  %v2314 = vxor.u32 %v2008, 2147483648
  %v2315 = vxor.u32 %v2013, 2147483648
  %v2316 = vxor.u32 %v2018, 2147483648
  %v2317 = vxor.u32 %v2023, 2147483648
  %v2318 = vxor.u32 %v2028, 2147483648
  %v2319 = vxor.u32 %v2033, 2147483648
  %v2320 = vxor.u32 %v2038, 2147483648
  %v2321 = vxor.u32 %v2043, 2147483648
  %v2322 = vxor.u32 %v2048, 2147483648
  %v2323 = vxor.u32 %v2053, 2147483648
  %v2324 = vxor.u32 %v2058, 2147483648
  %v2325 = vxor.u32 %v2063, 2147483648
  %v2326 = vxor.u32 %v2068, 2147483648
  %v2327 = vxor.u32 %v2073, 2147483648
  %v2328 = vxor.u32 %v2078, 2147483648
  %v2329 = vxor.u32 %v2083, 2147483648
  %v2330 = vxor.u32 %v2088, 2147483648
  %v2331 = vxor.u32 %v2093, 2147483648
  %v2332 = vxor.u32 %v2098, 2147483648
  %v2333 = vxor.u32 %v2103, 2147483648
  %v2334 = vxor.u32 %v2108, 2147483648
  %v2335 = vxor.u32 %v2113, 2147483648
  %v2336 = vxor.u32 %v2118, 2147483648
  %v2337 = vxor.u32 %v2123, 2147483648
  %v2338 = vxor.u32 %v2128, 2147483648
  %v2339 = vxor.u32 %v2133, 2147483648
  %v2340 = vmul.f32 %v2136, 1.442695
  %v2341 = vpow.pop %v2340
  %v2342 = vmul.f32 %v2137, 1.442695
  %v2343 = vpow.pop %v2342
  %v2344 = vmul.f32 %v2138, 1.442695
  %v2345 = vpow.pop %v2344
  %v2346 = vmul.f32 %v2139, 1.442695
  %v2347 = vpow.pop %v2346
  %v2348 = vmul.f32 %v2140, 1.442695
  %v2349 = vpow.pop %v2348
  %v2350 = vmul.f32 %v2141, 1.442695
  %v2351 = vpow.pop %v2350
  %v2352 = vmul.f32 %v2142, 1.442695
  %v2353 = vpow.pop %v2352
  %v2354 = vmul.f32 %v2143, 1.442695
  %v2355 = vpow.pop %v2354
  %v2356 = vmul.f32 %v2144, 1.442695
  %v2357 = vpow.pop %v2356
  %v2358 = vmul.f32 %v2145, 1.442695
  %v2359 = vpow.pop %v2358
  %v2360 = vmul.f32 %v2146, 1.442695
  %v2361 = vpow.pop %v2360
  %v2362 = vmul.f32 %v2147, 1.442695
  %v2363 = vpow.pop %v2362
  %v2364 = vmul.f32 %v2148, 1.442695
  %v2365 = vpow.pop %v2364
  %v2366 = vmul.f32 %v2149, 1.442695
  %v2367 = vpow.pop %v2366
  %v2368 = vmul.f32 %v2150, 1.442695
  %v2369 = vpow.pop %v2368
  %v2370 = vmul.f32 %v2151, 1.442695
  %v2371 = vpow.pop %v2370
  %v2372 = vmul.f32 %v2152, 1.442695
  %v2373 = vpow.pop %v2372
  %v2374 = vmul.f32 %v2153, 1.442695
  %v2375 = vpow.pop %v2374
  %v2376 = vmul.f32 %v2154, 1.442695
  %v2377 = vpow.pop %v2376
  %v2378 = vmul.f32 %v2155, 1.442695
  %v2379 = vpow.pop %v2378
  %v2380 = vmul.f32 %v2156, 1.442695
  %v2381 = vpow.pop %v2380
  %v2382 = vmul.f32 %v2157, 1.442695
  %v2383 = vpow.pop %v2382
  %v2384 = vmul.f32 %v2158, 1.442695
  %v2385 = vpow.pop %v2384
  %v2386 = vmul.f32 %v2159, 1.442695
  %v2387 = vpow.pop %v2386
  %v2388 = vmul.f32 %v2160, 1.442695
  %v2389 = vpow.pop %v2388
  %v2390 = vmul.f32 %v2161, 1.442695
  %v2391 = vpow.pop %v2390
  %v2392 = vmul.f32 %v2162, 1.442695
  %v2393 = vpow.pop %v2392
  %v2394 = vmul.f32 %v2163, 1.442695
  %v2395 = vpow.pop %v2394
  %v2396 = vmul.f32 %v2164, 1.442695
  %v2397 = vpow.pop %v2396
  %v2398 = vmul.f32 %v2165, 1.442695
  %v2399 = vpow.pop %v2398
  %v2400 = vmul.f32 %v2166, 1.442695
  %v2401 = vpow.pop %v2400
  %v2402 = vmul.f32 %v2167, 1.442695
  %v2403 = vpow.pop %v2402
  %v2404 = vmul.f32 %v2168, 1.442695
  %v2405 = vpow.pop %v2404
  %v2406 = vmul.f32 %v2169, 1.442695
  %v2407 = vpow.pop %v2406
  %v2408 = vmul.f32 %v2170, 1.442695
  %v2409 = vpow.pop %v2408
  %v2410 = vmul.f32 %v2171, 1.442695
  %v2411 = vpow.pop %v2410
  %v2412 = vmul.f32 %v2172, 1.442695
  %v2413 = vpow.pop %v2412
  %v2414 = vmul.f32 %v2173, 1.442695
  %v2415 = vpow.pop %v2414
  %v2416 = vmul.f32 %v2174, 1.442695
  %v2417 = vpow.pop %v2416
  %v2418 = vmul.f32 %v2175, 1.442695
  %v2419 = vpow.pop %v2418
  %v2420 = vmul.f32 %v2176, 1.442695
  %v2421 = vpow.pop %v2420
  %v2422 = vmul.f32 %v2177, 1.442695
  %v2423 = vpow.pop %v2422
  %v2424 = vmul.f32 %v2178, 1.442695
  %v2425 = vpow.pop %v2424
  %v2426 = vmul.f32 %v2179, 1.442695
  %v2427 = vpow.pop %v2426
  %v2428 = vmul.f32 %v2180, 1.442695
  %v2429 = vpow.pop %v2428
  %v2430 = vmul.f32 %v2181, 1.442695
  %v2431 = vpow.pop %v2430
  %v2432 = vmul.f32 %v2182, 1.442695
  %v2433 = vpow.pop %v2432
  %v2434 = vmul.f32 %v2183, 1.442695
  %v2435 = vpow.pop %v2434
  %v2436 = vmul.f32 %v2184, 1.442695
  %v2437 = vpow.pop %v2436
  %v2438 = vmul.f32 %v2185, 1.442695
  %v2439 = vpow.pop %v2438
  %v2440 = vmul.f32 %v2186, 1.442695
  %v2441 = vpow.pop %v2440
  %v2442 = vmul.f32 %v2187, 1.442695
  %v2443 = vpow.pop %v2442
  %v2444 = vmul.f32 %v2188, 1.442695
  %v2445 = vpow.pop %v2444
  %v2446 = vmul.f32 %v2189, 1.442695
  %v2447 = vpow.pop %v2446
  %v2448 = vmul.f32 %v2190, 1.442695
  %v2449 = vpow.pop %v2448
  %v2450 = vmul.f32 %v2191, 1.442695
  %v2451 = vpow.pop %v2450
  %v2452 = vmul.f32 %v2192, 1.442695
  %v2453 = vpow.pop %v2452
  %v2454 = vmul.f32 %v2193, 1.442695
  %v2455 = vpow.pop %v2454
  %v2456 = vmul.f32 %v2194, 1.442695
  %v2457 = vpow.pop %v2456
  %v2458 = vmul.f32 %v2195, 1.442695
  %v2459 = vpow.pop %v2458
  %v2460 = vmul.f32 %v2196, 1.442695
  %v2461 = vpow.pop %v2460
  %v2462 = vmul.f32 %v2197, 1.442695
  %v2463 = vpow.pop %v2462
  %v2464 = vmul.f32 %v2198, 1.442695
  %v2465 = vpow.pop %v2464
  %v2466 = vmul.f32 %v2199, 1.442695
  %v2467 = vpow.pop %v2466
  %v2468 = vmul.f32 %v2200, 1.442695
  %v2469 = vpow.pop %v2468
  %v2470 = vmul.f32 %v2201, 1.442695
  %v2471 = vpow.pop %v2470
  %v2472 = vmul.f32 %v2202, 1.442695
  %v2473 = vpow.pop %v2472
  %v2474 = vmul.f32 %v2203, 1.442695
  %v2475 = vpow.pop %v2474
  %v2476 = vmul.f32 %v2204, 1.442695
  %v2477 = vpow.pop %v2476
  %v2478 = vmul.f32 %v2205, 1.442695
  %v2479 = vpow.pop %v2478
  %v2480 = vmul.f32 %v2206, 1.442695
  %v2481 = vpow.pop %v2480
  %v2482 = vmul.f32 %v2207, 1.442695
  %v2483 = vpow.pop %v2482
  %v2484 = vmul.f32 %v2208, 1.442695
  %v2485 = vpow.pop %v2484
  %v2486 = vmul.f32 %v2209, 1.442695
  %v2487 = vpow.pop %v2486
  %v2488 = vmul.f32 %v2210, 1.442695
  %v2489 = vpow.pop %v2488
  %v2490 = vmul.f32 %v2211, 1.442695
  %v2491 = vpow.pop %v2490
  %v2492 = vmul.f32 %v2212, 1.442695
  %v2493 = vpow.pop %v2492
  %v2494 = vmul.f32 %v2213, 1.442695
  %v2495 = vpow.pop %v2494
  %v2496 = vmul.f32 %v2214, 1.442695
  %v2497 = vpow.pop %v2496
  %v2498 = vmul.f32 %v2215, 1.442695
  %v2499 = vpow.pop %v2498
  %v2500 = vmul.f32 %v2216, 1.442695
  %v2501 = vpow.pop %v2500
  %v2502 = vmul.f32 %v2217, 1.442695
  %v2503 = vpow.pop %v2502
  %v2504 = vmul.f32 %v2218, 1.442695
  %v2505 = vpow.pop %v2504
  %v2506 = vmul.f32 %v2219, 1.442695
  %v2507 = vpow.pop %v2506
  %v2508 = vmul.f32 %v2220, 1.442695
  %v2509 = vpow.pop %v2508
  %v2510 = vmul.f32 %v2221, 1.442695
  %v2511 = vpow.pop %v2510
  %v2512 = vmul.f32 %v2222, 1.442695
  %v2513 = vpow.pop %v2512
  %v2514 = vmul.f32 %v2223, 1.442695
  %v2515 = vpow.pop %v2514
  %v2516 = vmul.f32 %v2224, 1.442695
  %v2517 = vpow.pop %v2516
  %v2518 = vmul.f32 %v2225, 1.442695
  %v2519 = vpow.pop %v2518
  %v2520 = vmul.f32 %v2226, 1.442695
  %v2521 = vpow.pop %v2520
  %v2522 = vmul.f32 %v2227, 1.442695
  %v2523 = vpow.pop %v2522
  %v2524 = vmul.f32 %v2228, 1.442695
  %v2525 = vpow.pop %v2524
  %v2526 = vmul.f32 %v2229, 1.442695
  %v2527 = vpow.pop %v2526
  %v2528 = vmul.f32 %v2230, 1.442695
  %v2529 = vpow.pop %v2528
  %v2530 = vmul.f32 %v2231, 1.442695
  %v2531 = vpow.pop %v2530
  %v2532 = vmul.f32 %v2232, 1.442695
  %v2533 = vpow.pop %v2532
  %v2534 = vmul.f32 %v2233, 1.442695
  %v2535 = vpow.pop %v2534
  %v2536 = vmul.f32 %v2234, 1.442695
  %v2537 = vpow.pop %v2536
  %v2538 = vmul.f32 %v2235, 1.442695
  %v2539 = vpow.pop %v2538
  %v2540 = vmul.f32 %v2236, 1.442695
  %v2541 = vpow.pop %v2540
  %v2542 = vmul.f32 %v2237, 1.442695
  %v2543 = vpow.pop %v2542
  %v2544 = vmul.f32 %v2238, 1.442695
  %v2545 = vpow.pop %v2544
  %v2546 = vmul.f32 %v2239, 1.442695
  %v2547 = vpow.pop %v2546
  %v2548 = vmul.f32 %v2240, 1.442695
  %v2549 = vpow.pop %v2548
  %v2550 = vmul.f32 %v2241, 1.442695
  %v2551 = vpow.pop %v2550
  %v2552 = vmul.f32 %v2242, 1.442695
  %v2553 = vpow.pop %v2552
  %v2554 = vmul.f32 %v2243, 1.442695
  %v2555 = vpow.pop %v2554
  %v2556 = vmul.f32 %v2244, 1.442695
  %v2557 = vpow.pop %v2556
  %v2558 = vmul.f32 %v2245, 1.442695
  %v2559 = vpow.pop %v2558
  %v2560 = vmul.f32 %v2246, 1.442695
  %v2561 = vpow.pop %v2560
  %v2562 = vmul.f32 %v2247, 1.442695
  %v2563 = vpow.pop %v2562
  %v2564 = vmul.f32 %v2248, 1.442695
  %v2565 = vpow.pop %v2564
  %v2566 = vmul.f32 %v2249, 1.442695
  %v2567 = vpow.pop %v2566
  %v2568 = vmul.f32 %v2250, 1.442695
  %v2569 = vpow.pop %v2568
  %v2570 = vmul.f32 %v2251, 1.442695
  %v2571 = vpow.pop %v2570
  %v2572 = vmul.f32 %v2252, 1.442695
  %v2573 = vpow.pop %v2572
  %v2574 = vmul.f32 %v2253, 1.442695
  %v2575 = vpow.pop %v2574
  %v2576 = vmul.f32 %v2254, 1.442695
  %v2577 = vpow.pop %v2576
  %v2578 = vmul.f32 %v2255, 1.442695
  %v2579 = vpow.pop %v2578
  %v2580 = vmul.f32 %v2256, 1.442695
  %v2581 = vpow.pop %v2580
  %v2582 = vmul.f32 %v2257, 1.442695
  %v2583 = vpow.pop %v2582
  %v2584 = vmul.f32 %v2258, 1.442695
  %v2585 = vpow.pop %v2584
  %v2586 = vmul.f32 %v2259, 1.442695
  %v2587 = vpow.pop %v2586
  %v2588 = vmul.f32 %v2260, 1.442695
  %v2589 = vpow.pop %v2588
  %v2590 = vmul.f32 %v2261, 1.442695
  %v2591 = vpow.pop %v2590
  %v2592 = vmul.f32 %v2262, 1.442695
  %v2593 = vpow.pop %v2592
  %v2594 = vmul.f32 %v2263, 1.442695
  %v2595 = vpow.pop %v2594
  %v2596 = vmul.f32 %v2264, 1.442695
  %v2597 = vpow.pop %v2596
  %v2598 = vmul.f32 %v2265, 1.442695
  %v2599 = vpow.pop %v2598
  %v2600 = vmul.f32 %v2266, 1.442695
  %v2601 = vpow.pop %v2600
  %v2602 = vmul.f32 %v2267, 1.442695
  %v2603 = vpow.pop %v2602
  %v2604 = vmul.f32 %v2268, 1.442695
  %v2605 = vpow.pop %v2604
  %v2606 = vmul.f32 %v2269, 1.442695
  %v2607 = vpow.pop %v2606
  %v2608 = vmul.f32 %v2270, 1.442695
  %v2609 = vpow.pop %v2608
  %v2610 = vmul.f32 %v2271, 1.442695
  %v2611 = vpow.pop %v2610
  %v2612 = vmul.f32 %v2272, 1.442695
  %v2613 = vpow.pop %v2612
  %v2614 = vmul.f32 %v2273, 1.442695
  %v2615 = vpow.pop %v2614
  %v2616 = vmul.f32 %v2274, 1.442695
  %v2617 = vpow.pop %v2616
  %v2618 = vmul.f32 %v2275, 1.442695
  %v2619 = vpow.pop %v2618
  %v2620 = vmul.f32 %v2276, 1.442695
  %v2621 = vpow.pop %v2620
  %v2622 = vmul.f32 %v2277, 1.442695
  %v2623 = vpow.pop %v2622
  %v2624 = vmul.f32 %v2278, 1.442695
  %v2625 = vpow.pop %v2624
  %v2626 = vmul.f32 %v2279, 1.442695
  %v2627 = vpow.pop %v2626
  %v2628 = vmul.f32 %v2280, 1.442695
  %v2629 = vpow.pop %v2628
  %v2630 = vmul.f32 %v2281, 1.442695
  %v2631 = vpow.pop %v2630
  %v2632 = vmul.f32 %v2282, 1.442695
  %v2633 = vpow.pop %v2632
  %v2634 = vmul.f32 %v2283, 1.442695
  %v2635 = vpow.pop %v2634
  %v2636 = vmul.f32 %v2284, 1.442695
  %v2637 = vpow.pop %v2636
  %v2638 = vmul.f32 %v2285, 1.442695
  %v2639 = vpow.pop %v2638
  %v2640 = vmul.f32 %v2286, 1.442695
  %v2641 = vpow.pop %v2640
  %v2642 = vmul.f32 %v2287, 1.442695
  %v2643 = vpow.pop %v2642
  %v2644 = vmul.f32 %v2288, 1.442695
  %v2645 = vpow.pop %v2644
  %v2646 = vmul.f32 %v2289, 1.442695
  %v2647 = vpow.pop %v2646
  %v2648 = vmul.f32 %v2290, 1.442695
  %v2649 = vpow.pop %v2648
  %v2650 = vmul.f32 %v2291, 1.442695
  %v2651 = vpow.pop %v2650
  %v2652 = vmul.f32 %v2292, 1.442695
  %v2653 = vpow.pop %v2652
  %v2654 = vmul.f32 %v2293, 1.442695
  %v2655 = vpow.pop %v2654
  %v2656 = vmul.f32 %v2294, 1.442695
  %v2657 = vpow.pop %v2656
  %v2658 = vmul.f32 %v2295, 1.442695
  %v2659 = vpow.pop %v2658
  %v2660 = vmul.f32 %v2296, 1.442695
  %v2661 = vpow.pop %v2660
  %v2662 = vmul.f32 %v2297, 1.442695
  %v2663 = vpow.pop %v2662
  %v2664 = vmul.f32 %v2298, 1.442695
  %v2665 = vpow.pop %v2664
  %v2666 = vmul.f32 %v2299, 1.442695
  %v2667 = vpow.pop %v2666
  %v2668 = vmul.f32 %v2300, 1.442695
  %v2669 = vpow.pop %v2668
  %v2670 = vmul.f32 %v2301, 1.442695
  %v2671 = vpow.pop %v2670
  %v2672 = vmul.f32 %v2302, 1.442695
  %v2673 = vpow.pop %v2672
  %v2674 = vmul.f32 %v2303, 1.442695
  %v2675 = vpow.pop %v2674
  %v2676 = vmul.f32 %v2304, 1.442695
  %v2677 = vpow.pop %v2676
  %v2678 = vmul.f32 %v2305, 1.442695
  %v2679 = vpow.pop %v2678
  %v2680 = vmul.f32 %v2306, 1.442695
  %v2681 = vpow.pop %v2680
  %v2682 = vmul.f32 %v2307, 1.442695
  %v2683 = vpow.pop %v2682
  %v2684 = vmul.f32 %v2308, 1.442695
  %v2685 = vpow.pop %v2684
  %v2686 = vmul.f32 %v2309, 1.442695
  %v2687 = vpow.pop %v2686
  %v2688 = vmul.f32 %v2310, 1.442695
  %v2689 = vpow.pop %v2688
  %v2690 = vmul.f32 %v2311, 1.442695
  %v2691 = vpow.pop %v2690
  %v2692 = vmul.f32 %v2312, 1.442695
  %v2693 = vpow.pop %v2692
  %v2694 = vmul.f32 %v2313, 1.442695
  %v2695 = vpow.pop %v2694
  %v2696 = vmul.f32 %v2314, 1.442695
  %v2697 = vpow.pop %v2696
  %v2698 = vmul.f32 %v2315, 1.442695
  %v2699 = vpow.pop %v2698
  %v2700 = vmul.f32 %v2316, 1.442695
  %v2701 = vpow.pop %v2700
  %v2702 = vmul.f32 %v2317, 1.442695
  %v2703 = vpow.pop %v2702
  %v2704 = vmul.f32 %v2318, 1.442695
  %v2705 = vpow.pop %v2704
  %v2706 = vmul.f32 %v2319, 1.442695
  %v2707 = vpow.pop %v2706
  %v2708 = vmul.f32 %v2320, 1.442695
  %v2709 = vpow.pop %v2708
  %v2710 = vmul.f32 %v2321, 1.442695
  %v2711 = vpow.pop %v2710
  %v2712 = vmul.f32 %v2322, 1.442695
  %v2713 = vpow.pop %v2712
  %v2714 = vmul.f32 %v2323, 1.442695
  %v2715 = vpow.pop %v2714
  %v2716 = vmul.f32 %v2324, 1.442695
  %v2717 = vpow.pop %v2716
  %v2718 = vmul.f32 %v2325, 1.442695
  %v2719 = vpow.pop %v2718
  %v2720 = vmul.f32 %v2326, 1.442695
  %v2721 = vpow.pop %v2720
  %v2722 = vmul.f32 %v2327, 1.442695
  %v2723 = vpow.pop %v2722
  %v2724 = vmul.f32 %v2328, 1.442695
  %v2725 = vpow.pop %v2724
  %v2726 = vmul.f32 %v2329, 1.442695
  %v2727 = vpow.pop %v2726
  %v2728 = vmul.f32 %v2330, 1.442695
  %v2729 = vpow.pop %v2728
  %v2730 = vmul.f32 %v2331, 1.442695
  %v2731 = vpow.pop %v2730
  %v2732 = vmul.f32 %v2332, 1.442695
  %v2733 = vpow.pop %v2732
  %v2734 = vmul.f32 %v2333, 1.442695
  %v2735 = vpow.pop %v2734
  %v2736 = vmul.f32 %v2334, 1.442695
  %v2737 = vpow.pop %v2736
  %v2738 = vmul.f32 %v2335, 1.442695
  %v2739 = vpow.pop %v2738
  %v2740 = vmul.f32 %v2336, 1.442695
  %v2741 = vpow.pop %v2740
  %v2742 = vmul.f32 %v2337, 1.442695
  %v2743 = vpow.pop %v2742
  %v2744 = vmul.f32 %v2338, 1.442695
  %v2745 = vpow.pop %v2744
  %v2746 = vmul.f32 %v2339, 1.442695
  %v2747 = vpow.pop %v2746
  %v2748 = vadd.f32 %v2341, 1.0
  %v2749 = vadd.f32 %v2343, 1.0
  %v2750 = vadd.f32 %v2345, 1.0
  %v2751 = vadd.f32 %v2347, 1.0
  %v2752 = vadd.f32 %v2349, 1.0
  %v2753 = vadd.f32 %v2351, 1.0
  %v2754 = vadd.f32 %v2353, 1.0
  %v2755 = vadd.f32 %v2355, 1.0
  %v2756 = vadd.f32 %v2357, 1.0
  %v2757 = vadd.f32 %v2359, 1.0
  %v2758 = vadd.f32 %v2361, 1.0
  %v2759 = vadd.f32 %v2363, 1.0
  %v2760 = vadd.f32 %v2365, 1.0
  %v2761 = vadd.f32 %v2367, 1.0
  %v2762 = vadd.f32 %v2369, 1.0
  %v2763 = vadd.f32 %v2371, 1.0
  %v2764 = vadd.f32 %v2373, 1.0
  %v2765 = vadd.f32 %v2375, 1.0
  %v2766 = vadd.f32 %v2377, 1.0
  %v2767 = vadd.f32 %v2379, 1.0
  %v2768 = vadd.f32 %v2381, 1.0
  %v2769 = vadd.f32 %v2383, 1.0
  %v2770 = vadd.f32 %v2385, 1.0
  %v2771 = vadd.f32 %v2387, 1.0
  %v2772 = vadd.f32 %v2389, 1.0
  %v2773 = vadd.f32 %v2391, 1.0
  %v2774 = vadd.f32 %v2393, 1.0
  %v2775 = vadd.f32 %v2395, 1.0
  %v2776 = vadd.f32 %v2397, 1.0
  %v2777 = vadd.f32 %v2399, 1.0
  %v2778 = vadd.f32 %v2401, 1.0
  %v2779 = vadd.f32 %v2403, 1.0
  %v2780 = vadd.f32 %v2405, 1.0
  %v2781 = vadd.f32 %v2407, 1.0
  %v2782 = vadd.f32 %v2409, 1.0
  %v2783 = vadd.f32 %v2411, 1.0
  %v2784 = vadd.f32 %v2413, 1.0
  %v2785 = vadd.f32 %v2415, 1.0
  %v2786 = vadd.f32 %v2417, 1.0
  %v2787 = vadd.f32 %v2419, 1.0
  %v2788 = vadd.f32 %v2421, 1.0
  %v2789 = vadd.f32 %v2423, 1.0
  %v2790 = vadd.f32 %v2425, 1.0
  %v2791 = vadd.f32 %v2427, 1.0
  %v2792 = vadd.f32 %v2429, 1.0
  %v2793 = vadd.f32 %v2431, 1.0
  %v2794 = vadd.f32 %v2433, 1.0
  %v2795 = vadd.f32 %v2435, 1.0
  %v2796 = vadd.f32 %v2437, 1.0
  %v2797 = vadd.f32 %v2439, 1.0
  %v2798 = vadd.f32 %v2441, 1.0
  %v2799 = vadd.f32 %v2443, 1.0
  %v2800 = vadd.f32 %v2445, 1.0
  %v2801 = vadd.f32 %v2447, 1.0
  %v2802 = vadd.f32 %v2449, 1.0
  %v2803 = vadd.f32 %v2451, 1.0
  %v2804 = vadd.f32 %v2453, 1.0
  %v2805 = vadd.f32 %v2455, 1.0
  %v2806 = vadd.f32 %v2457, 1.0
  %v2807 = vadd.f32 %v2459, 1.0
  %v2808 = vadd.f32 %v2461, 1.0
  %v2809 = vadd.f32 %v2463, 1.0
  %v2810 = vadd.f32 %v2465, 1.0
  %v2811 = vadd.f32 %v2467, 1.0
  %v2812 = vadd.f32 %v2469, 1.0
  %v2813 = vadd.f32 %v2471, 1.0
  %v2814 = vadd.f32 %v2473, 1.0
  %v2815 = vadd.f32 %v2475, 1.0
  %v2816 = vadd.f32 %v2477, 1.0
  %v2817 = vadd.f32 %v2479, 1.0
  %v2818 = vadd.f32 %v2481, 1.0
  %v2819 = vadd.f32 %v2483, 1.0
  %v2820 = vadd.f32 %v2485, 1.0
  %v2821 = vadd.f32 %v2487, 1.0
  %v2822 = vadd.f32 %v2489, 1.0
  %v2823 = vadd.f32 %v2491, 1.0
  %v2824 = vadd.f32 %v2493, 1.0
  %v2825 = vadd.f32 %v2495, 1.0
  %v2826 = vadd.f32 %v2497, 1.0
  %v2827 = vadd.f32 %v2499, 1.0
  %v2828 = vadd.f32 %v2501, 1.0
  %v2829 = vadd.f32 %v2503, 1.0
  %v2830 = vadd.f32 %v2505, 1.0
  %v2831 = vadd.f32 %v2507, 1.0
  %v2832 = vadd.f32 %v2509, 1.0
  %v2833 = vadd.f32 %v2511, 1.0
  %v2834 = vadd.f32 %v2513, 1.0
  %v2835 = vadd.f32 %v2515, 1.0
  %v2836 = vadd.f32 %v2517, 1.0
  %v2837 = vadd.f32 %v2519, 1.0
  %v2838 = vadd.f32 %v2521, 1.0
  %v2839 = vadd.f32 %v2523, 1.0
  %v2840 = vadd.f32 %v2525, 1.0
  %v2841 = vadd.f32 %v2527, 1.0
  %v2842 = vadd.f32 %v2529, 1.0
  %v2843 = vadd.f32 %v2531, 1.0
  %v2844 = vadd.f32 %v2533, 1.0
  %v2845 = vadd.f32 %v2535, 1.0
  %v2846 = vadd.f32 %v2537, 1.0
  %v2847 = vadd.f32 %v2539, 1.0
  %v2848 = vadd.f32 %v2541, 1.0
  %v2849 = vadd.f32 %v2543, 1.0
  %v2850 = vadd.f32 %v2545, 1.0
  %v2851 = vadd.f32 %v2547, 1.0
  %v2852 = vadd.f32 %v2549, 1.0
  %v2853 = vadd.f32 %v2551, 1.0
  %v2854 = vadd.f32 %v2553, 1.0
  %v2855 = vadd.f32 %v2555, 1.0
  %v2856 = vadd.f32 %v2557, 1.0
  %v2857 = vadd.f32 %v2559, 1.0
  %v2858 = vadd.f32 %v2561, 1.0
  %v2859 = vadd.f32 %v2563, 1.0
  %v2860 = vadd.f32 %v2565, 1.0
  %v2861 = vadd.f32 %v2567, 1.0
  %v2862 = vadd.f32 %v2569, 1.0
  %v2863 = vadd.f32 %v2571, 1.0
  %v2864 = vadd.f32 %v2573, 1.0
  %v2865 = vadd.f32 %v2575, 1.0
  %v2866 = vadd.f32 %v2577, 1.0
  %v2867 = vadd.f32 %v2579, 1.0
  %v2868 = vadd.f32 %v2581, 1.0
  %v2869 = vadd.f32 %v2583, 1.0
  %v2870 = vadd.f32 %v2585, 1.0
  %v2871 = vadd.f32 %v2587, 1.0
  %v2872 = vadd.f32 %v2589, 1.0
  %v2873 = vadd.f32 %v2591, 1.0
  %v2874 = vadd.f32 %v2593, 1.0
  %v2875 = vadd.f32 %v2595, 1.0
  %v2876 = vadd.f32 %v2597, 1.0
  %v2877 = vadd.f32 %v2599, 1.0
  %v2878 = vadd.f32 %v2601, 1.0
  %v2879 = vadd.f32 %v2603, 1.0
  %v2880 = vadd.f32 %v2605, 1.0
  %v2881 = vadd.f32 %v2607, 1.0
  %v2882 = vadd.f32 %v2609, 1.0
  %v2883 = vadd.f32 %v2611, 1.0
  %v2884 = vadd.f32 %v2613, 1.0
  %v2885 = vadd.f32 %v2615, 1.0
  %v2886 = vadd.f32 %v2617, 1.0
  %v2887 = vadd.f32 %v2619, 1.0
  %v2888 = vadd.f32 %v2621, 1.0
  %v2889 = vadd.f32 %v2623, 1.0
  %v2890 = vadd.f32 %v2625, 1.0
  %v2891 = vadd.f32 %v2627, 1.0
  %v2892 = vadd.f32 %v2629, 1.0
  %v2893 = vadd.f32 %v2631, 1.0
  %v2894 = vadd.f32 %v2633, 1.0
  %v2895 = vadd.f32 %v2635, 1.0
  %v2896 = vadd.f32 %v2637, 1.0
  %v2897 = vadd.f32 %v2639, 1.0
  %v2898 = vadd.f32 %v2641, 1.0
  %v2899 = vadd.f32 %v2643, 1.0
  %v2900 = vadd.f32 %v2645, 1.0
  %v2901 = vadd.f32 %v2647, 1.0
  %v2902 = vadd.f32 %v2649, 1.0
  %v2903 = vadd.f32 %v2651, 1.0
  %v2904 = vadd.f32 %v2653, 1.0
  %v2905 = vadd.f32 %v2655, 1.0
  %v2906 = vadd.f32 %v2657, 1.0
  %v2907 = vadd.f32 %v2659, 1.0
  %v2908 = vadd.f32 %v2661, 1.0
  %v2909 = vadd.f32 %v2663, 1.0
  %v2910 = vadd.f32 %v2665, 1.0
  %v2911 = vadd.f32 %v2667, 1.0
  %v2912 = vadd.f32 %v2669, 1.0
  %v2913 = vadd.f32 %v2671, 1.0
  %v2914 = vadd.f32 %v2673, 1.0
  %v2915 = vadd.f32 %v2675, 1.0
  %v2916 = vadd.f32 %v2677, 1.0
  %v2917 = vadd.f32 %v2679, 1.0
  %v2918 = vadd.f32 %v2681, 1.0
  %v2919 = vadd.f32 %v2683, 1.0
  %v2920 = vadd.f32 %v2685, 1.0
  %v2921 = vadd.f32 %v2687, 1.0
  %v2922 = vadd.f32 %v2689, 1.0
  %v2923 = vadd.f32 %v2691, 1.0
  %v2924 = vadd.f32 %v2693, 1.0
  %v2925 = vadd.f32 %v2695, 1.0
  %v2926 = vadd.f32 %v2697, 1.0
  %v2927 = vadd.f32 %v2699, 1.0
  %v2928 = vadd.f32 %v2701, 1.0
  %v2929 = vadd.f32 %v2703, 1.0
  %v2930 = vadd.f32 %v2705, 1.0
  %v2931 = vadd.f32 %v2707, 1.0
  %v2932 = vadd.f32 %v2709, 1.0
  %v2933 = vadd.f32 %v2711, 1.0
  %v2934 = vadd.f32 %v2713, 1.0
  %v2935 = vadd.f32 %v2715, 1.0
  %v2936 = vadd.f32 %v2717, 1.0
  %v2937 = vadd.f32 %v2719, 1.0
  %v2938 = vadd.f32 %v2721, 1.0
  %v2939 = vadd.f32 %v2723, 1.0
  %v2940 = vadd.f32 %v2725, 1.0
  %v2941 = vadd.f32 %v2727, 1.0
  %v2942 = vadd.f32 %v2729, 1.0
  %v2943 = vadd.f32 %v2731, 1.0
  %v2944 = vadd.f32 %v2733, 1.0
  %v2945 = vadd.f32 %v2735, 1.0
  %v2946 = vadd.f32 %v2737, 1.0
  %v2947 = vadd.f32 %v2739, 1.0
  %v2948 = vadd.f32 %v2741, 1.0
  %v2949 = vadd.f32 %v2743, 1.0
  %v2950 = vadd.f32 %v2745, 1.0
  %v2951 = vadd.f32 %v2747, 1.0
  %v2952 = vrcp.pop %v2748
  %v2953 = vmul.f32 1.0, %v2952
  %v2954 = vrcp.pop %v2749
  %v2955 = vmul.f32 1.0, %v2954
  %v2956 = vrcp.pop %v2750
  %v2957 = vmul.f32 1.0, %v2956
  %v2958 = vrcp.pop %v2751
  %v2959 = vmul.f32 1.0, %v2958
  %v2960 = vrcp.pop %v2752
  %v2961 = vmul.f32 1.0, %v2960
  %v2962 = vrcp.pop %v2753
  %v2963 = vmul.f32 1.0, %v2962
  %v2964 = vrcp.pop %v2754
  %v2965 = vmul.f32 1.0, %v2964
  %v2966 = vrcp.pop %v2755
  %v2967 = vmul.f32 1.0, %v2966
  %v2968 = vrcp.pop %v2756
  %v2969 = vmul.f32 1.0, %v2968
  %v2970 = vrcp.pop %v2757
  %v2971 = vmul.f32 1.0, %v2970
  %v2972 = vrcp.pop %v2758
  %v2973 = vmul.f32 1.0, %v2972
  %v2974 = vrcp.pop %v2759
  %v2975 = vmul.f32 1.0, %v2974
  %v2976 = vrcp.pop %v2760
  %v2977 = vmul.f32 1.0, %v2976
  %v2978 = vrcp.pop %v2761
  %v2979 = vmul.f32 1.0, %v2978
  %v2980 = vrcp.pop %v2762
  %v2981 = vmul.f32 1.0, %v2980
  %v2982 = vrcp.pop %v2763
  %v2983 = vmul.f32 1.0, %v2982
  %v2984 = vrcp.pop %v2764
  %v2985 = vmul.f32 1.0, %v2984
  %v2986 = vrcp.pop %v2765
  %v2987 = vmul.f32 1.0, %v2986
  %v2988 = vrcp.pop %v2766
  %v2989 = vmul.f32 1.0, %v2988
  %v2990 = vrcp.pop %v2767
  %v2991 = vmul.f32 1.0, %v2990
  %v2992 = vrcp.pop %v2768
  %v2993 = vmul.f32 1.0, %v2992
  %v2994 = vrcp.pop %v2769
  %v2995 = vmul.f32 1.0, %v2994
  %v2996 = vrcp.pop %v2770
  %v2997 = vmul.f32 1.0, %v2996
  %v2998 = vrcp.pop %v2771
  %v2999 = vmul.f32 1.0, %v2998
  %v3000 = vrcp.pop %v2772
  %v3001 = vmul.f32 1.0, %v3000
  %v3002 = vrcp.pop %v2773
  %v3003 = vmul.f32 1.0, %v3002
  %v3004 = vrcp.pop %v2774
  %v3005 = vmul.f32 1.0, %v3004
  %v3006 = vrcp.pop %v2775
  %v3007 = vmul.f32 1.0, %v3006
  %v3008 = vrcp.pop %v2776
  %v3009 = vmul.f32 1.0, %v3008
  %v3010 = vrcp.pop %v2777
  %v3011 = vmul.f32 1.0, %v3010
  %v3012 = vrcp.pop %v2778
  %v3013 = vmul.f32 1.0, %v3012
  %v3014 = vrcp.pop %v2779
  %v3015 = vmul.f32 1.0, %v3014
  %v3016 = vrcp.pop %v2780
  %v3017 = vmul.f32 1.0, %v3016
  %v3018 = vrcp.pop %v2781
  %v3019 = vmul.f32 1.0, %v3018
  %v3020 = vrcp.pop %v2782
  %v3021 = vmul.f32 1.0, %v3020
  %v3022 = vrcp.pop %v2783
  %v3023 = vmul.f32 1.0, %v3022
  %v3024 = vrcp.pop %v2784
  %v3025 = vmul.f32 1.0, %v3024
  %v3026 = vrcp.pop %v2785
  %v3027 = vmul.f32 1.0, %v3026
  %v3028 = vrcp.pop %v2786
  %v3029 = vmul.f32 1.0, %v3028
  %v3030 = vrcp.pop %v2787
  %v3031 = vmul.f32 1.0, %v3030
  %v3032 = vrcp.pop %v2788
  %v3033 = vmul.f32 1.0, %v3032
  %v3034 = vrcp.pop %v2789
  %v3035 = vmul.f32 1.0, %v3034
  %v3036 = vrcp.pop %v2790
  %v3037 = vmul.f32 1.0, %v3036
  %v3038 = vrcp.pop %v2791
  %v3039 = vmul.f32 1.0, %v3038
  %v3040 = vrcp.pop %v2792
  %v3041 = vmul.f32 1.0, %v3040
  %v3042 = vrcp.pop %v2793
  %v3043 = vmul.f32 1.0, %v3042
  %v3044 = vrcp.pop %v2794
  %v3045 = vmul.f32 1.0, %v3044
  %v3046 = vrcp.pop %v2795
  %v3047 = vmul.f32 1.0, %v3046
  %v3048 = vrcp.pop %v2796
  %v3049 = vmul.f32 1.0, %v3048
  %v3050 = vrcp.pop %v2797
  %v3051 = vmul.f32 1.0, %v3050
  %v3052 = vrcp.pop %v2798
  %v3053 = vmul.f32 1.0, %v3052
  %v3054 = vrcp.pop %v2799
  %v3055 = vmul.f32 1.0, %v3054
  %v3056 = vrcp.pop %v2800
  %v3057 = vmul.f32 1.0, %v3056
  %v3058 = vrcp.pop %v2801
  %v3059 = vmul.f32 1.0, %v3058
  %v3060 = vrcp.pop %v2802
  %v3061 = vmul.f32 1.0, %v3060
  %v3062 = vrcp.pop %v2803
  %v3063 = vmul.f32 1.0, %v3062
  %v3064 = vrcp.pop %v2804
  %v3065 = vmul.f32 1.0, %v3064
  %v3066 = vrcp.pop %v2805
  %v3067 = vmul.f32 1.0, %v3066
  %v3068 = vrcp.pop %v2806
  %v3069 = vmul.f32 1.0, %v3068
  %v3070 = vrcp.pop %v2807
  %v3071 = vmul.f32 1.0, %v3070
  %v3072 = vrcp.pop %v2808
  %v3073 = vmul.f32 1.0, %v3072
  %v3074 = vrcp.pop %v2809
  %v3075 = vmul.f32 1.0, %v3074
  %v3076 = vrcp.pop %v2810
  %v3077 = vmul.f32 1.0, %v3076
  %v3078 = vrcp.pop %v2811
  %v3079 = vmul.f32 1.0, %v3078
  %v3080 = vrcp.pop %v2812
  %v3081 = vmul.f32 1.0, %v3080
  %v3082 = vrcp.pop %v2813
  %v3083 = vmul.f32 1.0, %v3082
  %v3084 = vrcp.pop %v2814
  %v3085 = vmul.f32 1.0, %v3084
  %v3086 = vrcp.pop %v2815
  %v3087 = vmul.f32 1.0, %v3086
  %v3088 = vrcp.pop %v2816
  %v3089 = vmul.f32 1.0, %v3088
  %v3090 = vrcp.pop %v2817
  %v3091 = vmul.f32 1.0, %v3090
  %v3092 = vrcp.pop %v2818
  %v3093 = vmul.f32 1.0, %v3092
  %v3094 = vrcp.pop %v2819
  %v3095 = vmul.f32 1.0, %v3094
  %v3096 = vrcp.pop %v2820
  %v3097 = vmul.f32 1.0, %v3096
  %v3098 = vrcp.pop %v2821
  %v3099 = vmul.f32 1.0, %v3098
  %v3100 = vrcp.pop %v2822
  %v3101 = vmul.f32 1.0, %v3100
  %v3102 = vrcp.pop %v2823
  %v3103 = vmul.f32 1.0, %v3102
  %v3104 = vrcp.pop %v2824
  %v3105 = vmul.f32 1.0, %v3104
  %v3106 = vrcp.pop %v2825
  %v3107 = vmul.f32 1.0, %v3106
  %v3108 = vrcp.pop %v2826
  %v3109 = vmul.f32 1.0, %v3108
  %v3110 = vrcp.pop %v2827
  %v3111 = vmul.f32 1.0, %v3110
  %v3112 = vrcp.pop %v2828
  %v3113 = vmul.f32 1.0, %v3112
  %v3114 = vrcp.pop %v2829
  %v3115 = vmul.f32 1.0, %v3114
  %v3116 = vrcp.pop %v2830
  %v3117 = vmul.f32 1.0, %v3116
  %v3118 = vrcp.pop %v2831
  %v3119 = vmul.f32 1.0, %v3118
  %v3120 = vrcp.pop %v2832
  %v3121 = vmul.f32 1.0, %v3120
  %v3122 = vrcp.pop %v2833
  %v3123 = vmul.f32 1.0, %v3122
  %v3124 = vrcp.pop %v2834
  %v3125 = vmul.f32 1.0, %v3124
  %v3126 = vrcp.pop %v2835
  %v3127 = vmul.f32 1.0, %v3126
  %v3128 = vrcp.pop %v2836
  %v3129 = vmul.f32 1.0, %v3128
  %v3130 = vrcp.pop %v2837
  %v3131 = vmul.f32 1.0, %v3130
  %v3132 = vrcp.pop %v2838
  %v3133 = vmul.f32 1.0, %v3132
  %v3134 = vrcp.pop %v2839
  %v3135 = vmul.f32 1.0, %v3134
  %v3136 = vrcp.pop %v2840
  %v3137 = vmul.f32 1.0, %v3136
  %v3138 = vrcp.pop %v2841
  %v3139 = vmul.f32 1.0, %v3138
  %v3140 = vrcp.pop %v2842
  %v3141 = vmul.f32 1.0, %v3140
  %v3142 = vrcp.pop %v2843
  %v3143 = vmul.f32 1.0, %v3142
  %v3144 = vrcp.pop %v2844
  %v3145 = vmul.f32 1.0, %v3144
  %v3146 = vrcp.pop %v2845
  %v3147 = vmul.f32 1.0, %v3146
  %v3148 = vrcp.pop %v2846
  %v3149 = vmul.f32 1.0, %v3148
  %v3150 = vrcp.pop %v2847
  %v3151 = vmul.f32 1.0, %v3150
  %v3152 = vrcp.pop %v2848
  %v3153 = vmul.f32 1.0, %v3152
  %v3154 = vrcp.pop %v2849
  %v3155 = vmul.f32 1.0, %v3154
  %v3156 = vrcp.pop %v2850
  %v3157 = vmul.f32 1.0, %v3156
  %v3158 = vrcp.pop %v2851
  %v3159 = vmul.f32 1.0, %v3158
  %v3160 = vrcp.pop %v2852
  %v3161 = vmul.f32 1.0, %v3160
  %v3162 = vrcp.pop %v2853
  %v3163 = vmul.f32 1.0, %v3162
  %v3164 = vrcp.pop %v2854
  %v3165 = vmul.f32 1.0, %v3164
  %v3166 = vrcp.pop %v2855
  %v3167 = vmul.f32 1.0, %v3166
  %v3168 = vrcp.pop %v2856
  %v3169 = vmul.f32 1.0, %v3168
  %v3170 = vrcp.pop %v2857
  %v3171 = vmul.f32 1.0, %v3170
  %v3172 = vrcp.pop %v2858
  %v3173 = vmul.f32 1.0, %v3172
  %v3174 = vrcp.pop %v2859
  %v3175 = vmul.f32 1.0, %v3174
  %v3176 = vrcp.pop %v2860
  %v3177 = vmul.f32 1.0, %v3176
  %v3178 = vrcp.pop %v2861
  %v3179 = vmul.f32 1.0, %v3178
  %v3180 = vrcp.pop %v2862
  %v3181 = vmul.f32 1.0, %v3180
  %v3182 = vrcp.pop %v2863
  %v3183 = vmul.f32 1.0, %v3182
  %v3184 = vrcp.pop %v2864
  %v3185 = vmul.f32 1.0, %v3184
  %v3186 = vrcp.pop %v2865
  %v3187 = vmul.f32 1.0, %v3186
  %v3188 = vrcp.pop %v2866
  %v3189 = vmul.f32 1.0, %v3188
  %v3190 = vrcp.pop %v2867
  %v3191 = vmul.f32 1.0, %v3190
  %v3192 = vrcp.pop %v2868
  %v3193 = vmul.f32 1.0, %v3192
  %v3194 = vrcp.pop %v2869
  %v3195 = vmul.f32 1.0, %v3194
  %v3196 = vrcp.pop %v2870
  %v3197 = vmul.f32 1.0, %v3196
  %v3198 = vrcp.pop %v2871
  %v3199 = vmul.f32 1.0, %v3198
  %v3200 = vrcp.pop %v2872
  %v3201 = vmul.f32 1.0, %v3200
  %v3202 = vrcp.pop %v2873
  %v3203 = vmul.f32 1.0, %v3202
  %v3204 = vrcp.pop %v2874
  %v3205 = vmul.f32 1.0, %v3204
  %v3206 = vrcp.pop %v2875
  %v3207 = vmul.f32 1.0, %v3206
  %v3208 = vrcp.pop %v2876
  %v3209 = vmul.f32 1.0, %v3208
  %v3210 = vrcp.pop %v2877
  %v3211 = vmul.f32 1.0, %v3210
  %v3212 = vrcp.pop %v2878
  %v3213 = vmul.f32 1.0, %v3212
  %v3214 = vrcp.pop %v2879
  %v3215 = vmul.f32 1.0, %v3214
  %v3216 = vrcp.pop %v2880
  %v3217 = vmul.f32 1.0, %v3216
  %v3218 = vrcp.pop %v2881
  %v3219 = vmul.f32 1.0, %v3218
  %v3220 = vrcp.pop %v2882
  %v3221 = vmul.f32 1.0, %v3220
  %v3222 = vrcp.pop %v2883
  %v3223 = vmul.f32 1.0, %v3222
  %v3224 = vrcp.pop %v2884
  %v3225 = vmul.f32 1.0, %v3224
  %v3226 = vrcp.pop %v2885
  %v3227 = vmul.f32 1.0, %v3226
  %v3228 = vrcp.pop %v2886
  %v3229 = vmul.f32 1.0, %v3228
  %v3230 = vrcp.pop %v2887
  %v3231 = vmul.f32 1.0, %v3230
  %v3232 = vrcp.pop %v2888
  %v3233 = vmul.f32 1.0, %v3232
  %v3234 = vrcp.pop %v2889
  %v3235 = vmul.f32 1.0, %v3234
  %v3236 = vrcp.pop %v2890
  %v3237 = vmul.f32 1.0, %v3236
  %v3238 = vrcp.pop %v2891
  %v3239 = vmul.f32 1.0, %v3238
  %v3240 = vrcp.pop %v2892
  %v3241 = vmul.f32 1.0, %v3240
  %v3242 = vrcp.pop %v2893
  %v3243 = vmul.f32 1.0, %v3242
  %v3244 = vrcp.pop %v2894
  %v3245 = vmul.f32 1.0, %v3244
  %v3246 = vrcp.pop %v2895
  %v3247 = vmul.f32 1.0, %v3246
  %v3248 = vrcp.pop %v2896
  %v3249 = vmul.f32 1.0, %v3248
  %v3250 = vrcp.pop %v2897
  %v3251 = vmul.f32 1.0, %v3250
  %v3252 = vrcp.pop %v2898
  %v3253 = vmul.f32 1.0, %v3252
  %v3254 = vrcp.pop %v2899
  %v3255 = vmul.f32 1.0, %v3254
  %v3256 = vrcp.pop %v2900
  %v3257 = vmul.f32 1.0, %v3256
  %v3258 = vrcp.pop %v2901
  %v3259 = vmul.f32 1.0, %v3258
  %v3260 = vrcp.pop %v2902
  %v3261 = vmul.f32 1.0, %v3260
  %v3262 = vrcp.pop %v2903
  %v3263 = vmul.f32 1.0, %v3262
  %v3264 = vrcp.pop %v2904
  %v3265 = vmul.f32 1.0, %v3264
  %v3266 = vrcp.pop %v2905
  %v3267 = vmul.f32 1.0, %v3266
  %v3268 = vrcp.pop %v2906
  %v3269 = vmul.f32 1.0, %v3268
  %v3270 = vrcp.pop %v2907
  %v3271 = vmul.f32 1.0, %v3270
  %v3272 = vrcp.pop %v2908
  %v3273 = vmul.f32 1.0, %v3272
  %v3274 = vrcp.pop %v2909
  %v3275 = vmul.f32 1.0, %v3274
  %v3276 = vrcp.pop %v2910
  %v3277 = vmul.f32 1.0, %v3276
  %v3278 = vrcp.pop %v2911
  %v3279 = vmul.f32 1.0, %v3278
  %v3280 = vrcp.pop %v2912
  %v3281 = vmul.f32 1.0, %v3280
  %v3282 = vrcp.pop %v2913
  %v3283 = vmul.f32 1.0, %v3282
  %v3284 = vrcp.pop %v2914
  %v3285 = vmul.f32 1.0, %v3284
  %v3286 = vrcp.pop %v2915
  %v3287 = vmul.f32 1.0, %v3286
  %v3288 = vrcp.pop %v2916
  %v3289 = vmul.f32 1.0, %v3288
  %v3290 = vrcp.pop %v2917
  %v3291 = vmul.f32 1.0, %v3290
  %v3292 = vrcp.pop %v2918
  %v3293 = vmul.f32 1.0, %v3292
  %v3294 = vrcp.pop %v2919
  %v3295 = vmul.f32 1.0, %v3294
  %v3296 = vrcp.pop %v2920
  %v3297 = vmul.f32 1.0, %v3296
  %v3298 = vrcp.pop %v2921
  %v3299 = vmul.f32 1.0, %v3298
  %v3300 = vrcp.pop %v2922
  %v3301 = vmul.f32 1.0, %v3300
  %v3302 = vrcp.pop %v2923
  %v3303 = vmul.f32 1.0, %v3302
  %v3304 = vrcp.pop %v2924
  %v3305 = vmul.f32 1.0, %v3304
  %v3306 = vrcp.pop %v2925
  %v3307 = vmul.f32 1.0, %v3306
  %v3308 = vrcp.pop %v2926
  %v3309 = vmul.f32 1.0, %v3308
  %v3310 = vrcp.pop %v2927
  %v3311 = vmul.f32 1.0, %v3310
  %v3312 = vrcp.pop %v2928
  %v3313 = vmul.f32 1.0, %v3312
  %v3314 = vrcp.pop %v2929
  %v3315 = vmul.f32 1.0, %v3314
  %v3316 = vrcp.pop %v2930
  %v3317 = vmul.f32 1.0, %v3316
  %v3318 = vrcp.pop %v2931
  %v3319 = vmul.f32 1.0, %v3318
  %v3320 = vrcp.pop %v2932
  %v3321 = vmul.f32 1.0, %v3320
  %v3322 = vrcp.pop %v2933
  %v3323 = vmul.f32 1.0, %v3322
  %v3324 = vrcp.pop %v2934
  %v3325 = vmul.f32 1.0, %v3324
  %v3326 = vrcp.pop %v2935
  %v3327 = vmul.f32 1.0, %v3326
  %v3328 = vrcp.pop %v2936
  %v3329 = vmul.f32 1.0, %v3328
  %v3330 = vrcp.pop %v2937
  %v3331 = vmul.f32 1.0, %v3330
  %v3332 = vrcp.pop %v2938
  %v3333 = vmul.f32 1.0, %v3332
  %v3334 = vrcp.pop %v2939
  %v3335 = vmul.f32 1.0, %v3334
  %v3336 = vrcp.pop %v2940
  %v3337 = vmul.f32 1.0, %v3336
  %v3338 = vrcp.pop %v2941
  %v3339 = vmul.f32 1.0, %v3338
  %v3340 = vrcp.pop %v2942
  %v3341 = vmul.f32 1.0, %v3340
  %v3342 = vrcp.pop %v2943
  %v3343 = vmul.f32 1.0, %v3342
  %v3344 = vrcp.pop %v2944
  %v3345 = vmul.f32 1.0, %v3344
  %v3346 = vrcp.pop %v2945
  %v3347 = vmul.f32 1.0, %v3346
  %v3348 = vrcp.pop %v2946
  %v3349 = vmul.f32 1.0, %v3348
  %v3350 = vrcp.pop %v2947
  %v3351 = vmul.f32 1.0, %v3350
  %v3352 = vrcp.pop %v2948
  %v3353 = vmul.f32 1.0, %v3352
  %v3354 = vrcp.pop %v2949
  %v3355 = vmul.f32 1.0, %v3354
  %v3356 = vrcp.pop %v2950
  %v3357 = vmul.f32 1.0, %v3356
  %v3358 = vrcp.pop %v2951
  %v3359 = vmul.f32 1.0, %v3358
  %v3360 = vld [vmem:[%s3] sm:$0xff]
  %v3361 = vld [vmem:[%s3 + $0x8] sm:$0xff]
  %v3362 = vld [vmem:[%s3 + $0x10] sm:$0xff]
  %v3363 = vld [vmem:[%s3 + $0x18] sm:$0xff]
  %v3364 = vld [vmem:[%s3 + $0x20] sm:$0xff]
  %v3365 = vld [vmem:[%s3 + $0x28] sm:$0xff]
  %v3366 = vld [vmem:[%s3 + $0x30] sm:$0xff]
  %v3367 = vld [vmem:[%s3 + $0x38] sm:$0xff]
  %v3368 = vld [vmem:[%s3 + $0x40] sm:$0xff]
  %v3369 = vld [vmem:[%s3 + $0x48] sm:$0xff]
  %v3370 = vld [vmem:[%s3 + $0x50] sm:$0xff]
  %v3371 = vld [vmem:[%s3 + $0x58] sm:$0xff]
  %v3372 = vld [vmem:[%s3 + $0x60] sm:$0xff]
  %v3373 = vld [vmem:[%s3 + $0x68] sm:$0xff]
  %v3374 = vld [vmem:[%s3 + $0x70] sm:$0xff]
  %v3375 = vld [vmem:[%s3 + $0x78] sm:$0xff]
  %v3376 = vld [vmem:[%s3 + $0x80] sm:$0xff]
  %v3377 = vld [vmem:[%s3 + $0x88] sm:$0xff]
  %v3378 = vld [vmem:[%s3 + $0x90] sm:$0xff]
  %v3379 = vld [vmem:[%s3 + $0x98] sm:$0xff]
  %v3380 = vld [vmem:[%s3 + $0xa0] sm:$0xff]
  %v3381 = vld [vmem:[%s3 + $0xa8] sm:$0xff]
  %v3382 = vld [vmem:[%s3 + $0xb0] sm:$0xff]
  %v3383 = vld [vmem:[%s3 + $0xb8] sm:$0xff]
  %v3384 = vld [vmem:[%s3 + $0xc0] sm:$0xff]
  %v3385 = vld [vmem:[%s3 + $0xc8] sm:$0xff]
  %v3386 = vld [vmem:[%s3 + $0xd0] sm:$0xff]
  %v3387 = vld [vmem:[%s3 + $0xd8] sm:$0xff]
  %v3388 = vld [vmem:[%s3 + $0xe0] sm:$0xff]
  %v3389 = vld [vmem:[%s3 + $0xe8] sm:$0xff]
  %v3390 = vld [vmem:[%s3 + $0xf0] sm:$0xff]
  %v3391 = vld [vmem:[%s3 + $0xf8] sm:$0xff]
  %v3392 = vld [vmem:[%s3 + $0x100] sm:$0xff]
  %v3393 = vld [vmem:[%s3 + $0x108] sm:$0xff]
  %v3394 = vld [vmem:[%s3 + $0x110] sm:$0xff]
  %v3395 = vld [vmem:[%s3 + $0x118] sm:$0xff]
  %v3396 = vld [vmem:[%s3 + $0x120] sm:$0xff]
  %v3397 = vld [vmem:[%s3 + $0x128] sm:$0xff]
  %v3398 = vld [vmem:[%s3 + $0x130] sm:$0xff]
  %v3399 = vld [vmem:[%s3 + $0x138] sm:$0xff]
  %v3400 = vld [vmem:[%s3 + $0x140] sm:$0xff]
  %v3401 = vld [vmem:[%s3 + $0x148] sm:$0xff]
  %v3402 = vld [vmem:[%s3 + $0x150] sm:$0xff]
  %v3403 = vld [vmem:[%s3 + $0x158] sm:$0xff]
  %v3404 = vld [vmem:[%s3 + $0x160] sm:$0xff]
  %v3405 = vld [vmem:[%s3 + $0x168] sm:$0xff]
  %v3406 = vld [vmem:[%s3 + $0x170] sm:$0xff]
  %v3407 = vld [vmem:[%s3 + $0x178] sm:$0xff]
  %v3408 = vld [vmem:[%s3 + $0x180] sm:$0xff]
  %v3409 = vld [vmem:[%s3 + $0x188] sm:$0xff]
  %v3410 = vld [vmem:[%s3 + $0x190] sm:$0xff]
  %v3411 = vld [vmem:[%s3 + $0x198] sm:$0xff]
  %v3412 = vld [vmem:[%s3 + $0x1a0] sm:$0xff]
  %v3413 = vld [vmem:[%s3 + $0x1a8] sm:$0xff]
  %v3414 = vld [vmem:[%s3 + $0x1b0] sm:$0xff]
  %v3415 = vld [vmem:[%s3 + $0x1b8] sm:$0xff]
  %v3416 = vld [vmem:[%s3 + $0x1c0] sm:$0xff]
  %v3417 = vld [vmem:[%s3 + $0x1c8] sm:$0xff]
  %v3418 = vld [vmem:[%s3 + $0x1d0] sm:$0xff]
  %v3419 = vld [vmem:[%s3 + $0x1d8] sm:$0xff]
  %v3420 = vld [vmem:[%s3 + $0x1e0] sm:$0xff]
  %v3421 = vld [vmem:[%s3 + $0x1e8] sm:$0xff]
  %v3422 = vld [vmem:[%s3 + $0x1f0] sm:$0xff]
  %v3423 = vld [vmem:[%s3 + $0x1f8] sm:$0xff]
  %v3424 = vld [vmem:[%s3 + $0x200] sm:$0xff]
  %v3425 = vld [vmem:[%s3 + $0x208] sm:$0xff]
  %v3426 = vld [vmem:[%s3 + $0x210] sm:$0xff]
  %v3427 = vld [vmem:[%s3 + $0x218] sm:$0xff]
  %v3428 = vld [vmem:[%s3 + $0x220] sm:$0xff]
  %v3429 = vld [vmem:[%s3 + $0x228] sm:$0xff]
  %v3430 = vld [vmem:[%s3 + $0x230] sm:$0xff]
  %v3431 = vld [vmem:[%s3 + $0x238] sm:$0xff]
  %v3432 = vld [vmem:[%s3 + $0x240] sm:$0xff]
  %v3433 = vld [vmem:[%s3 + $0x248] sm:$0xff]
  %v3434 = vld [vmem:[%s3 + $0x250] sm:$0xff]
  %v3435 = vld [vmem:[%s3 + $0x258] sm:$0xff]
  %v3436 = vld [vmem:[%s3 + $0x260] sm:$0xff]
  %v3437 = vld [vmem:[%s3 + $0x268] sm:$0xff]
  %v3438 = vld [vmem:[%s3 + $0x270] sm:$0xff]
  %v3439 = vld [vmem:[%s3 + $0x278] sm:$0xff]
  %v3440 = vld [vmem:[%s3 + $0x280] sm:$0xff]
  %v3441 = vld [vmem:[%s3 + $0x288] sm:$0xff]
  %v3442 = vld [vmem:[%s3 + $0x290] sm:$0xff]
  %v3443 = vld [vmem:[%s3 + $0x298] sm:$0xff]
  %v3444 = vld [vmem:[%s3 + $0x2a0] sm:$0xff]
  %v3445 = vld [vmem:[%s3 + $0x2a8] sm:$0xff]
  %v3446 = vld [vmem:[%s3 + $0x2b0] sm:$0xff]
  %v3447 = vld [vmem:[%s3 + $0x2b8] sm:$0xff]
  %v3448 = vld [vmem:[%s3 + $0x2c0] sm:$0xff]
  %v3449 = vld [vmem:[%s3 + $0x2c8] sm:$0xff]
  %v3450 = vld [vmem:[%s3 + $0x2d0] sm:$0xff]
  %v3451 = vld [vmem:[%s3 + $0x2d8] sm:$0xff]
  %v3452 = vld [vmem:[%s3 + $0x2e0] sm:$0xff]
  %v3453 = vld [vmem:[%s3 + $0x2e8] sm:$0xff]
  %v3454 = vld [vmem:[%s3 + $0x2f0] sm:$0xff]
  %v3455 = vld [vmem:[%s3 + $0x2f8] sm:$0xff]
  %v3456 = vld [vmem:[%s3 + $0x300] sm:$0xff]
  %v3457 = vld [vmem:[%s3 + $0x308] sm:$0xff]
  %v3458 = vld [vmem:[%s3 + $0x310] sm:$0xff]
  %v3459 = vld [vmem:[%s3 + $0x318] sm:$0xff]
  %v3460 = vld [vmem:[%s3 + $0x320] sm:$0xff]
  %v3461 = vld [vmem:[%s3 + $0x328] sm:$0xff]
  %v3462 = vld [vmem:[%s3 + $0x330] sm:$0xff]
  %v3463 = vld [vmem:[%s3 + $0x338] sm:$0xff]
  %v3464 = vld [vmem:[%s3 + $0x340] sm:$0xff]
  %v3465 = vld [vmem:[%s3 + $0x348] sm:$0xff]
  %v3466 = vld [vmem:[%s3 + $0x350] sm:$0xff]
  %v3467 = vld [vmem:[%s3 + $0x358] sm:$0xff]
  %v3468 = vld [vmem:[%s3 + $0x360] sm:$0xff]
  %v3469 = vld [vmem:[%s3 + $0x368] sm:$0xff]
  %v3470 = vld [vmem:[%s3 + $0x370] sm:$0xff]
  %v3471 = vld [vmem:[%s3 + $0x378] sm:$0xff]
  %v3472 = vld [vmem:[%s3 + $0x380] sm:$0xff]
  %v3473 = vld [vmem:[%s3 + $0x388] sm:$0xff]
  %v3474 = vld [vmem:[%s3 + $0x390] sm:$0xff]
  %v3475 = vld [vmem:[%s3 + $0x398] sm:$0xff]
  %v3476 = vld [vmem:[%s3 + $0x3a0] sm:$0xff]
  %v3477 = vld [vmem:[%s3 + $0x3a8] sm:$0xff]
  %v3478 = vld [vmem:[%s3 + $0x3b0] sm:$0xff]
  %v3479 = vld [vmem:[%s3 + $0x3b8] sm:$0xff]
  %v3480 = vld [vmem:[%s3 + $0x3c0] sm:$0xff]
  %v3481 = vld [vmem:[%s3 + $0x3c8] sm:$0xff]
  %v3482 = vld [vmem:[%s3 + $0x3d0] sm:$0xff]
  %v3483 = vld [vmem:[%s3 + $0x3d8] sm:$0xff]
  %v3484 = vld [vmem:[%s3 + $0x3e0] sm:$0xff]
  %v3485 = vld [vmem:[%s3 + $0x3e8] sm:$0xff]
  %v3486 = vld [vmem:[%s3 + $0x3f0] sm:$0xff]
  %v3487 = vld [vmem:[%s3 + $0x3f8] sm:$0xff]
  %v3488 = vld [vmem:[%s3 + $0x400] sm:$0xff]
  %v3489 = vld [vmem:[%s3 + $0x408] sm:$0xff]
  %v3490 = vld [vmem:[%s3 + $0x410] sm:$0xff]
  %v3491 = vld [vmem:[%s3 + $0x418] sm:$0xff]
  %v3492 = vld [vmem:[%s3 + $0x420] sm:$0xff]
  %v3493 = vld [vmem:[%s3 + $0x428] sm:$0xff]
  %v3494 = vld [vmem:[%s3 + $0x430] sm:$0xff]
  %v3495 = vld [vmem:[%s3 + $0x438] sm:$0xff]
  %v3496 = vld [vmem:[%s3 + $0x440] sm:$0xff]
  %v3497 = vld [vmem:[%s3 + $0x448] sm:$0xff]
  %v3498 = vld [vmem:[%s3 + $0x450] sm:$0xff]
  %v3499 = vld [vmem:[%s3 + $0x458] sm:$0xff]
  %v3500 = vld [vmem:[%s3 + $0x460] sm:$0xff]
  %v3501 = vld [vmem:[%s3 + $0x468] sm:$0xff]
  %v3502 = vld [vmem:[%s3 + $0x470] sm:$0xff]
  %v3503 = vld [vmem:[%s3 + $0x478] sm:$0xff]
  %v3504 = vld [vmem:[%s3 + $0x480] sm:$0xff]
  %v3505 = vld [vmem:[%s3 + $0x488] sm:$0xff]
  %v3506 = vld [vmem:[%s3 + $0x490] sm:$0xff]
  %v3507 = vld [vmem:[%s3 + $0x498] sm:$0xff]
  %v3508 = vld [vmem:[%s3 + $0x4a0] sm:$0xff]
  %v3509 = vld [vmem:[%s3 + $0x4a8] sm:$0xff]
  %v3510 = vld [vmem:[%s3 + $0x4b0] sm:$0xff]
  %v3511 = vld [vmem:[%s3 + $0x4b8] sm:$0xff]
  %v3512 = vld [vmem:[%s3 + $0x4c0] sm:$0xff]
  %v3513 = vld [vmem:[%s3 + $0x4c8] sm:$0xff]
  %v3514 = vld [vmem:[%s3 + $0x4d0] sm:$0xff]
  %v3515 = vld [vmem:[%s3 + $0x4d8] sm:$0xff]
  %v3516 = vld [vmem:[%s3 + $0x4e0] sm:$0xff]
  %v3517 = vld [vmem:[%s3 + $0x4e8] sm:$0xff]
  %v3518 = vld [vmem:[%s3 + $0x4f0] sm:$0xff]
  %v3519 = vld [vmem:[%s3 + $0x4f8] sm:$0xff]
  %v3520 = vld [vmem:[%s3 + $0x500] sm:$0xff]
  %v3521 = vld [vmem:[%s3 + $0x508] sm:$0xff]
  %v3522 = vld [vmem:[%s3 + $0x510] sm:$0xff]
  %v3523 = vld [vmem:[%s3 + $0x518] sm:$0xff]
  %v3524 = vld [vmem:[%s3 + $0x520] sm:$0xff]
  %v3525 = vld [vmem:[%s3 + $0x528] sm:$0xff]
  %v3526 = vld [vmem:[%s3 + $0x530] sm:$0xff]
  %v3527 = vld [vmem:[%s3 + $0x538] sm:$0xff]
  %v3528 = vld [vmem:[%s3 + $0x540] sm:$0xff]
  %v3529 = vld [vmem:[%s3 + $0x548] sm:$0xff]
  %v3530 = vld [vmem:[%s3 + $0x550] sm:$0xff]
  %v3531 = vld [vmem:[%s3 + $0x558] sm:$0xff]
  %v3532 = vld [vmem:[%s3 + $0x560] sm:$0xff]
  %v3533 = vld [vmem:[%s3 + $0x568] sm:$0xff]
  %v3534 = vld [vmem:[%s3 + $0x570] sm:$0xff]
  %v3535 = vld [vmem:[%s3 + $0x578] sm:$0xff]
  %v3536 = vld [vmem:[%s3 + $0x580] sm:$0xff]
  %v3537 = vld [vmem:[%s3 + $0x588] sm:$0xff]
  %v3538 = vld [vmem:[%s3 + $0x590] sm:$0xff]
  %v3539 = vld [vmem:[%s3 + $0x598] sm:$0xff]
  %v3540 = vld [vmem:[%s3 + $0x5a0] sm:$0xff]
  %v3541 = vld [vmem:[%s3 + $0x5a8] sm:$0xff]
  %v3542 = vld [vmem:[%s3 + $0x5b0] sm:$0xff]
  %v3543 = vld [vmem:[%s3 + $0x5b8] sm:$0xff]
  %v3544 = vld [vmem:[%s3 + $0x5c0] sm:$0xff]
  %v3545 = vld [vmem:[%s3 + $0x5c8] sm:$0xff]
  %v3546 = vld [vmem:[%s3 + $0x5d0] sm:$0xff]
  %v3547 = vld [vmem:[%s3 + $0x5d8] sm:$0xff]
  %v3548 = vld [vmem:[%s3 + $0x5e0] sm:$0xff]
  %v3549 = vld [vmem:[%s3 + $0x5e8] sm:$0xff]
  %v3550 = vld [vmem:[%s3 + $0x5f0] sm:$0xff]
  %v3551 = vld [vmem:[%s3 + $0x5f8] sm:$0xff]
  %v3552 = vld [vmem:[%s3 + $0x600] sm:$0xff]
  %v3553 = vld [vmem:[%s3 + $0x608] sm:$0xff]
  %v3554 = vld [vmem:[%s3 + $0x610] sm:$0xff]
  %v3555 = vld [vmem:[%s3 + $0x618] sm:$0xff]
  %v3556 = vld [vmem:[%s3 + $0x620] sm:$0xff]
  %v3557 = vld [vmem:[%s3 + $0x628] sm:$0xff]
  %v3558 = vld [vmem:[%s3 + $0x630] sm:$0xff]
  %v3559 = vld [vmem:[%s3 + $0x638] sm:$0xff]
  %v3560 = vld [vmem:[%s3 + $0x640] sm:$0xff]
  %v3561 = vld [vmem:[%s3 + $0x648] sm:$0xff]
  %v3562 = vld [vmem:[%s3 + $0x650] sm:$0xff]
  %v3563 = vld [vmem:[%s3 + $0x658] sm:$0xff]
  %3565 = vset.pattern.permute.xlu0 0
  %3566 = vperm.xlu0 %3565, %v2953
  %v3567 = vpop.permute.xlu0 %3566
  %3570 = vset.pattern.permute.xlu0 0
  %3571 = vperm.xlu0 %3570, %v2955
  %v3572 = vpop.permute.xlu0 %3571
  %3575 = vset.pattern.permute.xlu0 0
  %3576 = vperm.xlu0 %3575, %v2957
  %v3577 = vpop.permute.xlu0 %3576
  %3580 = vset.pattern.permute.xlu0 0
  %3581 = vperm.xlu0 %3580, %v2959
  %v3582 = vpop.permute.xlu0 %3581
  %3585 = vset.pattern.permute.xlu0 0
  %3586 = vperm.xlu0 %3585, %v2961
  %v3587 = vpop.permute.xlu0 %3586
  %3590 = vset.pattern.permute.xlu0 0
  %3591 = vperm.xlu0 %3590, %v2963
  %v3592 = vpop.permute.xlu0 %3591
  %3595 = vset.pattern.permute.xlu0 0
  %3596 = vperm.xlu0 %3595, %v2965
  %v3597 = vpop.permute.xlu0 %3596
  %3600 = vset.pattern.permute.xlu0 0
  %3601 = vperm.xlu0 %3600, %v2967
  %v3602 = vpop.permute.xlu0 %3601
  %3605 = vset.pattern.permute.xlu0 0
  %3606 = vperm.xlu0 %3605, %v2969
  %v3607 = vpop.permute.xlu0 %3606
  %3610 = vset.pattern.permute.xlu0 0
  %3611 = vperm.xlu0 %3610, %v2971
  %v3612 = vpop.permute.xlu0 %3611
  %3615 = vset.pattern.permute.xlu0 0
  %3616 = vperm.xlu0 %3615, %v2973
  %v3617 = vpop.permute.xlu0 %3616
  %3620 = vset.pattern.permute.xlu0 0
  %3621 = vperm.xlu0 %3620, %v2975
  %v3622 = vpop.permute.xlu0 %3621
  %3625 = vset.pattern.permute.xlu0 0
  %3626 = vperm.xlu0 %3625, %v2977
  %v3627 = vpop.permute.xlu0 %3626
  %3630 = vset.pattern.permute.xlu0 0
  %3631 = vperm.xlu0 %3630, %v2979
  %v3632 = vpop.permute.xlu0 %3631
  %3635 = vset.pattern.permute.xlu0 0
  %3636 = vperm.xlu0 %3635, %v2981
  %v3637 = vpop.permute.xlu0 %3636
  %3640 = vset.pattern.permute.xlu0 0
  %3641 = vperm.xlu0 %3640, %v2983
  %v3642 = vpop.permute.xlu0 %3641
  %3645 = vset.pattern.permute.xlu0 0
  %3646 = vperm.xlu0 %3645, %v2985
  %v3647 = vpop.permute.xlu0 %3646
  %3650 = vset.pattern.permute.xlu0 0
  %3651 = vperm.xlu0 %3650, %v2987
  %v3652 = vpop.permute.xlu0 %3651
  %3655 = vset.pattern.permute.xlu0 0
  %3656 = vperm.xlu0 %3655, %v2989
  %v3657 = vpop.permute.xlu0 %3656
  %3660 = vset.pattern.permute.xlu0 0
  %3661 = vperm.xlu0 %3660, %v2991
  %v3662 = vpop.permute.xlu0 %3661
  %3665 = vset.pattern.permute.xlu0 0
  %3666 = vperm.xlu0 %3665, %v2993
  %v3667 = vpop.permute.xlu0 %3666
  %3670 = vset.pattern.permute.xlu0 0
  %3671 = vperm.xlu0 %3670, %v2995
  %v3672 = vpop.permute.xlu0 %3671
  %3675 = vset.pattern.permute.xlu0 0
  %3676 = vperm.xlu0 %3675, %v2997
  %v3677 = vpop.permute.xlu0 %3676
  %3680 = vset.pattern.permute.xlu0 0
  %3681 = vperm.xlu0 %3680, %v2999
  %v3682 = vpop.permute.xlu0 %3681
  %3685 = vset.pattern.permute.xlu0 0
  %3686 = vperm.xlu0 %3685, %v3001
  %v3687 = vpop.permute.xlu0 %3686
  %3690 = vset.pattern.permute.xlu0 0
  %3691 = vperm.xlu0 %3690, %v3003
  %v3692 = vpop.permute.xlu0 %3691
  %3695 = vset.pattern.permute.xlu0 0
  %3696 = vperm.xlu0 %3695, %v3005
  %v3697 = vpop.permute.xlu0 %3696
  %3700 = vset.pattern.permute.xlu0 0
  %3701 = vperm.xlu0 %3700, %v3007
  %v3702 = vpop.permute.xlu0 %3701
  %3705 = vset.pattern.permute.xlu0 0
  %3706 = vperm.xlu0 %3705, %v3009
  %v3707 = vpop.permute.xlu0 %3706
  %3710 = vset.pattern.permute.xlu0 0
  %3711 = vperm.xlu0 %3710, %v3011
  %v3712 = vpop.permute.xlu0 %3711
  %3715 = vset.pattern.permute.xlu0 0
  %3716 = vperm.xlu0 %3715, %v3013
  %v3717 = vpop.permute.xlu0 %3716
  %3720 = vset.pattern.permute.xlu0 0
  %3721 = vperm.xlu0 %3720, %v3015
  %v3722 = vpop.permute.xlu0 %3721
  %3725 = vset.pattern.permute.xlu0 0
  %3726 = vperm.xlu0 %3725, %v3017
  %v3727 = vpop.permute.xlu0 %3726
  %3730 = vset.pattern.permute.xlu0 0
  %3731 = vperm.xlu0 %3730, %v3019
  %v3732 = vpop.permute.xlu0 %3731
  %3735 = vset.pattern.permute.xlu0 0
  %3736 = vperm.xlu0 %3735, %v3021
  %v3737 = vpop.permute.xlu0 %3736
  %3740 = vset.pattern.permute.xlu0 0
  %3741 = vperm.xlu0 %3740, %v3023
  %v3742 = vpop.permute.xlu0 %3741
  %3745 = vset.pattern.permute.xlu0 0
  %3746 = vperm.xlu0 %3745, %v3025
  %v3747 = vpop.permute.xlu0 %3746
  %3750 = vset.pattern.permute.xlu0 0
  %3751 = vperm.xlu0 %3750, %v3027
  %v3752 = vpop.permute.xlu0 %3751
  %3755 = vset.pattern.permute.xlu0 0
  %3756 = vperm.xlu0 %3755, %v3029
  %v3757 = vpop.permute.xlu0 %3756
  %3760 = vset.pattern.permute.xlu0 0
  %3761 = vperm.xlu0 %3760, %v3031
  %v3762 = vpop.permute.xlu0 %3761
  %3765 = vset.pattern.permute.xlu0 0
  %3766 = vperm.xlu0 %3765, %v3033
  %v3767 = vpop.permute.xlu0 %3766
  %3770 = vset.pattern.permute.xlu0 0
  %3771 = vperm.xlu0 %3770, %v3035
  %v3772 = vpop.permute.xlu0 %3771
  %3775 = vset.pattern.permute.xlu0 0
  %3776 = vperm.xlu0 %3775, %v3037
  %v3777 = vpop.permute.xlu0 %3776
  %3780 = vset.pattern.permute.xlu0 0
  %3781 = vperm.xlu0 %3780, %v3039
  %v3782 = vpop.permute.xlu0 %3781
  %3785 = vset.pattern.permute.xlu0 0
  %3786 = vperm.xlu0 %3785, %v3041
  %v3787 = vpop.permute.xlu0 %3786
  %3790 = vset.pattern.permute.xlu0 0
  %3791 = vperm.xlu0 %3790, %v3043
  %v3792 = vpop.permute.xlu0 %3791
  %3795 = vset.pattern.permute.xlu0 0
  %3796 = vperm.xlu0 %3795, %v3045
  %v3797 = vpop.permute.xlu0 %3796
  %3800 = vset.pattern.permute.xlu0 0
  %3801 = vperm.xlu0 %3800, %v3047
  %v3802 = vpop.permute.xlu0 %3801
  %3805 = vset.pattern.permute.xlu0 0
  %3806 = vperm.xlu0 %3805, %v3049
  %v3807 = vpop.permute.xlu0 %3806
  %3810 = vset.pattern.permute.xlu0 0
  %3811 = vperm.xlu0 %3810, %v3051
  %v3812 = vpop.permute.xlu0 %3811
  %3815 = vset.pattern.permute.xlu0 0
  %3816 = vperm.xlu0 %3815, %v3053
  %v3817 = vpop.permute.xlu0 %3816
  %3820 = vset.pattern.permute.xlu0 0
  %3821 = vperm.xlu0 %3820, %v3055
  %v3822 = vpop.permute.xlu0 %3821
  %3825 = vset.pattern.permute.xlu0 0
  %3826 = vperm.xlu0 %3825, %v3057
  %v3827 = vpop.permute.xlu0 %3826
  %3830 = vset.pattern.permute.xlu0 0
  %3831 = vperm.xlu0 %3830, %v3059
  %v3832 = vpop.permute.xlu0 %3831
  %3835 = vset.pattern.permute.xlu0 0
  %3836 = vperm.xlu0 %3835, %v3061
  %v3837 = vpop.permute.xlu0 %3836
  %3840 = vset.pattern.permute.xlu0 0
  %3841 = vperm.xlu0 %3840, %v3063
  %v3842 = vpop.permute.xlu0 %3841
  %3845 = vset.pattern.permute.xlu0 0
  %3846 = vperm.xlu0 %3845, %v3065
  %v3847 = vpop.permute.xlu0 %3846
  %3850 = vset.pattern.permute.xlu0 0
  %3851 = vperm.xlu0 %3850, %v3067
  %v3852 = vpop.permute.xlu0 %3851
  %3855 = vset.pattern.permute.xlu0 0
  %3856 = vperm.xlu0 %3855, %v3069
  %v3857 = vpop.permute.xlu0 %3856
  %3860 = vset.pattern.permute.xlu0 0
  %3861 = vperm.xlu0 %3860, %v3071
  %v3862 = vpop.permute.xlu0 %3861
  %3865 = vset.pattern.permute.xlu0 0
  %3866 = vperm.xlu0 %3865, %v3073
  %v3867 = vpop.permute.xlu0 %3866
  %3870 = vset.pattern.permute.xlu0 0
  %3871 = vperm.xlu0 %3870, %v3075
  %v3872 = vpop.permute.xlu0 %3871
  %3875 = vset.pattern.permute.xlu0 0
  %3876 = vperm.xlu0 %3875, %v3077
  %v3877 = vpop.permute.xlu0 %3876
  %3880 = vset.pattern.permute.xlu0 0
  %3881 = vperm.xlu0 %3880, %v3079
  %v3882 = vpop.permute.xlu0 %3881
  %3885 = vset.pattern.permute.xlu0 0
  %3886 = vperm.xlu0 %3885, %v3081
  %v3887 = vpop.permute.xlu0 %3886
  %3890 = vset.pattern.permute.xlu0 0
  %3891 = vperm.xlu0 %3890, %v3083
  %v3892 = vpop.permute.xlu0 %3891
  %3895 = vset.pattern.permute.xlu0 0
  %3896 = vperm.xlu0 %3895, %v3085
  %v3897 = vpop.permute.xlu0 %3896
  %3900 = vset.pattern.permute.xlu0 0
  %3901 = vperm.xlu0 %3900, %v3087
  %v3902 = vpop.permute.xlu0 %3901
  %3905 = vset.pattern.permute.xlu0 0
  %3906 = vperm.xlu0 %3905, %v3089
  %v3907 = vpop.permute.xlu0 %3906
  %3910 = vset.pattern.permute.xlu0 0
  %3911 = vperm.xlu0 %3910, %v3091
  %v3912 = vpop.permute.xlu0 %3911
  %3915 = vset.pattern.permute.xlu0 0
  %3916 = vperm.xlu0 %3915, %v3093
  %v3917 = vpop.permute.xlu0 %3916
  %3920 = vset.pattern.permute.xlu0 0
  %3921 = vperm.xlu0 %3920, %v3095
  %v3922 = vpop.permute.xlu0 %3921
  %3925 = vset.pattern.permute.xlu0 0
  %3926 = vperm.xlu0 %3925, %v3097
  %v3927 = vpop.permute.xlu0 %3926
  %3930 = vset.pattern.permute.xlu0 0
  %3931 = vperm.xlu0 %3930, %v3099
  %v3932 = vpop.permute.xlu0 %3931
  %3935 = vset.pattern.permute.xlu0 0
  %3936 = vperm.xlu0 %3935, %v3101
  %v3937 = vpop.permute.xlu0 %3936
  %3940 = vset.pattern.permute.xlu0 0
  %3941 = vperm.xlu0 %3940, %v3103
  %v3942 = vpop.permute.xlu0 %3941
  %3945 = vset.pattern.permute.xlu0 0
  %3946 = vperm.xlu0 %3945, %v3105
  %v3947 = vpop.permute.xlu0 %3946
  %3950 = vset.pattern.permute.xlu0 0
  %3951 = vperm.xlu0 %3950, %v3107
  %v3952 = vpop.permute.xlu0 %3951
  %3955 = vset.pattern.permute.xlu0 0
  %3956 = vperm.xlu0 %3955, %v3109
  %v3957 = vpop.permute.xlu0 %3956
  %3960 = vset.pattern.permute.xlu0 0
  %3961 = vperm.xlu0 %3960, %v3111
  %v3962 = vpop.permute.xlu0 %3961
  %3965 = vset.pattern.permute.xlu0 0
  %3966 = vperm.xlu0 %3965, %v3113
  %v3967 = vpop.permute.xlu0 %3966
  %3970 = vset.pattern.permute.xlu0 0
  %3971 = vperm.xlu0 %3970, %v3115
  %v3972 = vpop.permute.xlu0 %3971
  %3975 = vset.pattern.permute.xlu0 0
  %3976 = vperm.xlu0 %3975, %v3117
  %v3977 = vpop.permute.xlu0 %3976
  %3980 = vset.pattern.permute.xlu0 0
  %3981 = vperm.xlu0 %3980, %v3119
  %v3982 = vpop.permute.xlu0 %3981
  %3985 = vset.pattern.permute.xlu0 0
  %3986 = vperm.xlu0 %3985, %v3121
  %v3987 = vpop.permute.xlu0 %3986
  %3990 = vset.pattern.permute.xlu0 0
  %3991 = vperm.xlu0 %3990, %v3123
  %v3992 = vpop.permute.xlu0 %3991
  %3995 = vset.pattern.permute.xlu0 0
  %3996 = vperm.xlu0 %3995, %v3125
  %v3997 = vpop.permute.xlu0 %3996
  %4000 = vset.pattern.permute.xlu0 0
  %4001 = vperm.xlu0 %4000, %v3127
  %v4002 = vpop.permute.xlu0 %4001
  %4005 = vset.pattern.permute.xlu0 0
  %4006 = vperm.xlu0 %4005, %v3129
  %v4007 = vpop.permute.xlu0 %4006
  %4010 = vset.pattern.permute.xlu0 0
  %4011 = vperm.xlu0 %4010, %v3131
  %v4012 = vpop.permute.xlu0 %4011
  %4015 = vset.pattern.permute.xlu0 0
  %4016 = vperm.xlu0 %4015, %v3133
  %v4017 = vpop.permute.xlu0 %4016
  %4020 = vset.pattern.permute.xlu0 0
  %4021 = vperm.xlu0 %4020, %v3135
  %v4022 = vpop.permute.xlu0 %4021
  %4025 = vset.pattern.permute.xlu0 0
  %4026 = vperm.xlu0 %4025, %v3137
  %v4027 = vpop.permute.xlu0 %4026
  %4030 = vset.pattern.permute.xlu0 0
  %4031 = vperm.xlu0 %4030, %v3139
  %v4032 = vpop.permute.xlu0 %4031
  %4035 = vset.pattern.permute.xlu0 0
  %4036 = vperm.xlu0 %4035, %v3141
  %v4037 = vpop.permute.xlu0 %4036
  %4040 = vset.pattern.permute.xlu0 0
  %4041 = vperm.xlu0 %4040, %v3143
  %v4042 = vpop.permute.xlu0 %4041
  %4045 = vset.pattern.permute.xlu0 0
  %4046 = vperm.xlu0 %4045, %v3145
  %v4047 = vpop.permute.xlu0 %4046
  %4050 = vset.pattern.permute.xlu0 0
  %4051 = vperm.xlu0 %4050, %v3147
  %v4052 = vpop.permute.xlu0 %4051
  %4055 = vset.pattern.permute.xlu0 0
  %4056 = vperm.xlu0 %4055, %v3149
  %v4057 = vpop.permute.xlu0 %4056
  %4060 = vset.pattern.permute.xlu0 0
  %4061 = vperm.xlu0 %4060, %v3151
  %v4062 = vpop.permute.xlu0 %4061
  %4065 = vset.pattern.permute.xlu0 0
  %4066 = vperm.xlu0 %4065, %v3153
  %v4067 = vpop.permute.xlu0 %4066
  %4070 = vset.pattern.permute.xlu0 0
  %4071 = vperm.xlu0 %4070, %v3155
  %v4072 = vpop.permute.xlu0 %4071
  %4075 = vset.pattern.permute.xlu0 0
  %4076 = vperm.xlu0 %4075, %v3157
  %v4077 = vpop.permute.xlu0 %4076
  %4080 = vset.pattern.permute.xlu0 0
  %4081 = vperm.xlu0 %4080, %v3159
  %v4082 = vpop.permute.xlu0 %4081
  %4085 = vset.pattern.permute.xlu0 0
  %4086 = vperm.xlu0 %4085, %v3161
  %v4087 = vpop.permute.xlu0 %4086
  %4090 = vset.pattern.permute.xlu0 0
  %4091 = vperm.xlu0 %4090, %v3163
  %v4092 = vpop.permute.xlu0 %4091
  %4095 = vset.pattern.permute.xlu0 0
  %4096 = vperm.xlu0 %4095, %v3165
  %v4097 = vpop.permute.xlu0 %4096
  %4100 = vset.pattern.permute.xlu0 0
  %4101 = vperm.xlu0 %4100, %v3167
  %v4102 = vpop.permute.xlu0 %4101
  %4105 = vset.pattern.permute.xlu0 0
  %4106 = vperm.xlu0 %4105, %v3169
  %v4107 = vpop.permute.xlu0 %4106
  %4110 = vset.pattern.permute.xlu0 0
  %4111 = vperm.xlu0 %4110, %v3171
  %v4112 = vpop.permute.xlu0 %4111
  %4115 = vset.pattern.permute.xlu0 0
  %4116 = vperm.xlu0 %4115, %v3173
  %v4117 = vpop.permute.xlu0 %4116
  %4120 = vset.pattern.permute.xlu0 0
  %4121 = vperm.xlu0 %4120, %v3175
  %v4122 = vpop.permute.xlu0 %4121
  %4125 = vset.pattern.permute.xlu0 0
  %4126 = vperm.xlu0 %4125, %v3177
  %v4127 = vpop.permute.xlu0 %4126
  %4130 = vset.pattern.permute.xlu0 0
  %4131 = vperm.xlu0 %4130, %v3179
  %v4132 = vpop.permute.xlu0 %4131
  %4135 = vset.pattern.permute.xlu0 0
  %4136 = vperm.xlu0 %4135, %v3181
  %v4137 = vpop.permute.xlu0 %4136
  %4140 = vset.pattern.permute.xlu0 0
  %4141 = vperm.xlu0 %4140, %v3183
  %v4142 = vpop.permute.xlu0 %4141
  %4145 = vset.pattern.permute.xlu0 0
  %4146 = vperm.xlu0 %4145, %v3185
  %v4147 = vpop.permute.xlu0 %4146
  %4150 = vset.pattern.permute.xlu0 0
  %4151 = vperm.xlu0 %4150, %v3187
  %v4152 = vpop.permute.xlu0 %4151
  %4155 = vset.pattern.permute.xlu0 0
  %4156 = vperm.xlu0 %4155, %v3189
  %v4157 = vpop.permute.xlu0 %4156
  %4160 = vset.pattern.permute.xlu0 0
  %4161 = vperm.xlu0 %4160, %v3191
  %v4162 = vpop.permute.xlu0 %4161
  %4165 = vset.pattern.permute.xlu0 0
  %4166 = vperm.xlu0 %4165, %v3193
  %v4167 = vpop.permute.xlu0 %4166
  %4170 = vset.pattern.permute.xlu0 0
  %4171 = vperm.xlu0 %4170, %v3195
  %v4172 = vpop.permute.xlu0 %4171
  %4175 = vset.pattern.permute.xlu0 0
  %4176 = vperm.xlu0 %4175, %v3197
  %v4177 = vpop.permute.xlu0 %4176
  %4180 = vset.pattern.permute.xlu0 0
  %4181 = vperm.xlu0 %4180, %v3199
  %v4182 = vpop.permute.xlu0 %4181
  %4185 = vset.pattern.permute.xlu0 0
  %4186 = vperm.xlu0 %4185, %v3201
  %v4187 = vpop.permute.xlu0 %4186
  %4190 = vset.pattern.permute.xlu0 0
  %4191 = vperm.xlu0 %4190, %v3203
  %v4192 = vpop.permute.xlu0 %4191
  %4195 = vset.pattern.permute.xlu0 0
  %4196 = vperm.xlu0 %4195, %v3205
  %v4197 = vpop.permute.xlu0 %4196
  %4200 = vset.pattern.permute.xlu0 0
  %4201 = vperm.xlu0 %4200, %v3207
  %v4202 = vpop.permute.xlu0 %4201
  %4205 = vset.pattern.permute.xlu0 0
  %4206 = vperm.xlu0 %4205, %v3209
  %v4207 = vpop.permute.xlu0 %4206
  %4210 = vset.pattern.permute.xlu0 0
  %4211 = vperm.xlu0 %4210, %v3211
  %v4212 = vpop.permute.xlu0 %4211
  %4215 = vset.pattern.permute.xlu0 0
  %4216 = vperm.xlu0 %4215, %v3213
  %v4217 = vpop.permute.xlu0 %4216
  %4220 = vset.pattern.permute.xlu0 0
  %4221 = vperm.xlu0 %4220, %v3215
  %v4222 = vpop.permute.xlu0 %4221
  %4225 = vset.pattern.permute.xlu0 0
  %4226 = vperm.xlu0 %4225, %v3217
  %v4227 = vpop.permute.xlu0 %4226
  %4230 = vset.pattern.permute.xlu0 0
  %4231 = vperm.xlu0 %4230, %v3219
  %v4232 = vpop.permute.xlu0 %4231
  %4235 = vset.pattern.permute.xlu0 0
  %4236 = vperm.xlu0 %4235, %v3221
  %v4237 = vpop.permute.xlu0 %4236
  %4240 = vset.pattern.permute.xlu0 0
  %4241 = vperm.xlu0 %4240, %v3223
  %v4242 = vpop.permute.xlu0 %4241
  %4245 = vset.pattern.permute.xlu0 0
  %4246 = vperm.xlu0 %4245, %v3225
  %v4247 = vpop.permute.xlu0 %4246
  %4250 = vset.pattern.permute.xlu0 0
  %4251 = vperm.xlu0 %4250, %v3227
  %v4252 = vpop.permute.xlu0 %4251
  %4255 = vset.pattern.permute.xlu0 0
  %4256 = vperm.xlu0 %4255, %v3229
  %v4257 = vpop.permute.xlu0 %4256
  %4260 = vset.pattern.permute.xlu0 0
  %4261 = vperm.xlu0 %4260, %v3231
  %v4262 = vpop.permute.xlu0 %4261
  %4265 = vset.pattern.permute.xlu0 0
  %4266 = vperm.xlu0 %4265, %v3233
  %v4267 = vpop.permute.xlu0 %4266
  %4270 = vset.pattern.permute.xlu0 0
  %4271 = vperm.xlu0 %4270, %v3235
  %v4272 = vpop.permute.xlu0 %4271
  %4275 = vset.pattern.permute.xlu0 0
  %4276 = vperm.xlu0 %4275, %v3237
  %v4277 = vpop.permute.xlu0 %4276
  %4280 = vset.pattern.permute.xlu0 0
  %4281 = vperm.xlu0 %4280, %v3239
  %v4282 = vpop.permute.xlu0 %4281
  %4285 = vset.pattern.permute.xlu0 0
  %4286 = vperm.xlu0 %4285, %v3241
  %v4287 = vpop.permute.xlu0 %4286
  %4290 = vset.pattern.permute.xlu0 0
  %4291 = vperm.xlu0 %4290, %v3243
  %v4292 = vpop.permute.xlu0 %4291
  %4295 = vset.pattern.permute.xlu0 0
  %4296 = vperm.xlu0 %4295, %v3245
  %v4297 = vpop.permute.xlu0 %4296
  %4300 = vset.pattern.permute.xlu0 0
  %4301 = vperm.xlu0 %4300, %v3247
  %v4302 = vpop.permute.xlu0 %4301
  %4305 = vset.pattern.permute.xlu0 0
  %4306 = vperm.xlu0 %4305, %v3249
  %v4307 = vpop.permute.xlu0 %4306
  %4310 = vset.pattern.permute.xlu0 0
  %4311 = vperm.xlu0 %4310, %v3251
  %v4312 = vpop.permute.xlu0 %4311
  %4315 = vset.pattern.permute.xlu0 0
  %4316 = vperm.xlu0 %4315, %v3253
  %v4317 = vpop.permute.xlu0 %4316
  %4320 = vset.pattern.permute.xlu0 0
  %4321 = vperm.xlu0 %4320, %v3255
  %v4322 = vpop.permute.xlu0 %4321
  %4325 = vset.pattern.permute.xlu0 0
  %4326 = vperm.xlu0 %4325, %v3257
  %v4327 = vpop.permute.xlu0 %4326
  %4330 = vset.pattern.permute.xlu0 0
  %4331 = vperm.xlu0 %4330, %v3259
  %v4332 = vpop.permute.xlu0 %4331
  %4335 = vset.pattern.permute.xlu0 0
  %4336 = vperm.xlu0 %4335, %v3261
  %v4337 = vpop.permute.xlu0 %4336
  %4340 = vset.pattern.permute.xlu0 0
  %4341 = vperm.xlu0 %4340, %v3263
  %v4342 = vpop.permute.xlu0 %4341
  %4345 = vset.pattern.permute.xlu0 0
  %4346 = vperm.xlu0 %4345, %v3265
  %v4347 = vpop.permute.xlu0 %4346
  %4350 = vset.pattern.permute.xlu0 0
  %4351 = vperm.xlu0 %4350, %v3267
  %v4352 = vpop.permute.xlu0 %4351
  %4355 = vset.pattern.permute.xlu0 0
  %4356 = vperm.xlu0 %4355, %v3269
  %v4357 = vpop.permute.xlu0 %4356
  %4360 = vset.pattern.permute.xlu0 0
  %4361 = vperm.xlu0 %4360, %v3271
  %v4362 = vpop.permute.xlu0 %4361
  %4365 = vset.pattern.permute.xlu0 0
  %4366 = vperm.xlu0 %4365, %v3273
  %v4367 = vpop.permute.xlu0 %4366
  %4370 = vset.pattern.permute.xlu0 0
  %4371 = vperm.xlu0 %4370, %v3275
  %v4372 = vpop.permute.xlu0 %4371
  %4375 = vset.pattern.permute.xlu0 0
  %4376 = vperm.xlu0 %4375, %v3277
  %v4377 = vpop.permute.xlu0 %4376
  %4380 = vset.pattern.permute.xlu0 0
  %4381 = vperm.xlu0 %4380, %v3279
  %v4382 = vpop.permute.xlu0 %4381
  %4385 = vset.pattern.permute.xlu0 0
  %4386 = vperm.xlu0 %4385, %v3281
  %v4387 = vpop.permute.xlu0 %4386
  %4390 = vset.pattern.permute.xlu0 0
  %4391 = vperm.xlu0 %4390, %v3283
  %v4392 = vpop.permute.xlu0 %4391
  %4395 = vset.pattern.permute.xlu0 0
  %4396 = vperm.xlu0 %4395, %v3285
  %v4397 = vpop.permute.xlu0 %4396
  %4400 = vset.pattern.permute.xlu0 0
  %4401 = vperm.xlu0 %4400, %v3287
  %v4402 = vpop.permute.xlu0 %4401
  %4405 = vset.pattern.permute.xlu0 0
  %4406 = vperm.xlu0 %4405, %v3289
  %v4407 = vpop.permute.xlu0 %4406
  %4410 = vset.pattern.permute.xlu0 0
  %4411 = vperm.xlu0 %4410, %v3291
  %v4412 = vpop.permute.xlu0 %4411
  %4415 = vset.pattern.permute.xlu0 0
  %4416 = vperm.xlu0 %4415, %v3293
  %v4417 = vpop.permute.xlu0 %4416
  %4420 = vset.pattern.permute.xlu0 0
  %4421 = vperm.xlu0 %4420, %v3295
  %v4422 = vpop.permute.xlu0 %4421
  %4425 = vset.pattern.permute.xlu0 0
  %4426 = vperm.xlu0 %4425, %v3297
  %v4427 = vpop.permute.xlu0 %4426
  %4430 = vset.pattern.permute.xlu0 0
  %4431 = vperm.xlu0 %4430, %v3299
  %v4432 = vpop.permute.xlu0 %4431
  %4435 = vset.pattern.permute.xlu0 0
  %4436 = vperm.xlu0 %4435, %v3301
  %v4437 = vpop.permute.xlu0 %4436
  %4440 = vset.pattern.permute.xlu0 0
  %4441 = vperm.xlu0 %4440, %v3303
  %v4442 = vpop.permute.xlu0 %4441
  %4445 = vset.pattern.permute.xlu0 0
  %4446 = vperm.xlu0 %4445, %v3305
  %v4447 = vpop.permute.xlu0 %4446
  %4450 = vset.pattern.permute.xlu0 0
  %4451 = vperm.xlu0 %4450, %v3307
  %v4452 = vpop.permute.xlu0 %4451
  %4455 = vset.pattern.permute.xlu0 0
  %4456 = vperm.xlu0 %4455, %v3309
  %v4457 = vpop.permute.xlu0 %4456
  %4460 = vset.pattern.permute.xlu0 0
  %4461 = vperm.xlu0 %4460, %v3311
  %v4462 = vpop.permute.xlu0 %4461
  %4465 = vset.pattern.permute.xlu0 0
  %4466 = vperm.xlu0 %4465, %v3313
  %v4467 = vpop.permute.xlu0 %4466
  %4470 = vset.pattern.permute.xlu0 0
  %4471 = vperm.xlu0 %4470, %v3315
  %v4472 = vpop.permute.xlu0 %4471
  %4475 = vset.pattern.permute.xlu0 0
  %4476 = vperm.xlu0 %4475, %v3317
  %v4477 = vpop.permute.xlu0 %4476
  %4480 = vset.pattern.permute.xlu0 0
  %4481 = vperm.xlu0 %4480, %v3319
  %v4482 = vpop.permute.xlu0 %4481
  %4485 = vset.pattern.permute.xlu0 0
  %4486 = vperm.xlu0 %4485, %v3321
  %v4487 = vpop.permute.xlu0 %4486
  %4490 = vset.pattern.permute.xlu0 0
  %4491 = vperm.xlu0 %4490, %v3323
  %v4492 = vpop.permute.xlu0 %4491
  %4495 = vset.pattern.permute.xlu0 0
  %4496 = vperm.xlu0 %4495, %v3325
  %v4497 = vpop.permute.xlu0 %4496
  %4500 = vset.pattern.permute.xlu0 0
  %4501 = vperm.xlu0 %4500, %v3327
  %v4502 = vpop.permute.xlu0 %4501
  %4505 = vset.pattern.permute.xlu0 0
  %4506 = vperm.xlu0 %4505, %v3329
  %v4507 = vpop.permute.xlu0 %4506
  %4510 = vset.pattern.permute.xlu0 0
  %4511 = vperm.xlu0 %4510, %v3331
  %v4512 = vpop.permute.xlu0 %4511
  %4515 = vset.pattern.permute.xlu0 0
  %4516 = vperm.xlu0 %4515, %v3333
  %v4517 = vpop.permute.xlu0 %4516
  %4520 = vset.pattern.permute.xlu0 0
  %4521 = vperm.xlu0 %4520, %v3335
  %v4522 = vpop.permute.xlu0 %4521
  %4525 = vset.pattern.permute.xlu0 0
  %4526 = vperm.xlu0 %4525, %v3337
  %v4527 = vpop.permute.xlu0 %4526
  %4530 = vset.pattern.permute.xlu0 0
  %4531 = vperm.xlu0 %4530, %v3339
  %v4532 = vpop.permute.xlu0 %4531
  %4535 = vset.pattern.permute.xlu0 0
  %4536 = vperm.xlu0 %4535, %v3341
  %v4537 = vpop.permute.xlu0 %4536
  %4540 = vset.pattern.permute.xlu0 0
  %4541 = vperm.xlu0 %4540, %v3343
  %v4542 = vpop.permute.xlu0 %4541
  %4545 = vset.pattern.permute.xlu0 0
  %4546 = vperm.xlu0 %4545, %v3345
  %v4547 = vpop.permute.xlu0 %4546
  %4550 = vset.pattern.permute.xlu0 0
  %4551 = vperm.xlu0 %4550, %v3347
  %v4552 = vpop.permute.xlu0 %4551
  %4555 = vset.pattern.permute.xlu0 0
  %4556 = vperm.xlu0 %4555, %v3349
  %v4557 = vpop.permute.xlu0 %4556
  %4560 = vset.pattern.permute.xlu0 0
  %4561 = vperm.xlu0 %4560, %v3351
  %v4562 = vpop.permute.xlu0 %4561
  %4565 = vset.pattern.permute.xlu0 0
  %4566 = vperm.xlu0 %4565, %v3353
  %v4567 = vpop.permute.xlu0 %4566
  %4570 = vset.pattern.permute.xlu0 0
  %4571 = vperm.xlu0 %4570, %v3355
  %v4572 = vpop.permute.xlu0 %4571
  %4575 = vset.pattern.permute.xlu0 0
  %4576 = vperm.xlu0 %4575, %v3357
  %v4577 = vpop.permute.xlu0 %4576
  %4580 = vset.pattern.permute.xlu0 0
  %4581 = vperm.xlu0 %4580, %v3359
  %v4582 = vpop.permute.xlu0 %4581
  %v4584 = vmul.f32 %v3360, %v3567
  %v4585 = vmul.f32 %v3361, %v3572
  %v4586 = vmul.f32 %v3362, %v3577
  %v4587 = vmul.f32 %v3363, %v3582
  %v4588 = vmul.f32 %v3364, %v3587
  %v4589 = vmul.f32 %v3365, %v3592
  %v4590 = vmul.f32 %v3366, %v3597
  %v4591 = vmul.f32 %v3367, %v3602
  %v4592 = vmul.f32 %v3368, %v3607
  %v4593 = vmul.f32 %v3369, %v3612
  %v4594 = vmul.f32 %v3370, %v3617
  %v4595 = vmul.f32 %v3371, %v3622
  %v4596 = vmul.f32 %v3372, %v3627
  %v4597 = vmul.f32 %v3373, %v3632
  %v4598 = vmul.f32 %v3374, %v3637
  %v4599 = vmul.f32 %v3375, %v3642
  %v4600 = vmul.f32 %v3376, %v3647
  %v4601 = vmul.f32 %v3377, %v3652
  %v4602 = vmul.f32 %v3378, %v3657
  %v4603 = vmul.f32 %v3379, %v3662
  %v4604 = vmul.f32 %v3380, %v3667
  %v4605 = vmul.f32 %v3381, %v3672
  %v4606 = vmul.f32 %v3382, %v3677
  %v4607 = vmul.f32 %v3383, %v3682
  %v4608 = vmul.f32 %v3384, %v3687
  %v4609 = vmul.f32 %v3385, %v3692
  %v4610 = vmul.f32 %v3386, %v3697
  %v4611 = vmul.f32 %v3387, %v3702
  %v4612 = vmul.f32 %v3388, %v3707
  %v4613 = vmul.f32 %v3389, %v3712
  %v4614 = vmul.f32 %v3390, %v3717
  %v4615 = vmul.f32 %v3391, %v3722
  %v4616 = vmul.f32 %v3392, %v3727
  %v4617 = vmul.f32 %v3393, %v3732
  %v4618 = vmul.f32 %v3394, %v3737
  %v4619 = vmul.f32 %v3395, %v3742
  %v4620 = vmul.f32 %v3396, %v3747
  %v4621 = vmul.f32 %v3397, %v3752
  %v4622 = vmul.f32 %v3398, %v3757
  %v4623 = vmul.f32 %v3399, %v3762
  %v4624 = vmul.f32 %v3400, %v3767
  %v4625 = vmul.f32 %v3401, %v3772
  %v4626 = vmul.f32 %v3402, %v3777
  %v4627 = vmul.f32 %v3403, %v3782
  %v4628 = vmul.f32 %v3404, %v3787
  %v4629 = vmul.f32 %v3405, %v3792
  %v4630 = vmul.f32 %v3406, %v3797
  %v4631 = vmul.f32 %v3407, %v3802
  %v4632 = vmul.f32 %v3408, %v3807
  %v4633 = vmul.f32 %v3409, %v3812
  %v4634 = vmul.f32 %v3410, %v3817
  %v4635 = vmul.f32 %v3411, %v3822
  %v4636 = vmul.f32 %v3412, %v3827
  %v4637 = vmul.f32 %v3413, %v3832
  %v4638 = vmul.f32 %v3414, %v3837
  %v4639 = vmul.f32 %v3415, %v3842
  %v4640 = vmul.f32 %v3416, %v3847
  %v4641 = vmul.f32 %v3417, %v3852
  %v4642 = vmul.f32 %v3418, %v3857
  %v4643 = vmul.f32 %v3419, %v3862
  %v4644 = vmul.f32 %v3420, %v3867
  %v4645 = vmul.f32 %v3421, %v3872
  %v4646 = vmul.f32 %v3422, %v3877
  %v4647 = vmul.f32 %v3423, %v3882
  %v4648 = vmul.f32 %v3424, %v3887
  %v4649 = vmul.f32 %v3425, %v3892
  %v4650 = vmul.f32 %v3426, %v3897
  %v4651 = vmul.f32 %v3427, %v3902
  %v4652 = vmul.f32 %v3428, %v3907
  %v4653 = vmul.f32 %v3429, %v3912
  %v4654 = vmul.f32 %v3430, %v3917
  %v4655 = vmul.f32 %v3431, %v3922
  %v4656 = vmul.f32 %v3432, %v3927
  %v4657 = vmul.f32 %v3433, %v3932
  %v4658 = vmul.f32 %v3434, %v3937
  %v4659 = vmul.f32 %v3435, %v3942
  %v4660 = vmul.f32 %v3436, %v3947
  %v4661 = vmul.f32 %v3437, %v3952
  %v4662 = vmul.f32 %v3438, %v3957
  %v4663 = vmul.f32 %v3439, %v3962
  %v4664 = vmul.f32 %v3440, %v3967
  %v4665 = vmul.f32 %v3441, %v3972
  %v4666 = vmul.f32 %v3442, %v3977
  %v4667 = vmul.f32 %v3443, %v3982
  %v4668 = vmul.f32 %v3444, %v3987
  %v4669 = vmul.f32 %v3445, %v3992
  %v4670 = vmul.f32 %v3446, %v3997
  %v4671 = vmul.f32 %v3447, %v4002
  %v4672 = vmul.f32 %v3448, %v4007
  %v4673 = vmul.f32 %v3449, %v4012
  %v4674 = vmul.f32 %v3450, %v4017
  %v4675 = vmul.f32 %v3451, %v4022
  %v4676 = vmul.f32 %v3452, %v4027
  %v4677 = vmul.f32 %v3453, %v4032
  %v4678 = vmul.f32 %v3454, %v4037
  %v4679 = vmul.f32 %v3455, %v4042
  %v4680 = vmul.f32 %v3456, %v4047
  %v4681 = vmul.f32 %v3457, %v4052
  %v4682 = vmul.f32 %v3458, %v4057
  %v4683 = vmul.f32 %v3459, %v4062
  %v4684 = vmul.f32 %v3460, %v4067
  %v4685 = vmul.f32 %v3461, %v4072
  %v4686 = vmul.f32 %v3462, %v4077
  %v4687 = vmul.f32 %v3463, %v4082
  %v4688 = vmul.f32 %v3464, %v4087
  %v4689 = vmul.f32 %v3465, %v4092
  %v4690 = vmul.f32 %v3466, %v4097
  %v4691 = vmul.f32 %v3467, %v4102
  %v4692 = vmul.f32 %v3468, %v4107
  %v4693 = vmul.f32 %v3469, %v4112
  %v4694 = vmul.f32 %v3470, %v4117
  %v4695 = vmul.f32 %v3471, %v4122
  %v4696 = vmul.f32 %v3472, %v4127
  %v4697 = vmul.f32 %v3473, %v4132
  %v4698 = vmul.f32 %v3474, %v4137
  %v4699 = vmul.f32 %v3475, %v4142
  %v4700 = vmul.f32 %v3476, %v4147
  %v4701 = vmul.f32 %v3477, %v4152
  %v4702 = vmul.f32 %v3478, %v4157
  %v4703 = vmul.f32 %v3479, %v4162
  %v4704 = vmul.f32 %v3480, %v4167
  %v4705 = vmul.f32 %v3481, %v4172
  %v4706 = vmul.f32 %v3482, %v4177
  %v4707 = vmul.f32 %v3483, %v4182
  %v4708 = vmul.f32 %v3484, %v4187
  %v4709 = vmul.f32 %v3485, %v4192
  %v4710 = vmul.f32 %v3486, %v4197
  %v4711 = vmul.f32 %v3487, %v4202
  %v4712 = vmul.f32 %v3488, %v4207
  %v4713 = vmul.f32 %v3489, %v4212
  %v4714 = vmul.f32 %v3490, %v4217
  %v4715 = vmul.f32 %v3491, %v4222
  %v4716 = vmul.f32 %v3492, %v4227
  %v4717 = vmul.f32 %v3493, %v4232
  %v4718 = vmul.f32 %v3494, %v4237
  %v4719 = vmul.f32 %v3495, %v4242
  %v4720 = vmul.f32 %v3496, %v4247
  %v4721 = vmul.f32 %v3497, %v4252
  %v4722 = vmul.f32 %v3498, %v4257
  %v4723 = vmul.f32 %v3499, %v4262
  %v4724 = vmul.f32 %v3500, %v4267
  %v4725 = vmul.f32 %v3501, %v4272
  %v4726 = vmul.f32 %v3502, %v4277
  %v4727 = vmul.f32 %v3503, %v4282
  %v4728 = vmul.f32 %v3504, %v4287
  %v4729 = vmul.f32 %v3505, %v4292
  %v4730 = vmul.f32 %v3506, %v4297
  %v4731 = vmul.f32 %v3507, %v4302
  %v4732 = vmul.f32 %v3508, %v4307
  %v4733 = vmul.f32 %v3509, %v4312
  %v4734 = vmul.f32 %v3510, %v4317
  %v4735 = vmul.f32 %v3511, %v4322
  %v4736 = vmul.f32 %v3512, %v4327
  %v4737 = vmul.f32 %v3513, %v4332
  %v4738 = vmul.f32 %v3514, %v4337
  %v4739 = vmul.f32 %v3515, %v4342
  %v4740 = vmul.f32 %v3516, %v4347
  %v4741 = vmul.f32 %v3517, %v4352
  %v4742 = vmul.f32 %v3518, %v4357
  %v4743 = vmul.f32 %v3519, %v4362
  %v4744 = vmul.f32 %v3520, %v4367
  %v4745 = vmul.f32 %v3521, %v4372
  %v4746 = vmul.f32 %v3522, %v4377
  %v4747 = vmul.f32 %v3523, %v4382
  %v4748 = vmul.f32 %v3524, %v4387
  %v4749 = vmul.f32 %v3525, %v4392
  %v4750 = vmul.f32 %v3526, %v4397
  %v4751 = vmul.f32 %v3527, %v4402
  %v4752 = vmul.f32 %v3528, %v4407
  %v4753 = vmul.f32 %v3529, %v4412
  %v4754 = vmul.f32 %v3530, %v4417
  %v4755 = vmul.f32 %v3531, %v4422
  %v4756 = vmul.f32 %v3532, %v4427
  %v4757 = vmul.f32 %v3533, %v4432
  %v4758 = vmul.f32 %v3534, %v4437
  %v4759 = vmul.f32 %v3535, %v4442
  %v4760 = vmul.f32 %v3536, %v4447
  %v4761 = vmul.f32 %v3537, %v4452
  %v4762 = vmul.f32 %v3538, %v4457
  %v4763 = vmul.f32 %v3539, %v4462
  %v4764 = vmul.f32 %v3540, %v4467
  %v4765 = vmul.f32 %v3541, %v4472
  %v4766 = vmul.f32 %v3542, %v4477
  %v4767 = vmul.f32 %v3543, %v4482
  %v4768 = vmul.f32 %v3544, %v4487
  %v4769 = vmul.f32 %v3545, %v4492
  %v4770 = vmul.f32 %v3546, %v4497
  %v4771 = vmul.f32 %v3547, %v4502
  %v4772 = vmul.f32 %v3548, %v4507
  %v4773 = vmul.f32 %v3549, %v4512
  %v4774 = vmul.f32 %v3550, %v4517
  %v4775 = vmul.f32 %v3551, %v4522
  %v4776 = vmul.f32 %v3552, %v4527
  %v4777 = vmul.f32 %v3553, %v4532
  %v4778 = vmul.f32 %v3554, %v4537
  %v4779 = vmul.f32 %v3555, %v4542
  %v4780 = vmul.f32 %v3556, %v4547
  %v4781 = vmul.f32 %v3557, %v4552
  %v4782 = vmul.f32 %v3558, %v4557
  %v4783 = vmul.f32 %v3559, %v4562
  %v4784 = vmul.f32 %v3560, %v4567
  %v4785 = vmul.f32 %v3561, %v4572
  %v4786 = vmul.f32 %v3562, %v4577
  %v4787 = vmul.f32 %v3563, %v4582
  %vm4788 = vcmask 400384
  %4789 = vst.msk [vmem:[%s4] sm:$0xff] %vm4788, %v4584
  %4790 = vst.msk [vmem:[%s4 + $0x8] sm:$0xff] %vm4788, %v4585
  %4791 = vst.msk [vmem:[%s4 + $0x10] sm:$0xff] %vm4788, %v4586
  %4792 = vst.msk [vmem:[%s4 + $0x18] sm:$0xff] %vm4788, %v4587
  %4793 = vst.msk [vmem:[%s4 + $0x20] sm:$0xff] %vm4788, %v4588
  %4794 = vst.msk [vmem:[%s4 + $0x28] sm:$0xff] %vm4788, %v4589
  %4795 = vst.msk [vmem:[%s4 + $0x30] sm:$0xff] %vm4788, %v4590
  %4796 = vst.msk [vmem:[%s4 + $0x38] sm:$0xff] %vm4788, %v4591
  %4797 = vst.msk [vmem:[%s4 + $0x40] sm:$0xff] %vm4788, %v4592
  %4798 = vst.msk [vmem:[%s4 + $0x48] sm:$0xff] %vm4788, %v4593
  %4799 = vst.msk [vmem:[%s4 + $0x50] sm:$0xff] %vm4788, %v4594
  %4800 = vst.msk [vmem:[%s4 + $0x58] sm:$0xff] %vm4788, %v4595
  %4801 = vst.msk [vmem:[%s4 + $0x60] sm:$0xff] %vm4788, %v4596
  %4802 = vst.msk [vmem:[%s4 + $0x68] sm:$0xff] %vm4788, %v4597
  %4803 = vst.msk [vmem:[%s4 + $0x70] sm:$0xff] %vm4788, %v4598
  %4804 = vst.msk [vmem:[%s4 + $0x78] sm:$0xff] %vm4788, %v4599
  %4805 = vst.msk [vmem:[%s4 + $0x80] sm:$0xff] %vm4788, %v4600
  %4806 = vst.msk [vmem:[%s4 + $0x88] sm:$0xff] %vm4788, %v4601
  %4807 = vst.msk [vmem:[%s4 + $0x90] sm:$0xff] %vm4788, %v4602
  %4808 = vst.msk [vmem:[%s4 + $0x98] sm:$0xff] %vm4788, %v4603
  %4809 = vst.msk [vmem:[%s4 + $0xa0] sm:$0xff] %vm4788, %v4604
  %4810 = vst.msk [vmem:[%s4 + $0xa8] sm:$0xff] %vm4788, %v4605
  %4811 = vst.msk [vmem:[%s4 + $0xb0] sm:$0xff] %vm4788, %v4606
  %4812 = vst.msk [vmem:[%s4 + $0xb8] sm:$0xff] %vm4788, %v4607
  %4813 = vst.msk [vmem:[%s4 + $0xc0] sm:$0xff] %vm4788, %v4608
  %4814 = vst.msk [vmem:[%s4 + $0xc8] sm:$0xff] %vm4788, %v4609
  %4815 = vst.msk [vmem:[%s4 + $0xd0] sm:$0xff] %vm4788, %v4610
  %4816 = vst.msk [vmem:[%s4 + $0xd8] sm:$0xff] %vm4788, %v4611
  %4817 = vst.msk [vmem:[%s4 + $0xe0] sm:$0xff] %vm4788, %v4612
  %4818 = vst.msk [vmem:[%s4 + $0xe8] sm:$0xff] %vm4788, %v4613
  %4819 = vst.msk [vmem:[%s4 + $0xf0] sm:$0xff] %vm4788, %v4614
  %4820 = vst.msk [vmem:[%s4 + $0xf8] sm:$0xff] %vm4788, %v4615
  %4821 = vst.msk [vmem:[%s4 + $0x100] sm:$0xff] %vm4788, %v4616
  %4822 = vst.msk [vmem:[%s4 + $0x108] sm:$0xff] %vm4788, %v4617
  %4823 = vst.msk [vmem:[%s4 + $0x110] sm:$0xff] %vm4788, %v4618
  %4824 = vst.msk [vmem:[%s4 + $0x118] sm:$0xff] %vm4788, %v4619
  %4825 = vst.msk [vmem:[%s4 + $0x120] sm:$0xff] %vm4788, %v4620
  %4826 = vst.msk [vmem:[%s4 + $0x128] sm:$0xff] %vm4788, %v4621
  %4827 = vst.msk [vmem:[%s4 + $0x130] sm:$0xff] %vm4788, %v4622
  %4828 = vst.msk [vmem:[%s4 + $0x138] sm:$0xff] %vm4788, %v4623
  %4829 = vst.msk [vmem:[%s4 + $0x140] sm:$0xff] %vm4788, %v4624
  %4830 = vst.msk [vmem:[%s4 + $0x148] sm:$0xff] %vm4788, %v4625
  %4831 = vst.msk [vmem:[%s4 + $0x150] sm:$0xff] %vm4788, %v4626
  %4832 = vst.msk [vmem:[%s4 + $0x158] sm:$0xff] %vm4788, %v4627
  %4833 = vst.msk [vmem:[%s4 + $0x160] sm:$0xff] %vm4788, %v4628
  %4834 = vst.msk [vmem:[%s4 + $0x168] sm:$0xff] %vm4788, %v4629
  %4835 = vst.msk [vmem:[%s4 + $0x170] sm:$0xff] %vm4788, %v4630
  %4836 = vst.msk [vmem:[%s4 + $0x178] sm:$0xff] %vm4788, %v4631
  %4837 = vst.msk [vmem:[%s4 + $0x180] sm:$0xff] %vm4788, %v4632
  %4838 = vst.msk [vmem:[%s4 + $0x188] sm:$0xff] %vm4788, %v4633
  %4839 = vst.msk [vmem:[%s4 + $0x190] sm:$0xff] %vm4788, %v4634
  %4840 = vst.msk [vmem:[%s4 + $0x198] sm:$0xff] %vm4788, %v4635
  %4841 = vst.msk [vmem:[%s4 + $0x1a0] sm:$0xff] %vm4788, %v4636
  %4842 = vst.msk [vmem:[%s4 + $0x1a8] sm:$0xff] %vm4788, %v4637
  %4843 = vst.msk [vmem:[%s4 + $0x1b0] sm:$0xff] %vm4788, %v4638
  %4844 = vst.msk [vmem:[%s4 + $0x1b8] sm:$0xff] %vm4788, %v4639
  %4845 = vst.msk [vmem:[%s4 + $0x1c0] sm:$0xff] %vm4788, %v4640
  %4846 = vst.msk [vmem:[%s4 + $0x1c8] sm:$0xff] %vm4788, %v4641
  %4847 = vst.msk [vmem:[%s4 + $0x1d0] sm:$0xff] %vm4788, %v4642
  %4848 = vst.msk [vmem:[%s4 + $0x1d8] sm:$0xff] %vm4788, %v4643
  %4849 = vst.msk [vmem:[%s4 + $0x1e0] sm:$0xff] %vm4788, %v4644
  %4850 = vst.msk [vmem:[%s4 + $0x1e8] sm:$0xff] %vm4788, %v4645
  %4851 = vst.msk [vmem:[%s4 + $0x1f0] sm:$0xff] %vm4788, %v4646
  %4852 = vst.msk [vmem:[%s4 + $0x1f8] sm:$0xff] %vm4788, %v4647
  %4853 = vst.msk [vmem:[%s4 + $0x200] sm:$0xff] %vm4788, %v4648
  %4854 = vst.msk [vmem:[%s4 + $0x208] sm:$0xff] %vm4788, %v4649
  %4855 = vst.msk [vmem:[%s4 + $0x210] sm:$0xff] %vm4788, %v4650
  %4856 = vst.msk [vmem:[%s4 + $0x218] sm:$0xff] %vm4788, %v4651
  %4857 = vst.msk [vmem:[%s4 + $0x220] sm:$0xff] %vm4788, %v4652
  %4858 = vst.msk [vmem:[%s4 + $0x228] sm:$0xff] %vm4788, %v4653
  %4859 = vst.msk [vmem:[%s4 + $0x230] sm:$0xff] %vm4788, %v4654
  %4860 = vst.msk [vmem:[%s4 + $0x238] sm:$0xff] %vm4788, %v4655
  %4861 = vst.msk [vmem:[%s4 + $0x240] sm:$0xff] %vm4788, %v4656
  %4862 = vst.msk [vmem:[%s4 + $0x248] sm:$0xff] %vm4788, %v4657
  %4863 = vst.msk [vmem:[%s4 + $0x250] sm:$0xff] %vm4788, %v4658
  %4864 = vst.msk [vmem:[%s4 + $0x258] sm:$0xff] %vm4788, %v4659
  %4865 = vst.msk [vmem:[%s4 + $0x260] sm:$0xff] %vm4788, %v4660
  %4866 = vst.msk [vmem:[%s4 + $0x268] sm:$0xff] %vm4788, %v4661
  %4867 = vst.msk [vmem:[%s4 + $0x270] sm:$0xff] %vm4788, %v4662
  %4868 = vst.msk [vmem:[%s4 + $0x278] sm:$0xff] %vm4788, %v4663
  %4869 = vst.msk [vmem:[%s4 + $0x280] sm:$0xff] %vm4788, %v4664
  %4870 = vst.msk [vmem:[%s4 + $0x288] sm:$0xff] %vm4788, %v4665
  %4871 = vst.msk [vmem:[%s4 + $0x290] sm:$0xff] %vm4788, %v4666
  %4872 = vst.msk [vmem:[%s4 + $0x298] sm:$0xff] %vm4788, %v4667
  %4873 = vst.msk [vmem:[%s4 + $0x2a0] sm:$0xff] %vm4788, %v4668
  %4874 = vst.msk [vmem:[%s4 + $0x2a8] sm:$0xff] %vm4788, %v4669
  %4875 = vst.msk [vmem:[%s4 + $0x2b0] sm:$0xff] %vm4788, %v4670
  %4876 = vst.msk [vmem:[%s4 + $0x2b8] sm:$0xff] %vm4788, %v4671
  %4877 = vst.msk [vmem:[%s4 + $0x2c0] sm:$0xff] %vm4788, %v4672
  %4878 = vst.msk [vmem:[%s4 + $0x2c8] sm:$0xff] %vm4788, %v4673
  %4879 = vst.msk [vmem:[%s4 + $0x2d0] sm:$0xff] %vm4788, %v4674
  %4880 = vst.msk [vmem:[%s4 + $0x2d8] sm:$0xff] %vm4788, %v4675
  %4881 = vst.msk [vmem:[%s4 + $0x2e0] sm:$0xff] %vm4788, %v4676
  %4882 = vst.msk [vmem:[%s4 + $0x2e8] sm:$0xff] %vm4788, %v4677
  %4883 = vst.msk [vmem:[%s4 + $0x2f0] sm:$0xff] %vm4788, %v4678
  %4884 = vst.msk [vmem:[%s4 + $0x2f8] sm:$0xff] %vm4788, %v4679
  %4885 = vst.msk [vmem:[%s4 + $0x300] sm:$0xff] %vm4788, %v4680
  %4886 = vst.msk [vmem:[%s4 + $0x308] sm:$0xff] %vm4788, %v4681
  %4887 = vst.msk [vmem:[%s4 + $0x310] sm:$0xff] %vm4788, %v4682
  %4888 = vst.msk [vmem:[%s4 + $0x318] sm:$0xff] %vm4788, %v4683
  %4889 = vst.msk [vmem:[%s4 + $0x320] sm:$0xff] %vm4788, %v4684
  %4890 = vst.msk [vmem:[%s4 + $0x328] sm:$0xff] %vm4788, %v4685
  %4891 = vst.msk [vmem:[%s4 + $0x330] sm:$0xff] %vm4788, %v4686
  %4892 = vst.msk [vmem:[%s4 + $0x338] sm:$0xff] %vm4788, %v4687
  %4893 = vst.msk [vmem:[%s4 + $0x340] sm:$0xff] %vm4788, %v4688
  %4894 = vst.msk [vmem:[%s4 + $0x348] sm:$0xff] %vm4788, %v4689
  %4895 = vst.msk [vmem:[%s4 + $0x350] sm:$0xff] %vm4788, %v4690
  %4896 = vst.msk [vmem:[%s4 + $0x358] sm:$0xff] %vm4788, %v4691
  %4897 = vst.msk [vmem:[%s4 + $0x360] sm:$0xff] %vm4788, %v4692
  %4898 = vst.msk [vmem:[%s4 + $0x368] sm:$0xff] %vm4788, %v4693
  %4899 = vst.msk [vmem:[%s4 + $0x370] sm:$0xff] %vm4788, %v4694
  %4900 = vst.msk [vmem:[%s4 + $0x378] sm:$0xff] %vm4788, %v4695
  %4901 = vst.msk [vmem:[%s4 + $0x380] sm:$0xff] %vm4788, %v4696
  %4902 = vst.msk [vmem:[%s4 + $0x388] sm:$0xff] %vm4788, %v4697
  %4903 = vst.msk [vmem:[%s4 + $0x390] sm:$0xff] %vm4788, %v4698
  %4904 = vst.msk [vmem:[%s4 + $0x398] sm:$0xff] %vm4788, %v4699
  %4905 = vst.msk [vmem:[%s4 + $0x3a0] sm:$0xff] %vm4788, %v4700
  %4906 = vst.msk [vmem:[%s4 + $0x3a8] sm:$0xff] %vm4788, %v4701
  %4907 = vst.msk [vmem:[%s4 + $0x3b0] sm:$0xff] %vm4788, %v4702
  %4908 = vst.msk [vmem:[%s4 + $0x3b8] sm:$0xff] %vm4788, %v4703
  %4909 = vst.msk [vmem:[%s4 + $0x3c0] sm:$0xff] %vm4788, %v4704
  %4910 = vst.msk [vmem:[%s4 + $0x3c8] sm:$0xff] %vm4788, %v4705
  %4911 = vst.msk [vmem:[%s4 + $0x3d0] sm:$0xff] %vm4788, %v4706
  %4912 = vst.msk [vmem:[%s4 + $0x3d8] sm:$0xff] %vm4788, %v4707
  %4913 = vst.msk [vmem:[%s4 + $0x3e0] sm:$0xff] %vm4788, %v4708
  %4914 = vst.msk [vmem:[%s4 + $0x3e8] sm:$0xff] %vm4788, %v4709
  %4915 = vst.msk [vmem:[%s4 + $0x3f0] sm:$0xff] %vm4788, %v4710
  %4916 = vst.msk [vmem:[%s4 + $0x3f8] sm:$0xff] %vm4788, %v4711
  %4917 = vst.msk [vmem:[%s4 + $0x400] sm:$0xff] %vm4788, %v4712
  %4918 = vst.msk [vmem:[%s4 + $0x408] sm:$0xff] %vm4788, %v4713
  %4919 = vst.msk [vmem:[%s4 + $0x410] sm:$0xff] %vm4788, %v4714
  %4920 = vst.msk [vmem:[%s4 + $0x418] sm:$0xff] %vm4788, %v4715
  %4921 = vst.msk [vmem:[%s4 + $0x420] sm:$0xff] %vm4788, %v4716
  %4922 = vst.msk [vmem:[%s4 + $0x428] sm:$0xff] %vm4788, %v4717
  %4923 = vst.msk [vmem:[%s4 + $0x430] sm:$0xff] %vm4788, %v4718
  %4924 = vst.msk [vmem:[%s4 + $0x438] sm:$0xff] %vm4788, %v4719
  %4925 = vst.msk [vmem:[%s4 + $0x440] sm:$0xff] %vm4788, %v4720
  %4926 = vst.msk [vmem:[%s4 + $0x448] sm:$0xff] %vm4788, %v4721
  %4927 = vst.msk [vmem:[%s4 + $0x450] sm:$0xff] %vm4788, %v4722
  %4928 = vst.msk [vmem:[%s4 + $0x458] sm:$0xff] %vm4788, %v4723
  %4929 = vst.msk [vmem:[%s4 + $0x460] sm:$0xff] %vm4788, %v4724
  %4930 = vst.msk [vmem:[%s4 + $0x468] sm:$0xff] %vm4788, %v4725
  %4931 = vst.msk [vmem:[%s4 + $0x470] sm:$0xff] %vm4788, %v4726
  %4932 = vst.msk [vmem:[%s4 + $0x478] sm:$0xff] %vm4788, %v4727
  %4933 = vst.msk [vmem:[%s4 + $0x480] sm:$0xff] %vm4788, %v4728
  %4934 = vst.msk [vmem:[%s4 + $0x488] sm:$0xff] %vm4788, %v4729
  %4935 = vst.msk [vmem:[%s4 + $0x490] sm:$0xff] %vm4788, %v4730
  %4936 = vst.msk [vmem:[%s4 + $0x498] sm:$0xff] %vm4788, %v4731
  %4937 = vst.msk [vmem:[%s4 + $0x4a0] sm:$0xff] %vm4788, %v4732
  %4938 = vst.msk [vmem:[%s4 + $0x4a8] sm:$0xff] %vm4788, %v4733
  %4939 = vst.msk [vmem:[%s4 + $0x4b0] sm:$0xff] %vm4788, %v4734
  %4940 = vst.msk [vmem:[%s4 + $0x4b8] sm:$0xff] %vm4788, %v4735
  %4941 = vst.msk [vmem:[%s4 + $0x4c0] sm:$0xff] %vm4788, %v4736
  %4942 = vst.msk [vmem:[%s4 + $0x4c8] sm:$0xff] %vm4788, %v4737
  %4943 = vst.msk [vmem:[%s4 + $0x4d0] sm:$0xff] %vm4788, %v4738
  %4944 = vst.msk [vmem:[%s4 + $0x4d8] sm:$0xff] %vm4788, %v4739
  %4945 = vst.msk [vmem:[%s4 + $0x4e0] sm:$0xff] %vm4788, %v4740
  %4946 = vst.msk [vmem:[%s4 + $0x4e8] sm:$0xff] %vm4788, %v4741
  %4947 = vst.msk [vmem:[%s4 + $0x4f0] sm:$0xff] %vm4788, %v4742
  %4948 = vst.msk [vmem:[%s4 + $0x4f8] sm:$0xff] %vm4788, %v4743
  %4949 = vst.msk [vmem:[%s4 + $0x500] sm:$0xff] %vm4788, %v4744
  %4950 = vst.msk [vmem:[%s4 + $0x508] sm:$0xff] %vm4788, %v4745
  %4951 = vst.msk [vmem:[%s4 + $0x510] sm:$0xff] %vm4788, %v4746
  %4952 = vst.msk [vmem:[%s4 + $0x518] sm:$0xff] %vm4788, %v4747
  %4953 = vst.msk [vmem:[%s4 + $0x520] sm:$0xff] %vm4788, %v4748
  %4954 = vst.msk [vmem:[%s4 + $0x528] sm:$0xff] %vm4788, %v4749
  %4955 = vst.msk [vmem:[%s4 + $0x530] sm:$0xff] %vm4788, %v4750
  %4956 = vst.msk [vmem:[%s4 + $0x538] sm:$0xff] %vm4788, %v4751
  %4957 = vst.msk [vmem:[%s4 + $0x540] sm:$0xff] %vm4788, %v4752
  %4958 = vst.msk [vmem:[%s4 + $0x548] sm:$0xff] %vm4788, %v4753
  %4959 = vst.msk [vmem:[%s4 + $0x550] sm:$0xff] %vm4788, %v4754
  %4960 = vst.msk [vmem:[%s4 + $0x558] sm:$0xff] %vm4788, %v4755
  %4961 = vst.msk [vmem:[%s4 + $0x560] sm:$0xff] %vm4788, %v4756
  %4962 = vst.msk [vmem:[%s4 + $0x568] sm:$0xff] %vm4788, %v4757
  %4963 = vst.msk [vmem:[%s4 + $0x570] sm:$0xff] %vm4788, %v4758
  %4964 = vst.msk [vmem:[%s4 + $0x578] sm:$0xff] %vm4788, %v4759
  %4965 = vst.msk [vmem:[%s4 + $0x580] sm:$0xff] %vm4788, %v4760
  %4966 = vst.msk [vmem:[%s4 + $0x588] sm:$0xff] %vm4788, %v4761
  %4967 = vst.msk [vmem:[%s4 + $0x590] sm:$0xff] %vm4788, %v4762
  %4968 = vst.msk [vmem:[%s4 + $0x598] sm:$0xff] %vm4788, %v4763
  %4969 = vst.msk [vmem:[%s4 + $0x5a0] sm:$0xff] %vm4788, %v4764
  %4970 = vst.msk [vmem:[%s4 + $0x5a8] sm:$0xff] %vm4788, %v4765
  %4971 = vst.msk [vmem:[%s4 + $0x5b0] sm:$0xff] %vm4788, %v4766
  %4972 = vst.msk [vmem:[%s4 + $0x5b8] sm:$0xff] %vm4788, %v4767
  %4973 = vst.msk [vmem:[%s4 + $0x5c0] sm:$0xff] %vm4788, %v4768
  %4974 = vst.msk [vmem:[%s4 + $0x5c8] sm:$0xff] %vm4788, %v4769
  %4975 = vst.msk [vmem:[%s4 + $0x5d0] sm:$0xff] %vm4788, %v4770
  %4976 = vst.msk [vmem:[%s4 + $0x5d8] sm:$0xff] %vm4788, %v4771
  %4977 = vst.msk [vmem:[%s4 + $0x5e0] sm:$0xff] %vm4788, %v4772
  %4978 = vst.msk [vmem:[%s4 + $0x5e8] sm:$0xff] %vm4788, %v4773
  %4979 = vst.msk [vmem:[%s4 + $0x5f0] sm:$0xff] %vm4788, %v4774
  %4980 = vst.msk [vmem:[%s4 + $0x5f8] sm:$0xff] %vm4788, %v4775
  %4981 = vst.msk [vmem:[%s4 + $0x600] sm:$0xff] %vm4788, %v4776
  %4982 = vst.msk [vmem:[%s4 + $0x608] sm:$0xff] %vm4788, %v4777
  %4983 = vst.msk [vmem:[%s4 + $0x610] sm:$0xff] %vm4788, %v4778
  %4984 = vst.msk [vmem:[%s4 + $0x618] sm:$0xff] %vm4788, %v4779
  %4985 = vst.msk [vmem:[%s4 + $0x620] sm:$0xff] %vm4788, %v4780
  %4986 = vst.msk [vmem:[%s4 + $0x628] sm:$0xff] %vm4788, %v4781
  %4987 = vst.msk [vmem:[%s4 + $0x630] sm:$0xff] %vm4788, %v4782
  %4988 = vst.msk [vmem:[%s4 + $0x638] sm:$0xff] %vm4788, %v4783
  %4989 = vst.msk [vmem:[%s4 + $0x640] sm:$0xff] %vm4788, %v4784
  %4990 = vst.msk [vmem:[%s4 + $0x648] sm:$0xff] %vm4788, %v4785
  %4991 = vst.msk [vmem:[%s4 + $0x650] sm:$0xff] %vm4788, %v4786
  %4992 = vst.msk [vmem:[%s4 + $0x658] sm:$0xff] %vm4788, %v4787
  // Predicated region
  $region18: #{tpu_custom_call.1} parent=0 // pred_check
    _
  $region19: #{tpu_custom_call.1} parent=0 // pred_check_branch
    %4994 = sbr.rel (0) target = $region21
  $region20: #{tpu_custom_call.1} parent=0 // pred_region
    _
  $region21: #{tpu_custom_call.1} parent=0 // pred_fallthru
    _
  // Predicated region
  $region22: #{tpu_custom_call.1} parent=0 // pred_check
    _
  $region23: #{tpu_custom_call.1} parent=0 // pred_check_branch
    %4996 = sbr.rel (0) target = $region25
  $region24: #{tpu_custom_call.1} parent=0 // pred_region
    _
  $region25: #{tpu_custom_call.1} parent=0 // pred_fallthru
    _

</llo_original>
